<compile_context>
chip_gen: v5e
topology: v5e:2x2
jax: 0.10.0
libtpu: 0.0.40
codegen_flags: <defaults>
</compile_context>

<pallas_src>
import functools

import jax
import jax.numpy as jnp
from jax.experimental import pallas as pl
from jax.experimental.pallas import tpu as pltpu

LN_EPS = 1e-5  # torch.nn.LayerNorm default


# ---------------------------------------------------------------------------
# Kernels
# ---------------------------------------------------------------------------
def _ff_kernel_resident(x_ref, w1_ref, b1_ref, w2_ref, b2_ref, o_ref):
    """Whole FFN for one row tile; W1/W2 are full, VMEM-resident blocks."""
    # LayerNorm in f32 (gamma/beta already folded into W1/b1 by the wrapper).
    x = x_ref[...].astype(jnp.float32)
    mean = jnp.mean(x, axis=-1, keepdims=True)
    centered = x - mean
    var = jnp.mean(centered * centered, axis=-1, keepdims=True)
    xn = (centered * jax.lax.rsqrt(var + LN_EPS)).astype(jnp.bfloat16)

    # Linear1 + bias + ReLU (bf16 MXU operands, f32 accumulation).
    h = jnp.dot(xn, w1_ref[...], preferred_element_type=jnp.float32)
    h = jnp.maximum(h + b1_ref[...], 0.0)

    # Dropout is identity in eval mode.
    # TODO(synk): training-mode dropout would be fused here with
    #   pltpu.prng_seed + pltpu.prng_random_bits masking the h tile.

    # Linear2 + bias; single lane-dense store of the output tile.
    y = jnp.dot(h.astype(jnp.bfloat16), w2_ref[...],
                preferred_element_type=jnp.float32)
    o_ref[...] = (y + b2_ref[...]).astype(o_ref.dtype)


def _ff_kernel_streaming(x_ref, w1_ref, b1_ref, w2_ref, b2_ref, o_ref,
                         xn_ref, acc_ref):
    """FFN with the d_ff axis streamed (innermost reduction grid axis)."""
    j = pl.program_id(1)

    # First d_ff step for this row tile: LayerNorm once (f32 statistics),
    # cache normalized activations as bf16 and zero the f32 accumulator.
    @pl.when(j == 0)
    def _():
        x = x_ref[...].astype(jnp.float32)
        mean = jnp.mean(x, axis=-1, keepdims=True)
        centered = x - mean
        var = jnp.mean(centered * centered, axis=-1, keepdims=True)
        xn = centered * jax.lax.rsqrt(var + LN_EPS)
        xn_ref[...] = xn.astype(xn_ref.dtype)          # bf16 MXU operand cache
        acc_ref[...] = jnp.zeros_like(acc_ref)

    # Linear1 tile + bias + ReLU.
    h = jnp.dot(xn_ref[...], w1_ref[...], preferred_element_type=jnp.float32)
    h = jnp.maximum(h + b1_ref[...], 0.0)
    # TODO(synk): training-mode dropout would be fused here (eval = identity).

    # Linear2 tile, accumulated in f32 across the d_ff axis.
    acc_ref[...] += jnp.dot(h.astype(w2_ref.dtype), w2_ref[...],
                            preferred_element_type=jnp.float32)

    # Last d_ff step: add output bias, one lane-dense store.
    @pl.when(j == pl.num_programs(1) - 1)
    def _():
        o_ref[...] = (acc_ref[...] + b2_ref[...]).astype(o_ref.dtype)


# ---------------------------------------------------------------------------
# Helpers
# ---------------------------------------------------------------------------
def _round_up(x, m):
    return ((x + m - 1) // m) * m


def _cdiv(a, b):
    return (a + b - 1) // b


def _vmem_capacity_bytes():
    """Physical VMEM of the local TPU generation (fallback: 64 MiB, v7x-safe)."""
    default = 64 * 1024 * 1024
    try:
        info = pltpu.get_tpu_info()
        return int(getattr(info, "vmem_capacity_bytes", default))
    except Exception:
        return default


def _largest_df_tile(d_ff, cap):
    """Largest multiple-of-128 divisor of d_ff that is <= cap (>=128)."""
    best = 128
    t = 128
    while t <= min(d_ff, cap):
        if d_ff % t == 0:
            best = t
        t += 128
    return best


# ---------------------------------------------------------------------------
# Wrapper
# ---------------------------------------------------------------------------
@functools.partial(jax.jit,
                   static_argnames=("row_tile", "df_tile", "_force_streaming"))
def feed_forward(x, gamma, beta, w1, b1, w2, b2, *,
                 row_tile=None, df_tile=None, _force_streaming=False):
    """x: (batch, seq, d_model) -> (batch, seq, d_model)."""
    B, S, d_model = x.shape
    d_ff = w1.shape[1]
    assert d_model % 128 == 0, "d_model must be a multiple of 128 (lane-dense)"
    assert d_ff % 128 == 0, "d_ff must be a multiple of 128"

    N = B * S
    out_itemsize = jnp.dtype(x.dtype).itemsize

    # --- generation-aware VMEM budget -------------------------------------
    vmem_cap = _vmem_capacity_bytes()                      # 64 MiB (v7x) / 128 MiB (v5e,v6e)
    vmem_limit = min(vmem_cap * 5 // 8, 96 * 1024 * 1024)  # 40 MiB / 80 MiB
    headroom = 4 * 1024 * 1024                             # Mosaic internal scratch
    budget = vmem_limit - headroom

    # --- row-tile clamp: small N, and >=2 row tiles for v7x's 2 TCs -------
    max_rt = _round_up(N, 8)
    if N > 8:
        max_rt = min(max_rt, _round_up(_cdiv(N, 2), 8))

    # --- resident-weights feasibility --------------------------------------
    weight_bytes = 2 * d_model * d_ff * 2                  # bf16 W1 + W2
    bias_bytes = (d_ff + d_model) * 4                      # f32 b1 + b2

    rt = 256 if row_tile is None else row_tile
    rt = _round_up(max(8, min(rt, max_rt)), 8)

    def _resident_vmem(r):
        io = r * d_model * 2 + r * d_model * out_itemsize  # x (bf16) + out blocks
        return 2 * (weight_bytes + bias_bytes + io)        # conservative: 2x buffered

    use_resident = (not _force_streaming) and _resident_vmem(rt) <= budget

    # --- streaming tile selection ------------------------------------------
    if not use_resident:
        if df_tile is None:
            dft = _largest_df_tile(d_ff, 2048)
        else:
            dft = min(df_tile, d_ff)
            assert dft % 128 == 0 and d_ff % dft == 0, \
                "df_tile must be a multiple of 128 dividing d_ff"
        if row_tile is None:
            rt = _round_up(max(8, min(512, max_rt)), 8)

        def _stream_vmem(r, t):
            blocks = (r * d_model * 2              # x (bf16)
                      + d_model * t * 2            # W1 tile (bf16)
                      + t * d_model * 2            # W2 tile (bf16)
                      + t * 4 + d_model * 4        # b1 tile + b2 (f32)
                      + r * d_model * out_itemsize)
            scratch = r * d_model * (2 + 4)        # cached xn (bf16) + f32 acc
            return 2 * blocks + scratch

        while _stream_vmem(rt, dft) > budget and dft > 128:
            dft = _largest_df_tile(d_ff, dft - 128)
        while _stream_vmem(rt, dft) > budget and rt > 8:
            rt = max(8, _round_up(rt // 2, 8))

    # --- wrapper-side preprocessing -----------------------------------------
    N_pad = _round_up(N, rt)
    x2d = x.reshape(N, d_model).astype(jnp.bfloat16)       # halves x HBM/VMEM
    if N_pad != N:
        # Padded zero rows: LN(0) is finite (rsqrt(eps)); rows sliced off below.
        x2d = jnp.pad(x2d, ((0, N_pad - N), (0, 0)))

    # Fold LayerNorm's affine into Linear1 (f32 math, then one bf16 cast):
    #   (xn*gamma + beta) @ W1 + b1 == xn @ (diag(gamma) @ W1) + (beta @ W1 + b1)
    w1f = w1.astype(jnp.float32)
    w1b = (gamma.astype(jnp.float32)[:, None] * w1f).astype(jnp.bfloat16)
    b1f = (b1.astype(jnp.float32) + beta.astype(jnp.float32) @ w1f).reshape(1, d_ff)
    w2b = w2.astype(jnp.bfloat16)
    b2f = b2.reshape(1, d_model).astype(jnp.float32)

    if use_resident:
        # W1/W2 live in VMEM for the whole kernel (constant index_maps), no
        # reduction axis, no accumulator: weights are read from HBM once.
        out2d = pl.pallas_call(
            _ff_kernel_resident,
            out_shape=jax.ShapeDtypeStruct((N_pad, d_model), x.dtype),
            grid_spec=pltpu.PrefetchScalarGridSpec(
                num_scalar_prefetch=0,
                grid=(N_pad // rt,),
                in_specs=[
                    pl.BlockSpec((rt, d_model), lambda i: (i, 0)),     # x tile
                    pl.BlockSpec((d_model, d_ff), lambda i: (0, 0)),   # W1 (resident)
                    pl.BlockSpec((1, d_ff), lambda i: (0, 0)),         # b1
                    pl.BlockSpec((d_ff, d_model), lambda i: (0, 0)),   # W2 (resident)
                    pl.BlockSpec((1, d_model), lambda i: (0, 0)),      # b2
                ],
                out_specs=pl.BlockSpec((rt, d_model), lambda i: (i, 0)),
            ),
            compiler_params=pltpu.CompilerParams(
                dimension_semantics=("parallel",),
                vmem_limit_bytes=vmem_limit,
            ),
        )(x2d, w1b, b1f, w2b, b2f)
    else:
        # Streaming fallback: rows parallel, d_ff reduction innermost.
        out2d = pl.pallas_call(
            _ff_kernel_streaming,
            out_shape=jax.ShapeDtypeStruct((N_pad, d_model), x.dtype),
            grid_spec=pltpu.PrefetchScalarGridSpec(
                num_scalar_prefetch=0,
                grid=(N_pad // rt, d_ff // dft),
                in_specs=[
                    pl.BlockSpec((rt, d_model), lambda i, j: (i, 0)),   # x tile
                    pl.BlockSpec((d_model, dft), lambda i, j: (0, j)),  # W1 tile
                    pl.BlockSpec((1, dft), lambda i, j: (0, j)),        # b1 tile
                    pl.BlockSpec((dft, d_model), lambda i, j: (j, 0)),  # W2 tile
                    pl.BlockSpec((1, d_model), lambda i, j: (0, 0)),    # b2
                ],
                out_specs=pl.BlockSpec((rt, d_model), lambda i, j: (i, 0)),
                scratch_shapes=[
                    pltpu.VMEM((rt, d_model), jnp.bfloat16),   # cached xn
                    pltpu.VMEM((rt, d_model), jnp.float32),    # f32 accumulator
                ],
            ),
            compiler_params=pltpu.CompilerParams(
                dimension_semantics=("parallel", "arbitrary"),
                vmem_limit_bytes=vmem_limit,
            ),
        )(x2d, w1b, b1f, w2b, b2f)

    return out2d[:N].reshape(B, S, d_model)


# ---------------------------------------------------------------------------
# Reference + demo
# ---------------------------------------------------------------------------
def _reference(x, gamma, beta, w1, b1, w2, b2):
    xf = x.astype(jnp.float32)
    mean = jnp.mean(xf, axis=-1, keepdims=True)
    var = jnp.mean((xf - mean) ** 2, axis=-1, keepdims=True)
    xn = (xf - mean) / jnp.sqrt(var + LN_EPS) * gamma + beta
    h = jnp.maximum(xn @ w1 + b1, 0.0)
    return (h @ w2 + b2).astype(x.dtype)


if __name__ == "__main__":
    # Module defaults: d_model=512, d_ff=1024; small batch/seq for the demo.
    batch, seq, d_model, d_ff = 2, 8, 512, 1024

    key = jax.random.PRNGKey(0)
    kx, kg, kb, kw1, kb1, kw2, kb2 = jax.random.split(key, 7)

    x = jax.random.normal(kx, (batch, seq, d_model), dtype=jnp.float32)

    # Deterministic parameter init (synthetic, not a checkpoint load).
    gamma = jnp.ones((d_model,), jnp.float32) + 0.01 * jax.random.normal(kg, (d_model,))
    beta = 0.01 * jax.random.normal(kb, (d_model,))
    w1 = jax.random.normal(kw1, (d_model, d_ff), dtype=jnp.float32) / jnp.sqrt(d_model)
    b1 = 0.01 * jax.random.normal(kb1, (d_ff,))
    w2 = jax.random.normal(kw2, (d_ff, d_model), dtype=jnp.float32) / jnp.sqrt(d_ff)
    b2 = 0.01 * jax.random.normal(kb2, (d_model,))

    ref = _reference(x, gamma, beta, w1, b1, w2, b2)

    # Resident-weights fast path (auto-selected: W1+W2 bf16 = 2 MiB).
    out = feed_forward(x, gamma, beta, w1, b1, w2, b2)
    jax.block_until_ready(out)
    assert out.shape == (batch, seq, d_model)
    # bf16 MXU operands / bf16 x with f32 statistics and accumulation.
    assert jnp.allclose(out, ref, atol=5e-2, rtol=5e-2), "resident path mismatch"

    # Streaming (d_ff-reduction) fallback, forced so both kernels are exercised.
    out_s = feed_forward(x, gamma, beta, w1, b1, w2, b2,
                         df_tile=512, _force_streaming=True)
    jax.block_until_ready(out_s)
    assert jnp.allclose(out_s, ref, atol=5e-2, rtol=5e-2), "streaming path mismatch"

    print("KERNEL_OK")
</pallas_src>

<mosaic_0001>
module attributes {stable_mosaic.version = 11 : i64} {
  func.func @_ff_kernel_resident(%arg0: i32, %arg1: memref<8x512xbf16, #tpu.memory_space<vmem>>, %arg2: memref<512x1024xbf16, #tpu.memory_space<vmem>>, %arg3: memref<1x1024xf32, #tpu.memory_space<vmem>>, %arg4: memref<1024x512xbf16, #tpu.memory_space<vmem>>, %arg5: memref<1x512xf32, #tpu.memory_space<vmem>>, %arg6: memref<8x512xf32, #tpu.memory_space<vmem>>) attributes {dimension_semantics = [#tpu.dimension_semantics<parallel>], iteration_bounds = array<i64: 2>, scalar_prefetch = 0 : i64, scratch_operands = 0 : i64, tpu.core_type = #tpu.core_type<tc>, window_params = [{transform_indices = @transform_0, window_bounds = array<i64: 8, 512>}, {pipeline_mode = #tpu.pipeline_mode<synchronous>, transform_indices = @transform_1, window_bounds = array<i64: 512, 1024>}, {pipeline_mode = #tpu.pipeline_mode<synchronous>, transform_indices = @transform_2, window_bounds = array<i64: 1, 1024>}, {pipeline_mode = #tpu.pipeline_mode<synchronous>, transform_indices = @transform_3, window_bounds = array<i64: 1024, 512>}, {pipeline_mode = #tpu.pipeline_mode<synchronous>, transform_indices = @transform_4, window_bounds = array<i64: 1, 512>}, {transform_indices = @transform_5, window_bounds = array<i64: 8, 512>}]} {
    %c0 = arith.constant 0 : index
    %c0_0 = arith.constant 0 : index
    %0 = vector.load %arg1[%c0, %c0_0] : memref<8x512xbf16, #tpu.memory_space<vmem>>, vector<8x512xbf16>
    %1 = arith.extf %0 : vector<8x512xbf16> to vector<8x512xf32>
    %cst = arith.constant dense<0.000000e+00> : vector<8xf32>
    %2 = vector.multi_reduction <add>, %1, %cst [1] : vector<8x512xf32> to vector<8xf32>
    %3 = vector.shape_cast %2 : vector<8xf32> to vector<8x1xf32>
    %cst_1 = arith.constant 5.120000e+02 : f32
    %4 = vector.broadcast %cst_1 : f32 to vector<8x1xf32>
    %5 = arith.divf %3, %4 : vector<8x1xf32>
    %6 = vector.broadcast %5 : vector<8x1xf32> to vector<8x512xf32>
    %7 = arith.subf %1, %6 : vector<8x512xf32>
    %8 = arith.mulf %7, %7 : vector<8x512xf32>
    %cst_2 = arith.constant dense<0.000000e+00> : vector<8xf32>
    %9 = vector.multi_reduction <add>, %8, %cst_2 [1] : vector<8x512xf32> to vector<8xf32>
    %10 = vector.shape_cast %9 : vector<8xf32> to vector<8x1xf32>
    %cst_3 = arith.constant 5.120000e+02 : f32
    %11 = vector.broadcast %cst_3 : f32 to vector<8x1xf32>
    %12 = arith.divf %10, %11 : vector<8x1xf32>
    %cst_4 = arith.constant 9.99999974E-6 : f32
    %13 = vector.broadcast %cst_4 : f32 to vector<8x1xf32>
    %14 = arith.addf %12, %13 : vector<8x1xf32>
    %15 = math.rsqrt %14 : vector<8x1xf32>
    %16 = vector.broadcast %15 : vector<8x1xf32> to vector<8x512xf32>
    %17 = arith.mulf %7, %16 : vector<8x512xf32>
    %18 = arith.truncf %17 : vector<8x512xf32> to vector<8x512xbf16>
    %c0_5 = arith.constant 0 : index
    %c0_6 = arith.constant 0 : index
    %19 = vector.load %arg2[%c0_5, %c0_6] : memref<512x1024xbf16, #tpu.memory_space<vmem>>, vector<512x1024xbf16>
    %cst_7 = arith.constant dense<0.000000e+00> : vector<8x1024xf32>
    %20 = tpu.matmul %18, %19, %cst_7 {dimension_numbers = #tpu.dot_dimension_numbers<[1], [0], [0], [1], [0, 0, 1, 1], [], []>} : vector<8x512xbf16>, vector<512x1024xbf16>, vector<8x1024xf32> -> vector<8x1024xf32>
    %c0_8 = arith.constant 0 : index
    %c0_9 = arith.constant 0 : index
    %21 = vector.load %arg3[%c0_8, %c0_9] : memref<1x1024xf32, #tpu.memory_space<vmem>>, vector<1x1024xf32>
    %22 = vector.broadcast %21 : vector<1x1024xf32> to vector<8x1024xf32>
    %23 = arith.addf %20, %22 : vector<8x1024xf32>
    %cst_10 = arith.constant 0.000000e+00 : f32
    %24 = vector.broadcast %cst_10 : f32 to vector<8x1024xf32>
    %25 = arith.maximumf %23, %24 : vector<8x1024xf32>
    %26 = arith.truncf %25 : vector<8x1024xf32> to vector<8x1024xbf16>
    %c0_11 = arith.constant 0 : index
    %c0_12 = arith.constant 0 : index
    %27 = vector.load %arg4[%c0_11, %c0_12] : memref<1024x512xbf16, #tpu.memory_space<vmem>>, vector<1024x512xbf16>
    %cst_13 = arith.constant dense<0.000000e+00> : vector<8x512xf32>
    %28 = tpu.matmul %26, %27, %cst_13 {dimension_numbers = #tpu.dot_dimension_numbers<[1], [0], [0], [1], [0, 0, 1, 1], [], []>} : vector<8x1024xbf16>, vector<1024x512xbf16>, vector<8x512xf32> -> vector<8x512xf32>
    %c0_14 = arith.constant 0 : index
    %c0_15 = arith.constant 0 : index
    %29 = vector.load %arg5[%c0_14, %c0_15] : memref<1x512xf32, #tpu.memory_space<vmem>>, vector<1x512xf32>
    %30 = vector.broadcast %29 : vector<1x512xf32> to vector<8x512xf32>
    %31 = arith.addf %28, %30 : vector<8x512xf32>
    %c0_16 = arith.constant 0 : index
    %c0_17 = arith.constant 0 : index
    %32 = vector.load %arg6[%c0_16, %c0_17] : memref<8x512xf32, #tpu.memory_space<vmem>>, vector<8x512xf32>
    tpu.vector_store %arg6[%c0_16, %c0_17], %31 {strides = array<i32>} : memref<8x512xf32, #tpu.memory_space<vmem>>, vector<8x512xf32>,
    return
  }
  func.func @transform_0(%arg0: i32) -> (i32, i32) {
    %c0_i32 = arith.constant 0 : i32
    %c0_i32_0 = arith.constant 0 : i32
    return %arg0, %c0_i32 : i32, i32
  }
  func.func @transform_1(%arg0: i32) -> (i32, i32) {
    %c0_i32 = arith.constant 0 : i32
    %c0_i32_0 = arith.constant 0 : i32
    %c0_i32_1 = arith.constant 0 : i32
    return %c0_i32, %c0_i32_0 : i32, i32
  }
  func.func @transform_2(%arg0: i32) -> (i32, i32) {
    %c0_i32 = arith.constant 0 : i32
    %c0_i32_0 = arith.constant 0 : i32
    %c0_i32_1 = arith.constant 0 : i32
    return %c0_i32, %c0_i32_0 : i32, i32
  }
  func.func @transform_3(%arg0: i32) -> (i32, i32) {
    %c0_i32 = arith.constant 0 : i32
    %c0_i32_0 = arith.constant 0 : i32
    %c0_i32_1 = arith.constant 0 : i32
    return %c0_i32, %c0_i32_0 : i32, i32
  }
  func.func @transform_4(%arg0: i32) -> (i32, i32) {
    %c0_i32 = arith.constant 0 : i32
    %c0_i32_0 = arith.constant 0 : i32
    %c0_i32_1 = arith.constant 0 : i32
    return %c0_i32, %c0_i32_0 : i32, i32
  }
  func.func @transform_5(%arg0: i32) -> (i32, i32) {
    %c0_i32 = arith.constant 0 : i32
    %c0_i32_0 = arith.constant 0 : i32
    return %arg0, %c0_i32 : i32, i32
  }
}

</mosaic_0001>

<llo_original>
// kernel: feed_forward.1
$region0: #{feed_forward.1}
  #allocation0 [shape = 'u32[]', space=smem, size = 0x4, offset = 0x4, fixed_abs, tag = 'smem constant byte address 0x4 - core index']
  #allocation1 [shape = 'u32[72,128]{1,0:T(1,128)}', space=vmem, size = 0x9000, scoped, tag = 'internal scratch']
  %s0 = inlined_call_operand.vmem [shape: bf16[16,512], index: 0, kind: input, shape index: {}]
  %s1 = inlined_call_operand.vmem [shape: bf16[512,1024], index: 1, kind: input, shape index: {}]
  %s2 = inlined_call_operand.vmem [shape: f32[1,1024], index: 2, kind: input, shape index: {}]
  %s3 = inlined_call_operand.vmem [shape: bf16[1024,512], index: 3, kind: input, shape index: {}]
  %s4 = inlined_call_operand.vmem [shape: f32[1,512], index: 4, kind: input, shape index: {}]
  %s5 = inlined_call_operand.hbm [shape: f32[16,512], index: 5, kind: output, shape index: {}]
  %s6 = sld [smem:[#allocation0]]
  $region53: #{feed_forward.1} parent=0
    _
  %s8 = ssub.s32 1, %s6
  %s9 = scalar_select 0, %s8, %s6
  $region1: #{feed_forward.1} parent=0
    #allocation2 [shape = 'u8[32768]{0}', space=vmem, size = 0x8000, scoped, tag = 'output window, operand 0']
    #allocation3 [shape = 's32[2]{0}', space=sflag, size = 0x8, scoped, tag = 'scoped memory for feed_forward.1']
    %10 = vsyncpa [#allocation3], 0
    %s11 = scalar_lea.sflag [#allocation3], 1
    %12 = vsyncpa %s11, 0
    loop: start=0, step=1, limit=4
    $region2: #{feed_forward.1} parent=1 // loop_pre_header
      _
    $region3: #{feed_forward.1} parent=1 // loop_header
      %s14 = sphi 0, %s18
      %p15 = scmp.ge.s32.totalorder %s14, 4
      %s24 = sphi 0, %s26
      %s27 = sphi 0, %s24
      %s28 = sphi 0, %s27
      %s44 = sphi 0, %s28
      %s48 = sphi 0, %s48
      %s50 = sphi 0, %s48
      %s51 = sphi 0, %s50
      %s65 = sphi 0, %s51
      %s69 = sphi 0, %s69
      %s71 = sphi 0, %s69
      %s72 = sphi 0, %s71
      %s86 = sphi 0, %s72
      %s90 = sphi 0, %s90
      %s92 = sphi 0, %s90
      %s93 = sphi 0, %s92
      %s107 = sphi 0, %s93
      %s111 = sphi 0, %s111
      %s113 = sphi 0, %s111
      %s114 = sphi 0, %s113
      %s128 = sphi 0, %s114
      %s134 = sphi 0, %s136
      %s137 = sphi 0, %s134
      %s138 = sphi 0, %s137
      %s154 = sphi 0, %s138
    $region4: #{feed_forward.1} parent=1 // loop_header_branch
      %17 = sbr.rel (%p15) target = $region8
    $region5: #{feed_forward.1} parent=1 // loop_body
      %s19 = ssub.s32 %s14, 1
      %s20 = ssub.s32 %s14, 2
      %s21 = sadd.s32 %s14, 1
      %s22 = ssub.s32 %s14, %s21
      %p23 = scmp.eq.s32.totalorder %s22, 0
      %s25 = sadd.s32 %s24, 1
      %s26 = scalar_select %p23, %s24, %s25
      %p29 = pneg %p23
      %p30 = scmp.eq.s32.totalorder %s14, 1
      %p31 = por %p29, %p30
      %p32 = scmp.ne.s32.totalorder %s24, %s27
      %p33 = scmp.eq.s32.totalorder %s14, 0
      %p34 = por %p32, %p33
      %p35 = scmp.ne.s32.totalorder %s24, %s27
      %p36 = scmp.eq.s32.totalorder %s19, 1
      %p37 = por %p35, %p36
      %p38 = scmp.ne.s32.totalorder %s27, %s28
      %p39 = scmp.eq.s32.totalorder %s19, 0
      %p40 = por %p38, %p39
      %p41 = scmp.ne.s32.totalorder %s27, %s28
      %p42 = scmp.eq.s32.totalorder %s20, 1
      %p43 = por %p41, %p42
      %p45 = scmp.ne.s32.totalorder %s28, %s44
      %p46 = scmp.eq.s32.totalorder %s20, 0
      %p47 = por %p45, %p46
      %s49 = sadd.s32 %s48, 1
      %p52 = scmp.eq.s32.totalorder %s14, 1
      %p53 = scmp.ne.s32.totalorder %s48, %s50
      %p54 = scmp.eq.s32.totalorder %s14, 0
      %p55 = por %p53, %p54
      %p56 = scmp.ne.s32.totalorder %s48, %s50
      %p57 = scmp.eq.s32.totalorder %s19, 1
      %p58 = por %p56, %p57
      %p59 = scmp.ne.s32.totalorder %s50, %s51
      %p60 = scmp.eq.s32.totalorder %s19, 0
      %p61 = por %p59, %p60
      %p62 = scmp.ne.s32.totalorder %s50, %s51
      %p63 = scmp.eq.s32.totalorder %s20, 1
      %p64 = por %p62, %p63
      %p66 = scmp.ne.s32.totalorder %s51, %s65
      %p67 = scmp.eq.s32.totalorder %s20, 0
      %p68 = por %p66, %p67
      %s70 = sadd.s32 %s69, 1
      %p73 = scmp.eq.s32.totalorder %s14, 1
      %p74 = scmp.ne.s32.totalorder %s69, %s71
      %p75 = scmp.eq.s32.totalorder %s14, 0
      %p76 = por %p74, %p75
      %p77 = scmp.ne.s32.totalorder %s69, %s71
      %p78 = scmp.eq.s32.totalorder %s19, 1
      %p79 = por %p77, %p78
      %p80 = scmp.ne.s32.totalorder %s71, %s72
      %p81 = scmp.eq.s32.totalorder %s19, 0
      %p82 = por %p80, %p81
      %p83 = scmp.ne.s32.totalorder %s71, %s72
      %p84 = scmp.eq.s32.totalorder %s20, 1
      %p85 = por %p83, %p84
      %p87 = scmp.ne.s32.totalorder %s72, %s86
      %p88 = scmp.eq.s32.totalorder %s20, 0
      %p89 = por %p87, %p88
      %s91 = sadd.s32 %s90, 1
      %p94 = scmp.eq.s32.totalorder %s14, 1
      %p95 = scmp.ne.s32.totalorder %s90, %s92
      %p96 = scmp.eq.s32.totalorder %s14, 0
      %p97 = por %p95, %p96
      %p98 = scmp.ne.s32.totalorder %s90, %s92
      %p99 = scmp.eq.s32.totalorder %s19, 1
      %p100 = por %p98, %p99
      %p101 = scmp.ne.s32.totalorder %s92, %s93
      %p102 = scmp.eq.s32.totalorder %s19, 0
      %p103 = por %p101, %p102
      %p104 = scmp.ne.s32.totalorder %s92, %s93
      %p105 = scmp.eq.s32.totalorder %s20, 1
      %p106 = por %p104, %p105
      %p108 = scmp.ne.s32.totalorder %s93, %s107
      %p109 = scmp.eq.s32.totalorder %s20, 0
      %p110 = por %p108, %p109
      %s112 = sadd.s32 %s111, 1
      %p115 = scmp.eq.s32.totalorder %s14, 1
      %p116 = scmp.ne.s32.totalorder %s111, %s113
      %p117 = scmp.eq.s32.totalorder %s14, 0
      %p118 = por %p116, %p117
      %p119 = scmp.ne.s32.totalorder %s111, %s113
      %p120 = scmp.eq.s32.totalorder %s19, 1
      %p121 = por %p119, %p120
      %p122 = scmp.ne.s32.totalorder %s113, %s114
      %p123 = scmp.eq.s32.totalorder %s19, 0
      %p124 = por %p122, %p123
      %p125 = scmp.ne.s32.totalorder %s113, %s114
      %p126 = scmp.eq.s32.totalorder %s20, 1
      %p127 = por %p125, %p126
      %p129 = scmp.ne.s32.totalorder %s114, %s128
      %p130 = scmp.eq.s32.totalorder %s20, 0
      %p131 = por %p129, %p130
      %s132 = ssub.s32 %s14, %s21
      %p133 = scmp.eq.s32.totalorder %s132, 0
      %s135 = sadd.s32 %s134, 1
      %s136 = scalar_select %p133, %s134, %s135
      %p139 = pneg %p133
      %p140 = scmp.eq.s32.totalorder %s14, 1
      %p141 = por %p139, %p140
      %p142 = scmp.ne.s32.totalorder %s134, %s137
      %p143 = scmp.eq.s32.totalorder %s14, 0
      %p144 = por %p142, %p143
      %p145 = scmp.ne.s32.totalorder %s134, %s137
      %p146 = scmp.eq.s32.totalorder %s19, 1
      %p147 = por %p145, %p146
      %p148 = scmp.ne.s32.totalorder %s137, %s138
      %p149 = scmp.eq.s32.totalorder %s19, 0
      %p150 = por %p148, %p149
      %p151 = scmp.ne.s32.totalorder %s137, %s138
      %p152 = scmp.eq.s32.totalorder %s20, 1
      %p153 = por %p151, %p152
      %p155 = scmp.ne.s32.totalorder %s138, %s154
      %p156 = scmp.eq.s32.totalorder %s20, 0
      %p157 = por %p155, %p156
      %p158 = scmp.le.s32.totalorder 1, %s14
      %p159 = scmp.lt.s32.totalorder %s14, 3
      %p160 = pnand %p158, %p159
      %p161 = pneg %p160
      // Predicated region
      $region9: #{feed_forward.1} parent=5 // pred_check
        _
      $region10: #{feed_forward.1} parent=5 // pred_check_branch
        %163 = sbr.rel (%p160) target = $region12
      $region11: #{feed_forward.1} parent=5 // pred_region
        %s164 = ssub.s32 %s14, 1
        // Predicated region
        $region13: #{feed_forward.1} parent=11 // pred_check
          %p165 = pneg %p61
        $region14: #{feed_forward.1} parent=11 // pred_check_branch
          %167 = sbr.rel (%p165) target = $region16
        $region15: #{feed_forward.1} parent=11 // pred_region
          _
        $region16: #{feed_forward.1} parent=11 // pred_fallthru
          _
        // Predicated region
        $region17: #{feed_forward.1} parent=11 // pred_check
          %p168 = pneg %p82
        $region18: #{feed_forward.1} parent=11 // pred_check_branch
          %170 = sbr.rel (%p168) target = $region20
        $region19: #{feed_forward.1} parent=11 // pred_region
          _
        $region20: #{feed_forward.1} parent=11 // pred_fallthru
          _
        // Predicated region
        $region21: #{feed_forward.1} parent=11 // pred_check
          %p171 = pneg %p103
        $region22: #{feed_forward.1} parent=11 // pred_check_branch
          %173 = sbr.rel (%p171) target = $region24
        $region23: #{feed_forward.1} parent=11 // pred_region
          _
        $region24: #{feed_forward.1} parent=11 // pred_fallthru
          _
        // Predicated region
        $region25: #{feed_forward.1} parent=11 // pred_check
          %p174 = pneg %p124
        $region26: #{feed_forward.1} parent=11 // pred_check_branch
          %176 = sbr.rel (%p174) target = $region28
        $region27: #{feed_forward.1} parent=11 // pred_region
          _
        $region28: #{feed_forward.1} parent=11 // pred_fallthru
          _
      $region12: #{feed_forward.1} parent=5 // pred_fallthru
        _
      %p177 = scmp.lt.s32.totalorder %s14, 2
      // Predicated region
      $region29: #{feed_forward.1} parent=5 // pred_check
        %p178 = pneg %p177
      $region30: #{feed_forward.1} parent=5 // pred_check_branch
        %180 = sbr.rel (%p178) target = $region32
      $region31: #{feed_forward.1} parent=5 // pred_region
        // Predicated region
        $region33: #{feed_forward.1} parent=31 // pred_check
          %p181 = pneg %p34
        $region34: #{feed_forward.1} parent=31 // pred_check_branch
          %183 = sbr.rel (%p181) target = $region36
        $region35: #{feed_forward.1} parent=31 // pred_region
          %p184 = scmp.lt.s32.totalorder %s14, 1
          %s185 = scalar_select %p184, %s14, 1
          %s186 = smul.addr %s185, 4
          %s187 = smul.addr %s186, 4
          %s188 = scalar_lea.vmem %s0, %s187
        $region36: #{feed_forward.1} parent=31 // pred_fallthru
          _
      $region32: #{feed_forward.1} parent=5 // pred_fallthru
        _
      %p189 = scmp.le.s32.totalorder 1, %s14
      %p190 = scmp.lt.s32.totalorder %s14, 3
      %p191 = pnand %p189, %p190
      %p192 = pneg %p191
      // Predicated region
      $region37: #{feed_forward.1} parent=5 // pred_check
        _
      $region38: #{feed_forward.1} parent=5 // pred_check_branch
        %194 = sbr.rel (%p191) target = $region40
      $region39: #{feed_forward.1} parent=5 // pred_region
        %s195 = ssub.s32 %s14, 1
        %p196 = scmp.lt.s32.totalorder %s19, 1
        %s197 = scalar_select %p196, %s19, 1
        %s198 = smul.addr %s197, 4
        %s199 = smul.addr %s198, 4
        %s200 = scalar_lea.vmem %s0, %s199
        %p201 = pneg %p40
        %p202 = pneg %p37
        %p203 = pneg %p61
        %p204 = pneg %p58
        %p205 = pneg %p82
        %p206 = pneg %p79
        %p207 = pneg %p103
        %p208 = pneg %p100
        %p209 = pneg %p124
        %p210 = pneg %p121
        %p211 = pneg %p150
        %p212 = pneg %p147
        %s213 = sand.u32 %s137, 1
        %s214 = scalar_lea.sflag [#allocation3], %s213
        %s215 = sand.u32 %s137, 1
        %s216 = smul.addr %s215, 32
        %s217 = scalar_lea.vmem [#allocation2], %s216
        %p218 = scmp.lt.s32.totalorder %s19, 1
        %s219 = scalar_select %p218, %s19, 1
        %s220 = smul.addr %s219, 4
        %s221 = smul.addr %s220, 4
        %s222 = scalar_lea.vmem %s0, %s221
        %v223 = vld [vmem:[%s222] sm:$0xff]
        %v224 = vld [vmem:[%s222 + $0x8] sm:$0xff]
        %v225 = vunpack.c.l.bf16 %v223
        %v226 = vunpack.c.h.bf16 %v223
        %v227 = vunpack.c.l.bf16 %v224
        %v228 = vunpack.c.h.bf16 %v224
        %v229 = vadd.f32 %v225, %v226
        %v230 = vadd.f32 %v229, %v227
        %v231 = vadd.f32 %v230, %v228
        %232 = vadd.xlane.f32.xlu0 %v231
        %v233 = vpop.xlane.xlu0 %232
        %v234 = vrcp.pop 512.0
        %v235 = vmul.f32 512.0, %v234
        %v236 = vsub.f32 1.0, %v235
        %v237 = vmul.f32 %v234, %v236
        %v238 = vadd.f32 %v234, %v237
        %vm239 = vweird.f32 %v234
        %v240 = vsel %vm239, %v234, %v238
        %v241 = vmul.f32 %v233, %v240
        %v242 = vsub.f32 %v225, %v241
        %v243 = vsub.f32 %v226, %v241
        %v244 = vsub.f32 %v227, %v241
        %v245 = vsub.f32 %v228, %v241
        %v246 = vmul.f32 %v242, %v242
        %v247 = vmul.f32 %v243, %v243
        %v248 = vmul.f32 %v244, %v244
        %v249 = vmul.f32 %v245, %v245
        %v250 = vadd.f32 %v246, %v247
        %v251 = vadd.f32 %v250, %v248
        %v252 = vadd.f32 %v251, %v249
        %253 = vadd.xlane.f32.xlu0 %v252
        %v254 = vpop.xlane.xlu0 %253
        %v255 = vmul.f32 %v254, %v240
        %v256 = vadd.f32 %v255, 1e-05
        %v257 = vrsqrt.pop %v256
        %v258 = vmul.f32 %v257, %v256
        %v259 = vmul.f32 %v258, %v257
        %v260 = vmul.f32 0.5, %v259
        %v261 = vsub.f32 1.5, %v260
        %v262 = vmul.f32 %v257, %v261
        %vm263 = vweird.f32 %v256
        %vm264 = vweird.f32 %v257
        %vm265 = vmor %vm263, %vm264
        %v266 = vsel %vm265, %v257, %v262
        %v267 = vmul.f32 %v242, %v266
        %v268 = vmul.f32 %v243, %v266
        %v269 = vmul.f32 %v244, %v266
        %v270 = vmul.f32 %v245, %v266
        %v271 = vpack.c.bf16 %v267, %v267
        %v272 = vpack.c.bf16 %v268, %v268
        %v273 = vpack.c.bf16 %v269, %v269
        %v274 = vpack.c.bf16 %v270, %v270
        %v275 = vld [vmem:[%s1] sm:$0xff]
        %v276 = vld [vmem:[%s1 + $0x8] sm:$0xff]
        %v277 = vld [vmem:[%s1 + $0x10] sm:$0xff]
        %v278 = vld [vmem:[%s1 + $0x18] sm:$0xff]
        %v279 = vld [vmem:[%s1 + $0x20] sm:$0xff]
        %v280 = vld [vmem:[%s1 + $0x28] sm:$0xff]
        %v281 = vld [vmem:[%s1 + $0x30] sm:$0xff]
        %v282 = vld [vmem:[%s1 + $0x38] sm:$0xff]
        %v283 = vld [vmem:[%s1 + $0x40] sm:$0xff]
        %v284 = vld [vmem:[%s1 + $0x48] sm:$0xff]
        %v285 = vld [vmem:[%s1 + $0x50] sm:$0xff]
        %v286 = vld [vmem:[%s1 + $0x58] sm:$0xff]
        %v287 = vld [vmem:[%s1 + $0x60] sm:$0xff]
        %v288 = vld [vmem:[%s1 + $0x68] sm:$0xff]
        %v289 = vld [vmem:[%s1 + $0x70] sm:$0xff]
        %v290 = vld [vmem:[%s1 + $0x78] sm:$0xff]
        %v291 = vld [vmem:[%s1 + $0x80] sm:$0xff]
        %v292 = vld [vmem:[%s1 + $0x88] sm:$0xff]
        %v293 = vld [vmem:[%s1 + $0x90] sm:$0xff]
        %v294 = vld [vmem:[%s1 + $0x98] sm:$0xff]
        %v295 = vld [vmem:[%s1 + $0xa0] sm:$0xff]
        %v296 = vld [vmem:[%s1 + $0xa8] sm:$0xff]
        %v297 = vld [vmem:[%s1 + $0xb0] sm:$0xff]
        %v298 = vld [vmem:[%s1 + $0xb8] sm:$0xff]
        %v299 = vld [vmem:[%s1 + $0xc0] sm:$0xff]
        %v300 = vld [vmem:[%s1 + $0xc8] sm:$0xff]
        %v301 = vld [vmem:[%s1 + $0xd0] sm:$0xff]
        %v302 = vld [vmem:[%s1 + $0xd8] sm:$0xff]
        %v303 = vld [vmem:[%s1 + $0xe0] sm:$0xff]
        %v304 = vld [vmem:[%s1 + $0xe8] sm:$0xff]
        %v305 = vld [vmem:[%s1 + $0xf0] sm:$0xff]
        %v306 = vld [vmem:[%s1 + $0xf8] sm:$0xff]
        %v307 = vld [vmem:[%s1 + $0x100] sm:$0xff]
        %v308 = vld [vmem:[%s1 + $0x108] sm:$0xff]
        %v309 = vld [vmem:[%s1 + $0x110] sm:$0xff]
        %v310 = vld [vmem:[%s1 + $0x118] sm:$0xff]
        %v311 = vld [vmem:[%s1 + $0x120] sm:$0xff]
        %v312 = vld [vmem:[%s1 + $0x128] sm:$0xff]
        %v313 = vld [vmem:[%s1 + $0x130] sm:$0xff]
        %v314 = vld [vmem:[%s1 + $0x138] sm:$0xff]
        %v315 = vld [vmem:[%s1 + $0x140] sm:$0xff]
        %v316 = vld [vmem:[%s1 + $0x148] sm:$0xff]
        %v317 = vld [vmem:[%s1 + $0x150] sm:$0xff]
        %v318 = vld [vmem:[%s1 + $0x158] sm:$0xff]
        %v319 = vld [vmem:[%s1 + $0x160] sm:$0xff]
        %v320 = vld [vmem:[%s1 + $0x168] sm:$0xff]
        %v321 = vld [vmem:[%s1 + $0x170] sm:$0xff]
        %v322 = vld [vmem:[%s1 + $0x178] sm:$0xff]
        %v323 = vld [vmem:[%s1 + $0x180] sm:$0xff]
        %v324 = vld [vmem:[%s1 + $0x188] sm:$0xff]
        %v325 = vld [vmem:[%s1 + $0x190] sm:$0xff]
        %v326 = vld [vmem:[%s1 + $0x198] sm:$0xff]
        %v327 = vld [vmem:[%s1 + $0x1a0] sm:$0xff]
        %v328 = vld [vmem:[%s1 + $0x1a8] sm:$0xff]
        %v329 = vld [vmem:[%s1 + $0x1b0] sm:$0xff]
        %v330 = vld [vmem:[%s1 + $0x1b8] sm:$0xff]
        %v331 = vld [vmem:[%s1 + $0x1c0] sm:$0xff]
        %v332 = vld [vmem:[%s1 + $0x1c8] sm:$0xff]
        %v333 = vld [vmem:[%s1 + $0x1d0] sm:$0xff]
        %v334 = vld [vmem:[%s1 + $0x1d8] sm:$0xff]
        %v335 = vld [vmem:[%s1 + $0x1e0] sm:$0xff]
        %v336 = vld [vmem:[%s1 + $0x1e8] sm:$0xff]
        %v337 = vld [vmem:[%s1 + $0x1f0] sm:$0xff]
        %v338 = vld [vmem:[%s1 + $0x1f8] sm:$0xff]
        %v339 = vld [vmem:[%s1 + $0x200] sm:$0xff]
        %v340 = vld [vmem:[%s1 + $0x208] sm:$0xff]
        %v341 = vld [vmem:[%s1 + $0x210] sm:$0xff]
        %v342 = vld [vmem:[%s1 + $0x218] sm:$0xff]
        %v343 = vld [vmem:[%s1 + $0x220] sm:$0xff]
        %v344 = vld [vmem:[%s1 + $0x228] sm:$0xff]
        %v345 = vld [vmem:[%s1 + $0x230] sm:$0xff]
        %v346 = vld [vmem:[%s1 + $0x238] sm:$0xff]
        %v347 = vld [vmem:[%s1 + $0x240] sm:$0xff]
        %v348 = vld [vmem:[%s1 + $0x248] sm:$0xff]
        %v349 = vld [vmem:[%s1 + $0x250] sm:$0xff]
        %v350 = vld [vmem:[%s1 + $0x258] sm:$0xff]
        %v351 = vld [vmem:[%s1 + $0x260] sm:$0xff]
        %v352 = vld [vmem:[%s1 + $0x268] sm:$0xff]
        %v353 = vld [vmem:[%s1 + $0x270] sm:$0xff]
        %v354 = vld [vmem:[%s1 + $0x278] sm:$0xff]
        %v355 = vld [vmem:[%s1 + $0x280] sm:$0xff]
        %v356 = vld [vmem:[%s1 + $0x288] sm:$0xff]
        %v357 = vld [vmem:[%s1 + $0x290] sm:$0xff]
        %v358 = vld [vmem:[%s1 + $0x298] sm:$0xff]
        %v359 = vld [vmem:[%s1 + $0x2a0] sm:$0xff]
        %v360 = vld [vmem:[%s1 + $0x2a8] sm:$0xff]
        %v361 = vld [vmem:[%s1 + $0x2b0] sm:$0xff]
        %v362 = vld [vmem:[%s1 + $0x2b8] sm:$0xff]
        %v363 = vld [vmem:[%s1 + $0x2c0] sm:$0xff]
        %v364 = vld [vmem:[%s1 + $0x2c8] sm:$0xff]
        %v365 = vld [vmem:[%s1 + $0x2d0] sm:$0xff]
        %v366 = vld [vmem:[%s1 + $0x2d8] sm:$0xff]
        %v367 = vld [vmem:[%s1 + $0x2e0] sm:$0xff]
        %v368 = vld [vmem:[%s1 + $0x2e8] sm:$0xff]
        %v369 = vld [vmem:[%s1 + $0x2f0] sm:$0xff]
        %v370 = vld [vmem:[%s1 + $0x2f8] sm:$0xff]
        %v371 = vld [vmem:[%s1 + $0x300] sm:$0xff]
        %v372 = vld [vmem:[%s1 + $0x308] sm:$0xff]
        %v373 = vld [vmem:[%s1 + $0x310] sm:$0xff]
        %v374 = vld [vmem:[%s1 + $0x318] sm:$0xff]
        %v375 = vld [vmem:[%s1 + $0x320] sm:$0xff]
        %v376 = vld [vmem:[%s1 + $0x328] sm:$0xff]
        %v377 = vld [vmem:[%s1 + $0x330] sm:$0xff]
        %v378 = vld [vmem:[%s1 + $0x338] sm:$0xff]
        %v379 = vld [vmem:[%s1 + $0x340] sm:$0xff]
        %v380 = vld [vmem:[%s1 + $0x348] sm:$0xff]
        %v381 = vld [vmem:[%s1 + $0x350] sm:$0xff]
        %v382 = vld [vmem:[%s1 + $0x358] sm:$0xff]
        %v383 = vld [vmem:[%s1 + $0x360] sm:$0xff]
        %v384 = vld [vmem:[%s1 + $0x368] sm:$0xff]
        %v385 = vld [vmem:[%s1 + $0x370] sm:$0xff]
        %v386 = vld [vmem:[%s1 + $0x378] sm:$0xff]
        %v387 = vld [vmem:[%s1 + $0x380] sm:$0xff]
        %v388 = vld [vmem:[%s1 + $0x388] sm:$0xff]
        %v389 = vld [vmem:[%s1 + $0x390] sm:$0xff]
        %v390 = vld [vmem:[%s1 + $0x398] sm:$0xff]
        %v391 = vld [vmem:[%s1 + $0x3a0] sm:$0xff]
        %v392 = vld [vmem:[%s1 + $0x3a8] sm:$0xff]
        %v393 = vld [vmem:[%s1 + $0x3b0] sm:$0xff]
        %v394 = vld [vmem:[%s1 + $0x3b8] sm:$0xff]
        %v395 = vld [vmem:[%s1 + $0x3c0] sm:$0xff]
        %v396 = vld [vmem:[%s1 + $0x3c8] sm:$0xff]
        %v397 = vld [vmem:[%s1 + $0x3d0] sm:$0xff]
        %v398 = vld [vmem:[%s1 + $0x3d8] sm:$0xff]
        %v399 = vld [vmem:[%s1 + $0x3e0] sm:$0xff]
        %v400 = vld [vmem:[%s1 + $0x3e8] sm:$0xff]
        %v401 = vld [vmem:[%s1 + $0x3f0] sm:$0xff]
        %v402 = vld [vmem:[%s1 + $0x3f8] sm:$0xff]
        %v403 = vld [vmem:[%s1 + $0x400] sm:$0xff]
        %v404 = vld [vmem:[%s1 + $0x408] sm:$0xff]
        %v405 = vld [vmem:[%s1 + $0x410] sm:$0xff]
        %v406 = vld [vmem:[%s1 + $0x418] sm:$0xff]
        %v407 = vld [vmem:[%s1 + $0x420] sm:$0xff]
        %v408 = vld [vmem:[%s1 + $0x428] sm:$0xff]
        %v409 = vld [vmem:[%s1 + $0x430] sm:$0xff]
        %v410 = vld [vmem:[%s1 + $0x438] sm:$0xff]
        %v411 = vld [vmem:[%s1 + $0x440] sm:$0xff]
        %v412 = vld [vmem:[%s1 + $0x448] sm:$0xff]
        %v413 = vld [vmem:[%s1 + $0x450] sm:$0xff]
        %v414 = vld [vmem:[%s1 + $0x458] sm:$0xff]
        %v415 = vld [vmem:[%s1 + $0x460] sm:$0xff]
        %v416 = vld [vmem:[%s1 + $0x468] sm:$0xff]
        %v417 = vld [vmem:[%s1 + $0x470] sm:$0xff]
        %v418 = vld [vmem:[%s1 + $0x478] sm:$0xff]
        %v419 = vld [vmem:[%s1 + $0x480] sm:$0xff]
        %v420 = vld [vmem:[%s1 + $0x488] sm:$0xff]
        %v421 = vld [vmem:[%s1 + $0x490] sm:$0xff]
        %v422 = vld [vmem:[%s1 + $0x498] sm:$0xff]
        %v423 = vld [vmem:[%s1 + $0x4a0] sm:$0xff]
        %v424 = vld [vmem:[%s1 + $0x4a8] sm:$0xff]
        %v425 = vld [vmem:[%s1 + $0x4b0] sm:$0xff]
        %v426 = vld [vmem:[%s1 + $0x4b8] sm:$0xff]
        %v427 = vld [vmem:[%s1 + $0x4c0] sm:$0xff]
        %v428 = vld [vmem:[%s1 + $0x4c8] sm:$0xff]
        %v429 = vld [vmem:[%s1 + $0x4d0] sm:$0xff]
        %v430 = vld [vmem:[%s1 + $0x4d8] sm:$0xff]
        %v431 = vld [vmem:[%s1 + $0x4e0] sm:$0xff]
        %v432 = vld [vmem:[%s1 + $0x4e8] sm:$0xff]
        %v433 = vld [vmem:[%s1 + $0x4f0] sm:$0xff]
        %v434 = vld [vmem:[%s1 + $0x4f8] sm:$0xff]
        %v435 = vld [vmem:[%s1 + $0x500] sm:$0xff]
        %v436 = vld [vmem:[%s1 + $0x508] sm:$0xff]
        %v437 = vld [vmem:[%s1 + $0x510] sm:$0xff]
        %v438 = vld [vmem:[%s1 + $0x518] sm:$0xff]
        %v439 = vld [vmem:[%s1 + $0x520] sm:$0xff]
        %v440 = vld [vmem:[%s1 + $0x528] sm:$0xff]
        %v441 = vld [vmem:[%s1 + $0x530] sm:$0xff]
        %v442 = vld [vmem:[%s1 + $0x538] sm:$0xff]
        %v443 = vld [vmem:[%s1 + $0x540] sm:$0xff]
        %v444 = vld [vmem:[%s1 + $0x548] sm:$0xff]
        %v445 = vld [vmem:[%s1 + $0x550] sm:$0xff]
        %v446 = vld [vmem:[%s1 + $0x558] sm:$0xff]
        %v447 = vld [vmem:[%s1 + $0x560] sm:$0xff]
        %v448 = vld [vmem:[%s1 + $0x568] sm:$0xff]
        %v449 = vld [vmem:[%s1 + $0x570] sm:$0xff]
        %v450 = vld [vmem:[%s1 + $0x578] sm:$0xff]
        %v451 = vld [vmem:[%s1 + $0x580] sm:$0xff]
        %v452 = vld [vmem:[%s1 + $0x588] sm:$0xff]
        %v453 = vld [vmem:[%s1 + $0x590] sm:$0xff]
        %v454 = vld [vmem:[%s1 + $0x598] sm:$0xff]
        %v455 = vld [vmem:[%s1 + $0x5a0] sm:$0xff]
        %v456 = vld [vmem:[%s1 + $0x5a8] sm:$0xff]
        %v457 = vld [vmem:[%s1 + $0x5b0] sm:$0xff]
        %v458 = vld [vmem:[%s1 + $0x5b8] sm:$0xff]
        %v459 = vld [vmem:[%s1 + $0x5c0] sm:$0xff]
        %v460 = vld [vmem:[%s1 + $0x5c8] sm:$0xff]
        %v461 = vld [vmem:[%s1 + $0x5d0] sm:$0xff]
        %v462 = vld [vmem:[%s1 + $0x5d8] sm:$0xff]
        %v463 = vld [vmem:[%s1 + $0x5e0] sm:$0xff]
        %v464 = vld [vmem:[%s1 + $0x5e8] sm:$0xff]
        %v465 = vld [vmem:[%s1 + $0x5f0] sm:$0xff]
        %v466 = vld [vmem:[%s1 + $0x5f8] sm:$0xff]
        %v467 = vld [vmem:[%s1 + $0x600] sm:$0xff]
        %v468 = vld [vmem:[%s1 + $0x608] sm:$0xff]
        %v469 = vld [vmem:[%s1 + $0x610] sm:$0xff]
        %v470 = vld [vmem:[%s1 + $0x618] sm:$0xff]
        %v471 = vld [vmem:[%s1 + $0x620] sm:$0xff]
        %v472 = vld [vmem:[%s1 + $0x628] sm:$0xff]
        %v473 = vld [vmem:[%s1 + $0x630] sm:$0xff]
        %v474 = vld [vmem:[%s1 + $0x638] sm:$0xff]
        %v475 = vld [vmem:[%s1 + $0x640] sm:$0xff]
        %v476 = vld [vmem:[%s1 + $0x648] sm:$0xff]
        %v477 = vld [vmem:[%s1 + $0x650] sm:$0xff]
        %v478 = vld [vmem:[%s1 + $0x658] sm:$0xff]
        %v479 = vld [vmem:[%s1 + $0x660] sm:$0xff]
        %v480 = vld [vmem:[%s1 + $0x668] sm:$0xff]
        %v481 = vld [vmem:[%s1 + $0x670] sm:$0xff]
        %v482 = vld [vmem:[%s1 + $0x678] sm:$0xff]
        %v483 = vld [vmem:[%s1 + $0x680] sm:$0xff]
        %v484 = vld [vmem:[%s1 + $0x688] sm:$0xff]
        %v485 = vld [vmem:[%s1 + $0x690] sm:$0xff]
        %v486 = vld [vmem:[%s1 + $0x698] sm:$0xff]
        %v487 = vld [vmem:[%s1 + $0x6a0] sm:$0xff]
        %v488 = vld [vmem:[%s1 + $0x6a8] sm:$0xff]
        %v489 = vld [vmem:[%s1 + $0x6b0] sm:$0xff]
        %v490 = vld [vmem:[%s1 + $0x6b8] sm:$0xff]
        %v491 = vld [vmem:[%s1 + $0x6c0] sm:$0xff]
        %v492 = vld [vmem:[%s1 + $0x6c8] sm:$0xff]
        %v493 = vld [vmem:[%s1 + $0x6d0] sm:$0xff]
        %v494 = vld [vmem:[%s1 + $0x6d8] sm:$0xff]
        %v495 = vld [vmem:[%s1 + $0x6e0] sm:$0xff]
        %v496 = vld [vmem:[%s1 + $0x6e8] sm:$0xff]
        %v497 = vld [vmem:[%s1 + $0x6f0] sm:$0xff]
        %v498 = vld [vmem:[%s1 + $0x6f8] sm:$0xff]
        %v499 = vld [vmem:[%s1 + $0x700] sm:$0xff]
        %v500 = vld [vmem:[%s1 + $0x708] sm:$0xff]
        %v501 = vld [vmem:[%s1 + $0x710] sm:$0xff]
        %v502 = vld [vmem:[%s1 + $0x718] sm:$0xff]
        %v503 = vld [vmem:[%s1 + $0x720] sm:$0xff]
        %v504 = vld [vmem:[%s1 + $0x728] sm:$0xff]
        %v505 = vld [vmem:[%s1 + $0x730] sm:$0xff]
        %v506 = vld [vmem:[%s1 + $0x738] sm:$0xff]
        %v507 = vld [vmem:[%s1 + $0x740] sm:$0xff]
        %v508 = vld [vmem:[%s1 + $0x748] sm:$0xff]
        %v509 = vld [vmem:[%s1 + $0x750] sm:$0xff]
        %v510 = vld [vmem:[%s1 + $0x758] sm:$0xff]
        %v511 = vld [vmem:[%s1 + $0x760] sm:$0xff]
        %v512 = vld [vmem:[%s1 + $0x768] sm:$0xff]
        %v513 = vld [vmem:[%s1 + $0x770] sm:$0xff]
        %v514 = vld [vmem:[%s1 + $0x778] sm:$0xff]
        %v515 = vld [vmem:[%s1 + $0x780] sm:$0xff]
        %v516 = vld [vmem:[%s1 + $0x788] sm:$0xff]
        %v517 = vld [vmem:[%s1 + $0x790] sm:$0xff]
        %v518 = vld [vmem:[%s1 + $0x798] sm:$0xff]
        %v519 = vld [vmem:[%s1 + $0x7a0] sm:$0xff]
        %v520 = vld [vmem:[%s1 + $0x7a8] sm:$0xff]
        %v521 = vld [vmem:[%s1 + $0x7b0] sm:$0xff]
        %v522 = vld [vmem:[%s1 + $0x7b8] sm:$0xff]
        %v523 = vld [vmem:[%s1 + $0x7c0] sm:$0xff]
        %v524 = vld [vmem:[%s1 + $0x7c8] sm:$0xff]
        %v525 = vld [vmem:[%s1 + $0x7d0] sm:$0xff]
        %v526 = vld [vmem:[%s1 + $0x7d8] sm:$0xff]
        %v527 = vld [vmem:[%s1 + $0x7e0] sm:$0xff]
        %v528 = vld [vmem:[%s1 + $0x7e8] sm:$0xff]
        %v529 = vld [vmem:[%s1 + $0x7f0] sm:$0xff]
        %v530 = vld [vmem:[%s1 + $0x7f8] sm:$0xff]
        %v531 = vld [vmem:[%s2] sm:$0xff]
        %v533 = vperm.slane %v531, 0
        %v534 = vperm.slane %v531, 1
        %v535 = vperm.slane %v531, 2
        %v536 = vperm.slane %v531, 3
        %v537 = vperm.slane %v531, 4
        %v538 = vperm.slane %v531, 5
        %v539 = vperm.slane %v531, 6
        %v540 = vperm.slane %v531, 7
        %v805 = vunpack.c.l.b16 %v275
        %v806 = vunpack.c.h.b16 %v275
        %v807 = vunpack.c.l.b16 %v276
        %v808 = vunpack.c.h.b16 %v276
        %v809 = vunpack.c.l.b16 %v277
        %v810 = vunpack.c.h.b16 %v277
        %v811 = vunpack.c.l.b16 %v278
        %v812 = vunpack.c.h.b16 %v278
        %v813 = vunpack.c.l.b16 %v279
        %v814 = vunpack.c.h.b16 %v279
        %v815 = vunpack.c.l.b16 %v280
        %v816 = vunpack.c.h.b16 %v280
        %v817 = vunpack.c.l.b16 %v281
        %v818 = vunpack.c.h.b16 %v281
        %v819 = vunpack.c.l.b16 %v282
        %v820 = vunpack.c.h.b16 %v282
        %v821 = vunpack.c.l.b16 %v283
        %v822 = vunpack.c.h.b16 %v283
        %v823 = vunpack.c.l.b16 %v284
        %v824 = vunpack.c.h.b16 %v284
        %v825 = vunpack.c.l.b16 %v285
        %v826 = vunpack.c.h.b16 %v285
        %v827 = vunpack.c.l.b16 %v286
        %v828 = vunpack.c.h.b16 %v286
        %v829 = vunpack.c.l.b16 %v287
        %v830 = vunpack.c.h.b16 %v287
        %v831 = vunpack.c.l.b16 %v288
        %v832 = vunpack.c.h.b16 %v288
        %v833 = vunpack.c.l.b16 %v289
        %v834 = vunpack.c.h.b16 %v289
        %v835 = vunpack.c.l.b16 %v290
        %v836 = vunpack.c.h.b16 %v290
        %v837 = vunpack.c.l.b16 %v291
        %v838 = vunpack.c.h.b16 %v291
        %v839 = vunpack.c.l.b16 %v292
        %v840 = vunpack.c.h.b16 %v292
        %v841 = vunpack.c.l.b16 %v293
        %v842 = vunpack.c.h.b16 %v293
        %v843 = vunpack.c.l.b16 %v294
        %v844 = vunpack.c.h.b16 %v294
        %v845 = vunpack.c.l.b16 %v295
        %v846 = vunpack.c.h.b16 %v295
        %v847 = vunpack.c.l.b16 %v296
        %v848 = vunpack.c.h.b16 %v296
        %v849 = vunpack.c.l.b16 %v297
        %v850 = vunpack.c.h.b16 %v297
        %v851 = vunpack.c.l.b16 %v298
        %v852 = vunpack.c.h.b16 %v298
        %v853 = vunpack.c.l.b16 %v299
        %v854 = vunpack.c.h.b16 %v299
        %v855 = vunpack.c.l.b16 %v300
        %v856 = vunpack.c.h.b16 %v300
        %v857 = vunpack.c.l.b16 %v301
        %v858 = vunpack.c.h.b16 %v301
        %v859 = vunpack.c.l.b16 %v302
        %v860 = vunpack.c.h.b16 %v302
        %v861 = vunpack.c.l.b16 %v303
        %v862 = vunpack.c.h.b16 %v303
        %v863 = vunpack.c.l.b16 %v304
        %v864 = vunpack.c.h.b16 %v304
        %v865 = vunpack.c.l.b16 %v305
        %v866 = vunpack.c.h.b16 %v305
        %v867 = vunpack.c.l.b16 %v306
        %v868 = vunpack.c.h.b16 %v306
        %v869 = vunpack.c.l.b16 %v307
        %v870 = vunpack.c.h.b16 %v307
        %v871 = vunpack.c.l.b16 %v308
        %v872 = vunpack.c.h.b16 %v308
        %v873 = vunpack.c.l.b16 %v309
        %v874 = vunpack.c.h.b16 %v309
        %v875 = vunpack.c.l.b16 %v310
        %v876 = vunpack.c.h.b16 %v310
        %v877 = vunpack.c.l.b16 %v311
        %v878 = vunpack.c.h.b16 %v311
        %v879 = vunpack.c.l.b16 %v312
        %v880 = vunpack.c.h.b16 %v312
        %v881 = vunpack.c.l.b16 %v313
        %v882 = vunpack.c.h.b16 %v313
        %v883 = vunpack.c.l.b16 %v314
        %v884 = vunpack.c.h.b16 %v314
        %v885 = vunpack.c.l.b16 %v315
        %v886 = vunpack.c.h.b16 %v315
        %v887 = vunpack.c.l.b16 %v316
        %v888 = vunpack.c.h.b16 %v316
        %v889 = vunpack.c.l.b16 %v317
        %v890 = vunpack.c.h.b16 %v317
        %v891 = vunpack.c.l.b16 %v318
        %v892 = vunpack.c.h.b16 %v318
        %v893 = vunpack.c.l.b16 %v319
        %v894 = vunpack.c.h.b16 %v319
        %v895 = vunpack.c.l.b16 %v320
        %v896 = vunpack.c.h.b16 %v320
        %v897 = vunpack.c.l.b16 %v321
        %v898 = vunpack.c.h.b16 %v321
        %v899 = vunpack.c.l.b16 %v322
        %v900 = vunpack.c.h.b16 %v322
        %v901 = vunpack.c.l.b16 %v323
        %v902 = vunpack.c.h.b16 %v323
        %v903 = vunpack.c.l.b16 %v324
        %v904 = vunpack.c.h.b16 %v324
        %v905 = vunpack.c.l.b16 %v325
        %v906 = vunpack.c.h.b16 %v325
        %v907 = vunpack.c.l.b16 %v326
        %v908 = vunpack.c.h.b16 %v326
        %v909 = vunpack.c.l.b16 %v327
        %v910 = vunpack.c.h.b16 %v327
        %v911 = vunpack.c.l.b16 %v328
        %v912 = vunpack.c.h.b16 %v328
        %v913 = vunpack.c.l.b16 %v329
        %v914 = vunpack.c.h.b16 %v329
        %v915 = vunpack.c.l.b16 %v330
        %v916 = vunpack.c.h.b16 %v330
        %v917 = vunpack.c.l.b16 %v331
        %v918 = vunpack.c.h.b16 %v331
        %v919 = vunpack.c.l.b16 %v332
        %v920 = vunpack.c.h.b16 %v332
        %v921 = vunpack.c.l.b16 %v333
        %v922 = vunpack.c.h.b16 %v333
        %v923 = vunpack.c.l.b16 %v334
        %v924 = vunpack.c.h.b16 %v334
        %v925 = vunpack.c.l.b16 %v335
        %v926 = vunpack.c.h.b16 %v335
        %v927 = vunpack.c.l.b16 %v336
        %v928 = vunpack.c.h.b16 %v336
        %v929 = vunpack.c.l.b16 %v337
        %v930 = vunpack.c.h.b16 %v337
        %v931 = vunpack.c.l.b16 %v338
        %v932 = vunpack.c.h.b16 %v338
        %v933 = vunpack.c.l.b16 %v339
        %v934 = vunpack.c.h.b16 %v339
        %v935 = vunpack.c.l.b16 %v340
        %v936 = vunpack.c.h.b16 %v340
        %v937 = vunpack.c.l.b16 %v341
        %v938 = vunpack.c.h.b16 %v341
        %v939 = vunpack.c.l.b16 %v342
        %v940 = vunpack.c.h.b16 %v342
        %v941 = vunpack.c.l.b16 %v343
        %v942 = vunpack.c.h.b16 %v343
        %v943 = vunpack.c.l.b16 %v344
        %v944 = vunpack.c.h.b16 %v344
        %v945 = vunpack.c.l.b16 %v345
        %v946 = vunpack.c.h.b16 %v345
        %v947 = vunpack.c.l.b16 %v346
        %v948 = vunpack.c.h.b16 %v346
        %v949 = vunpack.c.l.b16 %v347
        %v950 = vunpack.c.h.b16 %v347
        %v951 = vunpack.c.l.b16 %v348
        %v952 = vunpack.c.h.b16 %v348
        %v953 = vunpack.c.l.b16 %v349
        %v954 = vunpack.c.h.b16 %v349
        %v955 = vunpack.c.l.b16 %v350
        %v956 = vunpack.c.h.b16 %v350
        %v957 = vunpack.c.l.b16 %v351
        %v958 = vunpack.c.h.b16 %v351
        %v959 = vunpack.c.l.b16 %v352
        %v960 = vunpack.c.h.b16 %v352
        %v961 = vunpack.c.l.b16 %v353
        %v962 = vunpack.c.h.b16 %v353
        %v963 = vunpack.c.l.b16 %v354
        %v964 = vunpack.c.h.b16 %v354
        %v965 = vunpack.c.l.b16 %v355
        %v966 = vunpack.c.h.b16 %v355
        %v967 = vunpack.c.l.b16 %v356
        %v968 = vunpack.c.h.b16 %v356
        %v969 = vunpack.c.l.b16 %v357
        %v970 = vunpack.c.h.b16 %v357
        %v971 = vunpack.c.l.b16 %v358
        %v972 = vunpack.c.h.b16 %v358
        %v973 = vunpack.c.l.b16 %v359
        %v974 = vunpack.c.h.b16 %v359
        %v975 = vunpack.c.l.b16 %v360
        %v976 = vunpack.c.h.b16 %v360
        %v977 = vunpack.c.l.b16 %v361
        %v978 = vunpack.c.h.b16 %v361
        %v979 = vunpack.c.l.b16 %v362
        %v980 = vunpack.c.h.b16 %v362
        %v981 = vunpack.c.l.b16 %v363
        %v982 = vunpack.c.h.b16 %v363
        %v983 = vunpack.c.l.b16 %v364
        %v984 = vunpack.c.h.b16 %v364
        %v985 = vunpack.c.l.b16 %v365
        %v986 = vunpack.c.h.b16 %v365
        %v987 = vunpack.c.l.b16 %v366
        %v988 = vunpack.c.h.b16 %v366
        %v989 = vunpack.c.l.b16 %v367
        %v990 = vunpack.c.h.b16 %v367
        %v991 = vunpack.c.l.b16 %v368
        %v992 = vunpack.c.h.b16 %v368
        %v993 = vunpack.c.l.b16 %v369
        %v994 = vunpack.c.h.b16 %v369
        %v995 = vunpack.c.l.b16 %v370
        %v996 = vunpack.c.h.b16 %v370
        %v997 = vunpack.c.l.b16 %v371
        %v998 = vunpack.c.h.b16 %v371
        %v999 = vunpack.c.l.b16 %v372
        %v1000 = vunpack.c.h.b16 %v372
        %v1001 = vunpack.c.l.b16 %v373
        %v1002 = vunpack.c.h.b16 %v373
        %v1003 = vunpack.c.l.b16 %v374
        %v1004 = vunpack.c.h.b16 %v374
        %v1005 = vunpack.c.l.b16 %v375
        %v1006 = vunpack.c.h.b16 %v375
        %v1007 = vunpack.c.l.b16 %v376
        %v1008 = vunpack.c.h.b16 %v376
        %v1009 = vunpack.c.l.b16 %v377
        %v1010 = vunpack.c.h.b16 %v377
        %v1011 = vunpack.c.l.b16 %v378
        %v1012 = vunpack.c.h.b16 %v378
        %v1013 = vunpack.c.l.b16 %v379
        %v1014 = vunpack.c.h.b16 %v379
        %v1015 = vunpack.c.l.b16 %v380
        %v1016 = vunpack.c.h.b16 %v380
        %v1017 = vunpack.c.l.b16 %v381
        %v1018 = vunpack.c.h.b16 %v381
        %v1019 = vunpack.c.l.b16 %v382
        %v1020 = vunpack.c.h.b16 %v382
        %v1021 = vunpack.c.l.b16 %v383
        %v1022 = vunpack.c.h.b16 %v383
        %v1023 = vunpack.c.l.b16 %v384
        %v1024 = vunpack.c.h.b16 %v384
        %v1025 = vunpack.c.l.b16 %v385
        %v1026 = vunpack.c.h.b16 %v385
        %v1027 = vunpack.c.l.b16 %v386
        %v1028 = vunpack.c.h.b16 %v386
        %v1029 = vunpack.c.l.b16 %v387
        %v1030 = vunpack.c.h.b16 %v387
        %v1031 = vunpack.c.l.b16 %v388
        %v1032 = vunpack.c.h.b16 %v388
        %v1033 = vunpack.c.l.b16 %v389
        %v1034 = vunpack.c.h.b16 %v389
        %v1035 = vunpack.c.l.b16 %v390
        %v1036 = vunpack.c.h.b16 %v390
        %v1037 = vunpack.c.l.b16 %v391
        %v1038 = vunpack.c.h.b16 %v391
        %v1039 = vunpack.c.l.b16 %v392
        %v1040 = vunpack.c.h.b16 %v392
        %v1041 = vunpack.c.l.b16 %v393
        %v1042 = vunpack.c.h.b16 %v393
        %v1043 = vunpack.c.l.b16 %v394
        %v1044 = vunpack.c.h.b16 %v394
        %v1045 = vunpack.c.l.b16 %v395
        %v1046 = vunpack.c.h.b16 %v395
        %v1047 = vunpack.c.l.b16 %v396
        %v1048 = vunpack.c.h.b16 %v396
        %v1049 = vunpack.c.l.b16 %v397
        %v1050 = vunpack.c.h.b16 %v397
        %v1051 = vunpack.c.l.b16 %v398
        %v1052 = vunpack.c.h.b16 %v398
        %v1053 = vunpack.c.l.b16 %v399
        %v1054 = vunpack.c.h.b16 %v399
        %v1055 = vunpack.c.l.b16 %v400
        %v1056 = vunpack.c.h.b16 %v400
        %v1057 = vunpack.c.l.b16 %v401
        %v1058 = vunpack.c.h.b16 %v401
        %v1059 = vunpack.c.l.b16 %v402
        %v1060 = vunpack.c.h.b16 %v402
        %v1061 = vunpack.c.l.b16 %v403
        %v1062 = vunpack.c.h.b16 %v403
        %v1063 = vunpack.c.l.b16 %v404
        %v1064 = vunpack.c.h.b16 %v404
        %v1065 = vunpack.c.l.b16 %v405
        %v1066 = vunpack.c.h.b16 %v405
        %v1067 = vunpack.c.l.b16 %v406
        %v1068 = vunpack.c.h.b16 %v406
        %v1069 = vunpack.c.l.b16 %v407
        %v1070 = vunpack.c.h.b16 %v407
        %v1071 = vunpack.c.l.b16 %v408
        %v1072 = vunpack.c.h.b16 %v408
        %v1073 = vunpack.c.l.b16 %v409
        %v1074 = vunpack.c.h.b16 %v409
        %v1075 = vunpack.c.l.b16 %v410
        %v1076 = vunpack.c.h.b16 %v410
        %v1077 = vunpack.c.l.b16 %v411
        %v1078 = vunpack.c.h.b16 %v411
        %v1079 = vunpack.c.l.b16 %v412
        %v1080 = vunpack.c.h.b16 %v412
        %v1081 = vunpack.c.l.b16 %v413
        %v1082 = vunpack.c.h.b16 %v413
        %v1083 = vunpack.c.l.b16 %v414
        %v1084 = vunpack.c.h.b16 %v414
        %v1085 = vunpack.c.l.b16 %v415
        %v1086 = vunpack.c.h.b16 %v415
        %v1087 = vunpack.c.l.b16 %v416
        %v1088 = vunpack.c.h.b16 %v416
        %v1089 = vunpack.c.l.b16 %v417
        %v1090 = vunpack.c.h.b16 %v417
        %v1091 = vunpack.c.l.b16 %v418
        %v1092 = vunpack.c.h.b16 %v418
        %v1093 = vunpack.c.l.b16 %v419
        %v1094 = vunpack.c.h.b16 %v419
        %v1095 = vunpack.c.l.b16 %v420
        %v1096 = vunpack.c.h.b16 %v420
        %v1097 = vunpack.c.l.b16 %v421
        %v1098 = vunpack.c.h.b16 %v421
        %v1099 = vunpack.c.l.b16 %v422
        %v1100 = vunpack.c.h.b16 %v422
        %v1101 = vunpack.c.l.b16 %v423
        %v1102 = vunpack.c.h.b16 %v423
        %v1103 = vunpack.c.l.b16 %v424
        %v1104 = vunpack.c.h.b16 %v424
        %v1105 = vunpack.c.l.b16 %v425
        %v1106 = vunpack.c.h.b16 %v425
        %v1107 = vunpack.c.l.b16 %v426
        %v1108 = vunpack.c.h.b16 %v426
        %v1109 = vunpack.c.l.b16 %v427
        %v1110 = vunpack.c.h.b16 %v427
        %v1111 = vunpack.c.l.b16 %v428
        %v1112 = vunpack.c.h.b16 %v428
        %v1113 = vunpack.c.l.b16 %v429
        %v1114 = vunpack.c.h.b16 %v429
        %v1115 = vunpack.c.l.b16 %v430
        %v1116 = vunpack.c.h.b16 %v430
        %v1117 = vunpack.c.l.b16 %v431
        %v1118 = vunpack.c.h.b16 %v431
        %v1119 = vunpack.c.l.b16 %v432
        %v1120 = vunpack.c.h.b16 %v432
        %v1121 = vunpack.c.l.b16 %v433
        %v1122 = vunpack.c.h.b16 %v433
        %v1123 = vunpack.c.l.b16 %v434
        %v1124 = vunpack.c.h.b16 %v434
        %v1125 = vunpack.c.l.b16 %v435
        %v1126 = vunpack.c.h.b16 %v435
        %v1127 = vunpack.c.l.b16 %v436
        %v1128 = vunpack.c.h.b16 %v436
        %v1129 = vunpack.c.l.b16 %v437
        %v1130 = vunpack.c.h.b16 %v437
        %v1131 = vunpack.c.l.b16 %v438
        %v1132 = vunpack.c.h.b16 %v438
        %v1133 = vunpack.c.l.b16 %v439
        %v1134 = vunpack.c.h.b16 %v439
        %v1135 = vunpack.c.l.b16 %v440
        %v1136 = vunpack.c.h.b16 %v440
        %v1137 = vunpack.c.l.b16 %v441
        %v1138 = vunpack.c.h.b16 %v441
        %v1139 = vunpack.c.l.b16 %v442
        %v1140 = vunpack.c.h.b16 %v442
        %v1141 = vunpack.c.l.b16 %v443
        %v1142 = vunpack.c.h.b16 %v443
        %v1143 = vunpack.c.l.b16 %v444
        %v1144 = vunpack.c.h.b16 %v444
        %v1145 = vunpack.c.l.b16 %v445
        %v1146 = vunpack.c.h.b16 %v445
        %v1147 = vunpack.c.l.b16 %v446
        %v1148 = vunpack.c.h.b16 %v446
        %v1149 = vunpack.c.l.b16 %v447
        %v1150 = vunpack.c.h.b16 %v447
        %v1151 = vunpack.c.l.b16 %v448
        %v1152 = vunpack.c.h.b16 %v448
        %v1153 = vunpack.c.l.b16 %v449
        %v1154 = vunpack.c.h.b16 %v449
        %v1155 = vunpack.c.l.b16 %v450
        %v1156 = vunpack.c.h.b16 %v450
        %v1157 = vunpack.c.l.b16 %v451
        %v1158 = vunpack.c.h.b16 %v451
        %v1159 = vunpack.c.l.b16 %v452
        %v1160 = vunpack.c.h.b16 %v452
        %v1161 = vunpack.c.l.b16 %v453
        %v1162 = vunpack.c.h.b16 %v453
        %v1163 = vunpack.c.l.b16 %v454
        %v1164 = vunpack.c.h.b16 %v454
        %v1165 = vunpack.c.l.b16 %v455
        %v1166 = vunpack.c.h.b16 %v455
        %v1167 = vunpack.c.l.b16 %v456
        %v1168 = vunpack.c.h.b16 %v456
        %v1169 = vunpack.c.l.b16 %v457
        %v1170 = vunpack.c.h.b16 %v457
        %v1171 = vunpack.c.l.b16 %v458
        %v1172 = vunpack.c.h.b16 %v458
        %v1173 = vunpack.c.l.b16 %v459
        %v1174 = vunpack.c.h.b16 %v459
        %v1175 = vunpack.c.l.b16 %v460
        %v1176 = vunpack.c.h.b16 %v460
        %v1177 = vunpack.c.l.b16 %v461
        %v1178 = vunpack.c.h.b16 %v461
        %v1179 = vunpack.c.l.b16 %v462
        %v1180 = vunpack.c.h.b16 %v462
        %v1181 = vunpack.c.l.b16 %v463
        %v1182 = vunpack.c.h.b16 %v463
        %v1183 = vunpack.c.l.b16 %v464
        %v1184 = vunpack.c.h.b16 %v464
        %v1185 = vunpack.c.l.b16 %v465
        %v1186 = vunpack.c.h.b16 %v465
        %v1187 = vunpack.c.l.b16 %v466
        %v1188 = vunpack.c.h.b16 %v466
        %v1189 = vunpack.c.l.b16 %v467
        %v1190 = vunpack.c.h.b16 %v467
        %v1191 = vunpack.c.l.b16 %v468
        %v1192 = vunpack.c.h.b16 %v468
        %v1193 = vunpack.c.l.b16 %v469
        %v1194 = vunpack.c.h.b16 %v469
        %v1195 = vunpack.c.l.b16 %v470
        %v1196 = vunpack.c.h.b16 %v470
        %v1197 = vunpack.c.l.b16 %v471
        %v1198 = vunpack.c.h.b16 %v471
        %v1199 = vunpack.c.l.b16 %v472
        %v1200 = vunpack.c.h.b16 %v472
        %v1201 = vunpack.c.l.b16 %v473
        %v1202 = vunpack.c.h.b16 %v473
        %v1203 = vunpack.c.l.b16 %v474
        %v1204 = vunpack.c.h.b16 %v474
        %v1205 = vunpack.c.l.b16 %v475
        %v1206 = vunpack.c.h.b16 %v475
        %v1207 = vunpack.c.l.b16 %v476
        %v1208 = vunpack.c.h.b16 %v476
        %v1209 = vunpack.c.l.b16 %v477
        %v1210 = vunpack.c.h.b16 %v477
        %v1211 = vunpack.c.l.b16 %v478
        %v1212 = vunpack.c.h.b16 %v478
        %v1213 = vunpack.c.l.b16 %v479
        %v1214 = vunpack.c.h.b16 %v479
        %v1215 = vunpack.c.l.b16 %v480
        %v1216 = vunpack.c.h.b16 %v480
        %v1217 = vunpack.c.l.b16 %v481
        %v1218 = vunpack.c.h.b16 %v481
        %v1219 = vunpack.c.l.b16 %v482
        %v1220 = vunpack.c.h.b16 %v482
        %v1221 = vunpack.c.l.b16 %v483
        %v1222 = vunpack.c.h.b16 %v483
        %v1223 = vunpack.c.l.b16 %v484
        %v1224 = vunpack.c.h.b16 %v484
        %v1225 = vunpack.c.l.b16 %v485
        %v1226 = vunpack.c.h.b16 %v485
        %v1227 = vunpack.c.l.b16 %v486
        %v1228 = vunpack.c.h.b16 %v486
        %v1229 = vunpack.c.l.b16 %v487
        %v1230 = vunpack.c.h.b16 %v487
        %v1231 = vunpack.c.l.b16 %v488
        %v1232 = vunpack.c.h.b16 %v488
        %v1233 = vunpack.c.l.b16 %v489
        %v1234 = vunpack.c.h.b16 %v489
        %v1235 = vunpack.c.l.b16 %v490
        %v1236 = vunpack.c.h.b16 %v490
        %v1237 = vunpack.c.l.b16 %v491
        %v1238 = vunpack.c.h.b16 %v491
        %v1239 = vunpack.c.l.b16 %v492
        %v1240 = vunpack.c.h.b16 %v492
        %v1241 = vunpack.c.l.b16 %v493
        %v1242 = vunpack.c.h.b16 %v493
        %v1243 = vunpack.c.l.b16 %v494
        %v1244 = vunpack.c.h.b16 %v494
        %v1245 = vunpack.c.l.b16 %v495
        %v1246 = vunpack.c.h.b16 %v495
        %v1247 = vunpack.c.l.b16 %v496
        %v1248 = vunpack.c.h.b16 %v496
        %v1249 = vunpack.c.l.b16 %v497
        %v1250 = vunpack.c.h.b16 %v497
        %v1251 = vunpack.c.l.b16 %v498
        %v1252 = vunpack.c.h.b16 %v498
        %v1253 = vunpack.c.l.b16 %v499
        %v1254 = vunpack.c.h.b16 %v499
        %v1255 = vunpack.c.l.b16 %v500
        %v1256 = vunpack.c.h.b16 %v500
        %v1257 = vunpack.c.l.b16 %v501
        %v1258 = vunpack.c.h.b16 %v501
        %v1259 = vunpack.c.l.b16 %v502
        %v1260 = vunpack.c.h.b16 %v502
        %v1261 = vunpack.c.l.b16 %v503
        %v1262 = vunpack.c.h.b16 %v503
        %v1263 = vunpack.c.l.b16 %v504
        %v1264 = vunpack.c.h.b16 %v504
        %v1265 = vunpack.c.l.b16 %v505
        %v1266 = vunpack.c.h.b16 %v505
        %v1267 = vunpack.c.l.b16 %v506
        %v1268 = vunpack.c.h.b16 %v506
        %v1269 = vunpack.c.l.b16 %v507
        %v1270 = vunpack.c.h.b16 %v507
        %v1271 = vunpack.c.l.b16 %v508
        %v1272 = vunpack.c.h.b16 %v508
        %v1273 = vunpack.c.l.b16 %v509
        %v1274 = vunpack.c.h.b16 %v509
        %v1275 = vunpack.c.l.b16 %v510
        %v1276 = vunpack.c.h.b16 %v510
        %v1277 = vunpack.c.l.b16 %v511
        %v1278 = vunpack.c.h.b16 %v511
        %v1279 = vunpack.c.l.b16 %v512
        %v1280 = vunpack.c.h.b16 %v512
        %v1281 = vunpack.c.l.b16 %v513
        %v1282 = vunpack.c.h.b16 %v513
        %v1283 = vunpack.c.l.b16 %v514
        %v1284 = vunpack.c.h.b16 %v514
        %v1285 = vunpack.c.l.b16 %v515
        %v1286 = vunpack.c.h.b16 %v515
        %v1287 = vunpack.c.l.b16 %v516
        %v1288 = vunpack.c.h.b16 %v516
        %v1289 = vunpack.c.l.b16 %v517
        %v1290 = vunpack.c.h.b16 %v517
        %v1291 = vunpack.c.l.b16 %v518
        %v1292 = vunpack.c.h.b16 %v518
        %v1293 = vunpack.c.l.b16 %v519
        %v1294 = vunpack.c.h.b16 %v519
        %v1295 = vunpack.c.l.b16 %v520
        %v1296 = vunpack.c.h.b16 %v520
        %v1297 = vunpack.c.l.b16 %v521
        %v1298 = vunpack.c.h.b16 %v521
        %v1299 = vunpack.c.l.b16 %v522
        %v1300 = vunpack.c.h.b16 %v522
        %v1301 = vunpack.c.l.b16 %v523
        %v1302 = vunpack.c.h.b16 %v523
        %v1303 = vunpack.c.l.b16 %v524
        %v1304 = vunpack.c.h.b16 %v524
        %v1305 = vunpack.c.l.b16 %v525
        %v1306 = vunpack.c.h.b16 %v525
        %v1307 = vunpack.c.l.b16 %v526
        %v1308 = vunpack.c.h.b16 %v526
        %v1309 = vunpack.c.l.b16 %v527
        %v1310 = vunpack.c.h.b16 %v527
        %v1311 = vunpack.c.l.b16 %v528
        %v1312 = vunpack.c.h.b16 %v528
        %v1313 = vunpack.c.l.b16 %v529
        %v1314 = vunpack.c.h.b16 %v529
        %v1315 = vunpack.c.l.b16 %v530
        %v1316 = vunpack.c.h.b16 %v530
        %v1317 = vpack.c.b16 %v813, %v805
        %v1318 = vpack.c.b16 %v814, %v806
        %v1319 = vpack.c.b16 %v815, %v807
        %v1320 = vpack.c.b16 %v816, %v808
        %v1321 = vpack.c.b16 %v817, %v809
        %v1322 = vpack.c.b16 %v818, %v810
        %v1323 = vpack.c.b16 %v819, %v811
        %v1324 = vpack.c.b16 %v820, %v812
        %v1325 = vpack.c.b16 %v829, %v821
        %v1326 = vpack.c.b16 %v830, %v822
        %v1327 = vpack.c.b16 %v831, %v823
        %v1328 = vpack.c.b16 %v832, %v824
        %v1329 = vpack.c.b16 %v833, %v825
        %v1330 = vpack.c.b16 %v834, %v826
        %v1331 = vpack.c.b16 %v835, %v827
        %v1332 = vpack.c.b16 %v836, %v828
        %v1333 = vpack.c.b16 %v845, %v837
        %v1334 = vpack.c.b16 %v846, %v838
        %v1335 = vpack.c.b16 %v847, %v839
        %v1336 = vpack.c.b16 %v848, %v840
        %v1337 = vpack.c.b16 %v849, %v841
        %v1338 = vpack.c.b16 %v850, %v842
        %v1339 = vpack.c.b16 %v851, %v843
        %v1340 = vpack.c.b16 %v852, %v844
        %v1341 = vpack.c.b16 %v861, %v853
        %v1342 = vpack.c.b16 %v862, %v854
        %v1343 = vpack.c.b16 %v863, %v855
        %v1344 = vpack.c.b16 %v864, %v856
        %v1345 = vpack.c.b16 %v865, %v857
        %v1346 = vpack.c.b16 %v866, %v858
        %v1347 = vpack.c.b16 %v867, %v859
        %v1348 = vpack.c.b16 %v868, %v860
        %v1349 = vpack.c.b16 %v877, %v869
        %v1350 = vpack.c.b16 %v878, %v870
        %v1351 = vpack.c.b16 %v879, %v871
        %v1352 = vpack.c.b16 %v880, %v872
        %v1353 = vpack.c.b16 %v881, %v873
        %v1354 = vpack.c.b16 %v882, %v874
        %v1355 = vpack.c.b16 %v883, %v875
        %v1356 = vpack.c.b16 %v884, %v876
        %v1357 = vpack.c.b16 %v893, %v885
        %v1358 = vpack.c.b16 %v894, %v886
        %v1359 = vpack.c.b16 %v895, %v887
        %v1360 = vpack.c.b16 %v896, %v888
        %v1361 = vpack.c.b16 %v897, %v889
        %v1362 = vpack.c.b16 %v898, %v890
        %v1363 = vpack.c.b16 %v899, %v891
        %v1364 = vpack.c.b16 %v900, %v892
        %v1365 = vpack.c.b16 %v909, %v901
        %v1366 = vpack.c.b16 %v910, %v902
        %v1367 = vpack.c.b16 %v911, %v903
        %v1368 = vpack.c.b16 %v912, %v904
        %v1369 = vpack.c.b16 %v913, %v905
        %v1370 = vpack.c.b16 %v914, %v906
        %v1371 = vpack.c.b16 %v915, %v907
        %v1372 = vpack.c.b16 %v916, %v908
        %v1373 = vpack.c.b16 %v925, %v917
        %v1374 = vpack.c.b16 %v926, %v918
        %v1375 = vpack.c.b16 %v927, %v919
        %v1376 = vpack.c.b16 %v928, %v920
        %v1377 = vpack.c.b16 %v929, %v921
        %v1378 = vpack.c.b16 %v930, %v922
        %v1379 = vpack.c.b16 %v931, %v923
        %v1380 = vpack.c.b16 %v932, %v924
        %v1381 = vpack.c.b16 %v941, %v933
        %v1382 = vpack.c.b16 %v942, %v934
        %v1383 = vpack.c.b16 %v943, %v935
        %v1384 = vpack.c.b16 %v944, %v936
        %v1385 = vpack.c.b16 %v945, %v937
        %v1386 = vpack.c.b16 %v946, %v938
        %v1387 = vpack.c.b16 %v947, %v939
        %v1388 = vpack.c.b16 %v948, %v940
        %v1389 = vpack.c.b16 %v957, %v949
        %v1390 = vpack.c.b16 %v958, %v950
        %v1391 = vpack.c.b16 %v959, %v951
        %v1392 = vpack.c.b16 %v960, %v952
        %v1393 = vpack.c.b16 %v961, %v953
        %v1394 = vpack.c.b16 %v962, %v954
        %v1395 = vpack.c.b16 %v963, %v955
        %v1396 = vpack.c.b16 %v964, %v956
        %v1397 = vpack.c.b16 %v973, %v965
        %v1398 = vpack.c.b16 %v974, %v966
        %v1399 = vpack.c.b16 %v975, %v967
        %v1400 = vpack.c.b16 %v976, %v968
        %v1401 = vpack.c.b16 %v977, %v969
        %v1402 = vpack.c.b16 %v978, %v970
        %v1403 = vpack.c.b16 %v979, %v971
        %v1404 = vpack.c.b16 %v980, %v972
        %v1405 = vpack.c.b16 %v989, %v981
        %v1406 = vpack.c.b16 %v990, %v982
        %v1407 = vpack.c.b16 %v991, %v983
        %v1408 = vpack.c.b16 %v992, %v984
        %v1409 = vpack.c.b16 %v993, %v985
        %v1410 = vpack.c.b16 %v994, %v986
        %v1411 = vpack.c.b16 %v995, %v987
        %v1412 = vpack.c.b16 %v996, %v988
        %v1413 = vpack.c.b16 %v1005, %v997
        %v1414 = vpack.c.b16 %v1006, %v998
        %v1415 = vpack.c.b16 %v1007, %v999
        %v1416 = vpack.c.b16 %v1008, %v1000
        %v1417 = vpack.c.b16 %v1009, %v1001
        %v1418 = vpack.c.b16 %v1010, %v1002
        %v1419 = vpack.c.b16 %v1011, %v1003
        %v1420 = vpack.c.b16 %v1012, %v1004
        %v1421 = vpack.c.b16 %v1021, %v1013
        %v1422 = vpack.c.b16 %v1022, %v1014
        %v1423 = vpack.c.b16 %v1023, %v1015
        %v1424 = vpack.c.b16 %v1024, %v1016
        %v1425 = vpack.c.b16 %v1025, %v1017
        %v1426 = vpack.c.b16 %v1026, %v1018
        %v1427 = vpack.c.b16 %v1027, %v1019
        %v1428 = vpack.c.b16 %v1028, %v1020
        %v1429 = vpack.c.b16 %v1037, %v1029
        %v1430 = vpack.c.b16 %v1038, %v1030
        %v1431 = vpack.c.b16 %v1039, %v1031
        %v1432 = vpack.c.b16 %v1040, %v1032
        %v1433 = vpack.c.b16 %v1041, %v1033
        %v1434 = vpack.c.b16 %v1042, %v1034
        %v1435 = vpack.c.b16 %v1043, %v1035
        %v1436 = vpack.c.b16 %v1044, %v1036
        %v1437 = vpack.c.b16 %v1053, %v1045
        %v1438 = vpack.c.b16 %v1054, %v1046
        %v1439 = vpack.c.b16 %v1055, %v1047
        %v1440 = vpack.c.b16 %v1056, %v1048
        %v1441 = vpack.c.b16 %v1057, %v1049
        %v1442 = vpack.c.b16 %v1058, %v1050
        %v1443 = vpack.c.b16 %v1059, %v1051
        %v1444 = vpack.c.b16 %v1060, %v1052
        %v1445 = vpack.c.b16 %v1069, %v1061
        %v1446 = vpack.c.b16 %v1070, %v1062
        %v1447 = vpack.c.b16 %v1071, %v1063
        %v1448 = vpack.c.b16 %v1072, %v1064
        %v1449 = vpack.c.b16 %v1073, %v1065
        %v1450 = vpack.c.b16 %v1074, %v1066
        %v1451 = vpack.c.b16 %v1075, %v1067
        %v1452 = vpack.c.b16 %v1076, %v1068
        %v1453 = vpack.c.b16 %v1085, %v1077
        %v1454 = vpack.c.b16 %v1086, %v1078
        %v1455 = vpack.c.b16 %v1087, %v1079
        %v1456 = vpack.c.b16 %v1088, %v1080
        %v1457 = vpack.c.b16 %v1089, %v1081
        %v1458 = vpack.c.b16 %v1090, %v1082
        %v1459 = vpack.c.b16 %v1091, %v1083
        %v1460 = vpack.c.b16 %v1092, %v1084
        %v1461 = vpack.c.b16 %v1101, %v1093
        %v1462 = vpack.c.b16 %v1102, %v1094
        %v1463 = vpack.c.b16 %v1103, %v1095
        %v1464 = vpack.c.b16 %v1104, %v1096
        %v1465 = vpack.c.b16 %v1105, %v1097
        %v1466 = vpack.c.b16 %v1106, %v1098
        %v1467 = vpack.c.b16 %v1107, %v1099
        %v1468 = vpack.c.b16 %v1108, %v1100
        %v1469 = vpack.c.b16 %v1117, %v1109
        %v1470 = vpack.c.b16 %v1118, %v1110
        %v1471 = vpack.c.b16 %v1119, %v1111
        %v1472 = vpack.c.b16 %v1120, %v1112
        %v1473 = vpack.c.b16 %v1121, %v1113
        %v1474 = vpack.c.b16 %v1122, %v1114
        %v1475 = vpack.c.b16 %v1123, %v1115
        %v1476 = vpack.c.b16 %v1124, %v1116
        %v1477 = vpack.c.b16 %v1133, %v1125
        %v1478 = vpack.c.b16 %v1134, %v1126
        %v1479 = vpack.c.b16 %v1135, %v1127
        %v1480 = vpack.c.b16 %v1136, %v1128
        %v1481 = vpack.c.b16 %v1137, %v1129
        %v1482 = vpack.c.b16 %v1138, %v1130
        %v1483 = vpack.c.b16 %v1139, %v1131
        %v1484 = vpack.c.b16 %v1140, %v1132
        %v1485 = vpack.c.b16 %v1149, %v1141
        %v1486 = vpack.c.b16 %v1150, %v1142
        %v1487 = vpack.c.b16 %v1151, %v1143
        %v1488 = vpack.c.b16 %v1152, %v1144
        %v1489 = vpack.c.b16 %v1153, %v1145
        %v1490 = vpack.c.b16 %v1154, %v1146
        %v1491 = vpack.c.b16 %v1155, %v1147
        %v1492 = vpack.c.b16 %v1156, %v1148
        %v1493 = vpack.c.b16 %v1165, %v1157
        %v1494 = vpack.c.b16 %v1166, %v1158
        %v1495 = vpack.c.b16 %v1167, %v1159
        %v1496 = vpack.c.b16 %v1168, %v1160
        %v1497 = vpack.c.b16 %v1169, %v1161
        %v1498 = vpack.c.b16 %v1170, %v1162
        %v1499 = vpack.c.b16 %v1171, %v1163
        %v1500 = vpack.c.b16 %v1172, %v1164
        %v1501 = vpack.c.b16 %v1181, %v1173
        %v1502 = vpack.c.b16 %v1182, %v1174
        %v1503 = vpack.c.b16 %v1183, %v1175
        %v1504 = vpack.c.b16 %v1184, %v1176
        %v1505 = vpack.c.b16 %v1185, %v1177
        %v1506 = vpack.c.b16 %v1186, %v1178
        %v1507 = vpack.c.b16 %v1187, %v1179
        %v1508 = vpack.c.b16 %v1188, %v1180
        %v1509 = vpack.c.b16 %v1197, %v1189
        %v1510 = vpack.c.b16 %v1198, %v1190
        %v1511 = vpack.c.b16 %v1199, %v1191
        %v1512 = vpack.c.b16 %v1200, %v1192
        %v1513 = vpack.c.b16 %v1201, %v1193
        %v1514 = vpack.c.b16 %v1202, %v1194
        %v1515 = vpack.c.b16 %v1203, %v1195
        %v1516 = vpack.c.b16 %v1204, %v1196
        %v1517 = vpack.c.b16 %v1213, %v1205
        %v1518 = vpack.c.b16 %v1214, %v1206
        %v1519 = vpack.c.b16 %v1215, %v1207
        %v1520 = vpack.c.b16 %v1216, %v1208
        %v1521 = vpack.c.b16 %v1217, %v1209
        %v1522 = vpack.c.b16 %v1218, %v1210
        %v1523 = vpack.c.b16 %v1219, %v1211
        %v1524 = vpack.c.b16 %v1220, %v1212
        %v1525 = vpack.c.b16 %v1229, %v1221
        %v1526 = vpack.c.b16 %v1230, %v1222
        %v1527 = vpack.c.b16 %v1231, %v1223
        %v1528 = vpack.c.b16 %v1232, %v1224
        %v1529 = vpack.c.b16 %v1233, %v1225
        %v1530 = vpack.c.b16 %v1234, %v1226
        %v1531 = vpack.c.b16 %v1235, %v1227
        %v1532 = vpack.c.b16 %v1236, %v1228
        %v1533 = vpack.c.b16 %v1245, %v1237
        %v1534 = vpack.c.b16 %v1246, %v1238
        %v1535 = vpack.c.b16 %v1247, %v1239
        %v1536 = vpack.c.b16 %v1248, %v1240
        %v1537 = vpack.c.b16 %v1249, %v1241
        %v1538 = vpack.c.b16 %v1250, %v1242
        %v1539 = vpack.c.b16 %v1251, %v1243
        %v1540 = vpack.c.b16 %v1252, %v1244
        %v1541 = vpack.c.b16 %v1261, %v1253
        %v1542 = vpack.c.b16 %v1262, %v1254
        %v1543 = vpack.c.b16 %v1263, %v1255
        %v1544 = vpack.c.b16 %v1264, %v1256
        %v1545 = vpack.c.b16 %v1265, %v1257
        %v1546 = vpack.c.b16 %v1266, %v1258
        %v1547 = vpack.c.b16 %v1267, %v1259
        %v1548 = vpack.c.b16 %v1268, %v1260
        %v1549 = vpack.c.b16 %v1277, %v1269
        %v1550 = vpack.c.b16 %v1278, %v1270
        %v1551 = vpack.c.b16 %v1279, %v1271
        %v1552 = vpack.c.b16 %v1280, %v1272
        %v1553 = vpack.c.b16 %v1281, %v1273
        %v1554 = vpack.c.b16 %v1282, %v1274
        %v1555 = vpack.c.b16 %v1283, %v1275
        %v1556 = vpack.c.b16 %v1284, %v1276
        %v1557 = vpack.c.b16 %v1293, %v1285
        %v1558 = vpack.c.b16 %v1294, %v1286
        %v1559 = vpack.c.b16 %v1295, %v1287
        %v1560 = vpack.c.b16 %v1296, %v1288
        %v1561 = vpack.c.b16 %v1297, %v1289
        %v1562 = vpack.c.b16 %v1298, %v1290
        %v1563 = vpack.c.b16 %v1299, %v1291
        %v1564 = vpack.c.b16 %v1300, %v1292
        %v1565 = vpack.c.b16 %v1309, %v1301
        %v1566 = vpack.c.b16 %v1310, %v1302
        %v1567 = vpack.c.b16 %v1311, %v1303
        %v1568 = vpack.c.b16 %v1312, %v1304
        %v1569 = vpack.c.b16 %v1313, %v1305
        %v1570 = vpack.c.b16 %v1314, %v1306
        %v1571 = vpack.c.b16 %v1315, %v1307
        %v1572 = vpack.c.b16 %v1316, %v1308
        %1829 = vmatpush.bf16.msra.mxu0 %v1373
        %1830 = vmatpush.bf16.msra.mxu0 %v1365
        %1831 = vmatpush.bf16.msra.mxu0 %v1357
        %1832 = vmatpush.bf16.msra.mxu0 %v1349
        %1833 = vmatpush.bf16.msra.mxu0 %v1341
        %1834 = vmatpush.bf16.msra.mxu0 %v1333
        %1835 = vmatpush.bf16.msra.mxu0 %v1325
        %1836 = vmatpush.bf16.msra.mxu0 %v1317
        %1837 = vmatmul.bf16.gmra.mxu0 %v271
        %v1838 = vpop.f32.mrf.mxu0
        %v1839 = vadd.f32 %v533, %v1838
        %v1840 = vpop.f32.mrf.mxu0
        %1841 = vdwg.mxu0
        %1842 = vmatpush.bf16.msra.mxu0 %v1437
        %1843 = vmatpush.bf16.msra.mxu0 %v1429
        %1844 = vmatpush.bf16.msra.mxu0 %v1421
        %1845 = vmatpush.bf16.msra.mxu0 %v1413
        %1846 = vmatpush.bf16.msra.mxu0 %v1405
        %1847 = vmatpush.bf16.msra.mxu0 %v1397
        %1848 = vmatpush.bf16.msra.mxu0 %v1389
        %1849 = vmatpush.bf16.msra.mxu0 %v1381
        %1850 = vmatmul.bf16.gmra.mxu0 %v272
        %v1851 = vpop.f32.mrf.mxu0
        %v1852 = vadd.f32 %v1839, %v1851
        %v1853 = vpop.f32.mrf.mxu0
        %1854 = vdwg.mxu0
        %1855 = vmatpush.bf16.msra.mxu0 %v1501
        %1856 = vmatpush.bf16.msra.mxu0 %v1493
        %1857 = vmatpush.bf16.msra.mxu0 %v1485
        %1858 = vmatpush.bf16.msra.mxu0 %v1477
        %1859 = vmatpush.bf16.msra.mxu0 %v1469
        %1860 = vmatpush.bf16.msra.mxu0 %v1461
        %1861 = vmatpush.bf16.msra.mxu0 %v1453
        %1862 = vmatpush.bf16.msra.mxu0 %v1445
        %1863 = vmatmul.bf16.gmra.mxu0 %v273
        %v1864 = vpop.f32.mrf.mxu0
        %v1865 = vadd.f32 %v1852, %v1864
        %v1866 = vpop.f32.mrf.mxu0
        %1867 = vdwg.mxu0
        %1868 = vmatpush.bf16.msra.mxu0 %v1565
        %1869 = vmatpush.bf16.msra.mxu0 %v1557
        %1870 = vmatpush.bf16.msra.mxu0 %v1549
        %1871 = vmatpush.bf16.msra.mxu0 %v1541
        %1872 = vmatpush.bf16.msra.mxu0 %v1533
        %1873 = vmatpush.bf16.msra.mxu0 %v1525
        %1874 = vmatpush.bf16.msra.mxu0 %v1517
        %1875 = vmatpush.bf16.msra.mxu0 %v1509
        %1876 = vmatmul.bf16.gmra.mxu0 %v274
        %v1877 = vpop.f32.mrf.mxu0
        %v1878 = vadd.f32 %v1865, %v1877
        %v1879 = vpop.f32.mrf.mxu0
        %1880 = vdwg.mxu0
        %1881 = vmatpush.bf16.msra.mxu0 %v1374
        %1882 = vmatpush.bf16.msra.mxu0 %v1366
        %1883 = vmatpush.bf16.msra.mxu0 %v1358
        %1884 = vmatpush.bf16.msra.mxu0 %v1350
        %1885 = vmatpush.bf16.msra.mxu0 %v1342
        %1886 = vmatpush.bf16.msra.mxu0 %v1334
        %1887 = vmatpush.bf16.msra.mxu0 %v1326
        %1888 = vmatpush.bf16.msra.mxu0 %v1318
        %1889 = vmatmul.bf16.gmra.mxu0 %v271
        %v1890 = vpop.f32.mrf.mxu0
        %v1891 = vadd.f32 %v534, %v1890
        %v1892 = vpop.f32.mrf.mxu0
        %1893 = vdwg.mxu0
        %1894 = vmatpush.bf16.msra.mxu0 %v1438
        %1895 = vmatpush.bf16.msra.mxu0 %v1430
        %1896 = vmatpush.bf16.msra.mxu0 %v1422
        %1897 = vmatpush.bf16.msra.mxu0 %v1414
        %1898 = vmatpush.bf16.msra.mxu0 %v1406
        %1899 = vmatpush.bf16.msra.mxu0 %v1398
        %1900 = vmatpush.bf16.msra.mxu0 %v1390
        %1901 = vmatpush.bf16.msra.mxu0 %v1382
        %1902 = vmatmul.bf16.gmra.mxu0 %v272
        %v1903 = vpop.f32.mrf.mxu0
        %v1904 = vadd.f32 %v1891, %v1903
        %v1905 = vpop.f32.mrf.mxu0
        %1906 = vdwg.mxu0
        %1907 = vmatpush.bf16.msra.mxu0 %v1502
        %1908 = vmatpush.bf16.msra.mxu0 %v1494
        %1909 = vmatpush.bf16.msra.mxu0 %v1486
        %1910 = vmatpush.bf16.msra.mxu0 %v1478
        %1911 = vmatpush.bf16.msra.mxu0 %v1470
        %1912 = vmatpush.bf16.msra.mxu0 %v1462
        %1913 = vmatpush.bf16.msra.mxu0 %v1454
        %1914 = vmatpush.bf16.msra.mxu0 %v1446
        %1915 = vmatmul.bf16.gmra.mxu0 %v273
        %v1916 = vpop.f32.mrf.mxu0
        %v1917 = vadd.f32 %v1904, %v1916
        %v1918 = vpop.f32.mrf.mxu0
        %1919 = vdwg.mxu0
        %1920 = vmatpush.bf16.msra.mxu0 %v1566
        %1921 = vmatpush.bf16.msra.mxu0 %v1558
        %1922 = vmatpush.bf16.msra.mxu0 %v1550
        %1923 = vmatpush.bf16.msra.mxu0 %v1542
        %1924 = vmatpush.bf16.msra.mxu0 %v1534
        %1925 = vmatpush.bf16.msra.mxu0 %v1526
        %1926 = vmatpush.bf16.msra.mxu0 %v1518
        %1927 = vmatpush.bf16.msra.mxu0 %v1510
        %1928 = vmatmul.bf16.gmra.mxu0 %v274
        %v1929 = vpop.f32.mrf.mxu0
        %v1930 = vadd.f32 %v1917, %v1929
        %v1931 = vpop.f32.mrf.mxu0
        %1932 = vdwg.mxu0
        %1933 = vmatpush.bf16.msra.mxu0 %v1375
        %1934 = vmatpush.bf16.msra.mxu0 %v1367
        %1935 = vmatpush.bf16.msra.mxu0 %v1359
        %1936 = vmatpush.bf16.msra.mxu0 %v1351
        %1937 = vmatpush.bf16.msra.mxu0 %v1343
        %1938 = vmatpush.bf16.msra.mxu0 %v1335
        %1939 = vmatpush.bf16.msra.mxu0 %v1327
        %1940 = vmatpush.bf16.msra.mxu0 %v1319
        %1941 = vmatmul.bf16.gmra.mxu0 %v271
        %v1942 = vpop.f32.mrf.mxu0
        %v1943 = vadd.f32 %v535, %v1942
        %v1944 = vpop.f32.mrf.mxu0
        %1945 = vdwg.mxu0
        %1946 = vmatpush.bf16.msra.mxu0 %v1439
        %1947 = vmatpush.bf16.msra.mxu0 %v1431
        %1948 = vmatpush.bf16.msra.mxu0 %v1423
        %1949 = vmatpush.bf16.msra.mxu0 %v1415
        %1950 = vmatpush.bf16.msra.mxu0 %v1407
        %1951 = vmatpush.bf16.msra.mxu0 %v1399
        %1952 = vmatpush.bf16.msra.mxu0 %v1391
        %1953 = vmatpush.bf16.msra.mxu0 %v1383
        %1954 = vmatmul.bf16.gmra.mxu0 %v272
        %v1955 = vpop.f32.mrf.mxu0
        %v1956 = vadd.f32 %v1943, %v1955
        %v1957 = vpop.f32.mrf.mxu0
        %1958 = vdwg.mxu0
        %1959 = vmatpush.bf16.msra.mxu0 %v1503
        %1960 = vmatpush.bf16.msra.mxu0 %v1495
        %1961 = vmatpush.bf16.msra.mxu0 %v1487
        %1962 = vmatpush.bf16.msra.mxu0 %v1479
        %1963 = vmatpush.bf16.msra.mxu0 %v1471
        %1964 = vmatpush.bf16.msra.mxu0 %v1463
        %1965 = vmatpush.bf16.msra.mxu0 %v1455
        %1966 = vmatpush.bf16.msra.mxu0 %v1447
        %1967 = vmatmul.bf16.gmra.mxu0 %v273
        %v1968 = vpop.f32.mrf.mxu0
        %v1969 = vadd.f32 %v1956, %v1968
        %v1970 = vpop.f32.mrf.mxu0
        %1971 = vdwg.mxu0
        %1972 = vmatpush.bf16.msra.mxu0 %v1567
        %1973 = vmatpush.bf16.msra.mxu0 %v1559
        %1974 = vmatpush.bf16.msra.mxu0 %v1551
        %1975 = vmatpush.bf16.msra.mxu0 %v1543
        %1976 = vmatpush.bf16.msra.mxu0 %v1535
        %1977 = vmatpush.bf16.msra.mxu0 %v1527
        %1978 = vmatpush.bf16.msra.mxu0 %v1519
        %1979 = vmatpush.bf16.msra.mxu0 %v1511
        %1980 = vmatmul.bf16.gmra.mxu0 %v274
        %v1981 = vpop.f32.mrf.mxu0
        %v1982 = vadd.f32 %v1969, %v1981
        %v1983 = vpop.f32.mrf.mxu0
        %1984 = vdwg.mxu0
        %1985 = vmatpush.bf16.msra.mxu0 %v1376
        %1986 = vmatpush.bf16.msra.mxu0 %v1368
        %1987 = vmatpush.bf16.msra.mxu0 %v1360
        %1988 = vmatpush.bf16.msra.mxu0 %v1352
        %1989 = vmatpush.bf16.msra.mxu0 %v1344
        %1990 = vmatpush.bf16.msra.mxu0 %v1336
        %1991 = vmatpush.bf16.msra.mxu0 %v1328
        %1992 = vmatpush.bf16.msra.mxu0 %v1320
        %1993 = vmatmul.bf16.gmra.mxu0 %v271
        %v1994 = vpop.f32.mrf.mxu0
        %v1995 = vadd.f32 %v536, %v1994
        %v1996 = vpop.f32.mrf.mxu0
        %1997 = vdwg.mxu0
        %1998 = vmatpush.bf16.msra.mxu0 %v1440
        %1999 = vmatpush.bf16.msra.mxu0 %v1432
        %2000 = vmatpush.bf16.msra.mxu0 %v1424
        %2001 = vmatpush.bf16.msra.mxu0 %v1416
        %2002 = vmatpush.bf16.msra.mxu0 %v1408
        %2003 = vmatpush.bf16.msra.mxu0 %v1400
        %2004 = vmatpush.bf16.msra.mxu0 %v1392
        %2005 = vmatpush.bf16.msra.mxu0 %v1384
        %2006 = vmatmul.bf16.gmra.mxu0 %v272
        %v2007 = vpop.f32.mrf.mxu0
        %v2008 = vadd.f32 %v1995, %v2007
        %v2009 = vpop.f32.mrf.mxu0
        %2010 = vdwg.mxu0
        %2011 = vmatpush.bf16.msra.mxu0 %v1504
        %2012 = vmatpush.bf16.msra.mxu0 %v1496
        %2013 = vmatpush.bf16.msra.mxu0 %v1488
        %2014 = vmatpush.bf16.msra.mxu0 %v1480
        %2015 = vmatpush.bf16.msra.mxu0 %v1472
        %2016 = vmatpush.bf16.msra.mxu0 %v1464
        %2017 = vmatpush.bf16.msra.mxu0 %v1456
        %2018 = vmatpush.bf16.msra.mxu0 %v1448
        %2019 = vmatmul.bf16.gmra.mxu0 %v273
        %v2020 = vpop.f32.mrf.mxu0
        %v2021 = vadd.f32 %v2008, %v2020
        %v2022 = vpop.f32.mrf.mxu0
        %2023 = vdwg.mxu0
        %2024 = vmatpush.bf16.msra.mxu0 %v1568
        %2025 = vmatpush.bf16.msra.mxu0 %v1560
        %2026 = vmatpush.bf16.msra.mxu0 %v1552
        %2027 = vmatpush.bf16.msra.mxu0 %v1544
        %2028 = vmatpush.bf16.msra.mxu0 %v1536
        %2029 = vmatpush.bf16.msra.mxu0 %v1528
        %2030 = vmatpush.bf16.msra.mxu0 %v1520
        %2031 = vmatpush.bf16.msra.mxu0 %v1512
        %2032 = vmatmul.bf16.gmra.mxu0 %v274
        %v2033 = vpop.f32.mrf.mxu0
        %v2034 = vadd.f32 %v2021, %v2033
        %v2035 = vpop.f32.mrf.mxu0
        %2036 = vdwg.mxu0
        %2037 = vmatpush.bf16.msra.mxu0 %v1377
        %2038 = vmatpush.bf16.msra.mxu0 %v1369
        %2039 = vmatpush.bf16.msra.mxu0 %v1361
        %2040 = vmatpush.bf16.msra.mxu0 %v1353
        %2041 = vmatpush.bf16.msra.mxu0 %v1345
        %2042 = vmatpush.bf16.msra.mxu0 %v1337
        %2043 = vmatpush.bf16.msra.mxu0 %v1329
        %2044 = vmatpush.bf16.msra.mxu0 %v1321
        %2045 = vmatmul.bf16.gmra.mxu0 %v271
        %v2046 = vpop.f32.mrf.mxu0
        %v2047 = vadd.f32 %v537, %v2046
        %v2048 = vpop.f32.mrf.mxu0
        %2049 = vdwg.mxu0
        %2050 = vmatpush.bf16.msra.mxu0 %v1441
        %2051 = vmatpush.bf16.msra.mxu0 %v1433
        %2052 = vmatpush.bf16.msra.mxu0 %v1425
        %2053 = vmatpush.bf16.msra.mxu0 %v1417
        %2054 = vmatpush.bf16.msra.mxu0 %v1409
        %2055 = vmatpush.bf16.msra.mxu0 %v1401
        %2056 = vmatpush.bf16.msra.mxu0 %v1393
        %2057 = vmatpush.bf16.msra.mxu0 %v1385
        %2058 = vmatmul.bf16.gmra.mxu0 %v272
        %v2059 = vpop.f32.mrf.mxu0
        %v2060 = vadd.f32 %v2047, %v2059
        %v2061 = vpop.f32.mrf.mxu0
        %2062 = vdwg.mxu0
        %2063 = vmatpush.bf16.msra.mxu0 %v1505
        %2064 = vmatpush.bf16.msra.mxu0 %v1497
        %2065 = vmatpush.bf16.msra.mxu0 %v1489
        %2066 = vmatpush.bf16.msra.mxu0 %v1481
        %2067 = vmatpush.bf16.msra.mxu0 %v1473
        %2068 = vmatpush.bf16.msra.mxu0 %v1465
        %2069 = vmatpush.bf16.msra.mxu0 %v1457
        %2070 = vmatpush.bf16.msra.mxu0 %v1449
        %2071 = vmatmul.bf16.gmra.mxu0 %v273
        %v2072 = vpop.f32.mrf.mxu0
        %v2073 = vadd.f32 %v2060, %v2072
        %v2074 = vpop.f32.mrf.mxu0
        %2075 = vdwg.mxu0
        %2076 = vmatpush.bf16.msra.mxu0 %v1569
        %2077 = vmatpush.bf16.msra.mxu0 %v1561
        %2078 = vmatpush.bf16.msra.mxu0 %v1553
        %2079 = vmatpush.bf16.msra.mxu0 %v1545
        %2080 = vmatpush.bf16.msra.mxu0 %v1537
        %2081 = vmatpush.bf16.msra.mxu0 %v1529
        %2082 = vmatpush.bf16.msra.mxu0 %v1521
        %2083 = vmatpush.bf16.msra.mxu0 %v1513
        %2084 = vmatmul.bf16.gmra.mxu0 %v274
        %v2085 = vpop.f32.mrf.mxu0
        %v2086 = vadd.f32 %v2073, %v2085
        %v2087 = vpop.f32.mrf.mxu0
        %2088 = vdwg.mxu0
        %2089 = vmatpush.bf16.msra.mxu0 %v1378
        %2090 = vmatpush.bf16.msra.mxu0 %v1370
        %2091 = vmatpush.bf16.msra.mxu0 %v1362
        %2092 = vmatpush.bf16.msra.mxu0 %v1354
        %2093 = vmatpush.bf16.msra.mxu0 %v1346
        %2094 = vmatpush.bf16.msra.mxu0 %v1338
        %2095 = vmatpush.bf16.msra.mxu0 %v1330
        %2096 = vmatpush.bf16.msra.mxu0 %v1322
        %2097 = vmatmul.bf16.gmra.mxu0 %v271
        %v2098 = vpop.f32.mrf.mxu0
        %v2099 = vadd.f32 %v538, %v2098
        %v2100 = vpop.f32.mrf.mxu0
        %2101 = vdwg.mxu0
        %2102 = vmatpush.bf16.msra.mxu0 %v1442
        %2103 = vmatpush.bf16.msra.mxu0 %v1434
        %2104 = vmatpush.bf16.msra.mxu0 %v1426
        %2105 = vmatpush.bf16.msra.mxu0 %v1418
        %2106 = vmatpush.bf16.msra.mxu0 %v1410
        %2107 = vmatpush.bf16.msra.mxu0 %v1402
        %2108 = vmatpush.bf16.msra.mxu0 %v1394
        %2109 = vmatpush.bf16.msra.mxu0 %v1386
        %2110 = vmatmul.bf16.gmra.mxu0 %v272
        %v2111 = vpop.f32.mrf.mxu0
        %v2112 = vadd.f32 %v2099, %v2111
        %v2113 = vpop.f32.mrf.mxu0
        %2114 = vdwg.mxu0
        %2115 = vmatpush.bf16.msra.mxu0 %v1506
        %2116 = vmatpush.bf16.msra.mxu0 %v1498
        %2117 = vmatpush.bf16.msra.mxu0 %v1490
        %2118 = vmatpush.bf16.msra.mxu0 %v1482
        %2119 = vmatpush.bf16.msra.mxu0 %v1474
        %2120 = vmatpush.bf16.msra.mxu0 %v1466
        %2121 = vmatpush.bf16.msra.mxu0 %v1458
        %2122 = vmatpush.bf16.msra.mxu0 %v1450
        %2123 = vmatmul.bf16.gmra.mxu0 %v273
        %v2124 = vpop.f32.mrf.mxu0
        %v2125 = vadd.f32 %v2112, %v2124
        %v2126 = vpop.f32.mrf.mxu0
        %2127 = vdwg.mxu0
        %2128 = vmatpush.bf16.msra.mxu0 %v1570
        %2129 = vmatpush.bf16.msra.mxu0 %v1562
        %2130 = vmatpush.bf16.msra.mxu0 %v1554
        %2131 = vmatpush.bf16.msra.mxu0 %v1546
        %2132 = vmatpush.bf16.msra.mxu0 %v1538
        %2133 = vmatpush.bf16.msra.mxu0 %v1530
        %2134 = vmatpush.bf16.msra.mxu0 %v1522
        %2135 = vmatpush.bf16.msra.mxu0 %v1514
        %2136 = vmatmul.bf16.gmra.mxu0 %v274
        %v2137 = vpop.f32.mrf.mxu0
        %v2138 = vadd.f32 %v2125, %v2137
        %v2139 = vpop.f32.mrf.mxu0
        %2140 = vdwg.mxu0
        %2141 = vmatpush.bf16.msra.mxu0 %v1379
        %2142 = vmatpush.bf16.msra.mxu0 %v1371
        %2143 = vmatpush.bf16.msra.mxu0 %v1363
        %2144 = vmatpush.bf16.msra.mxu0 %v1355
        %2145 = vmatpush.bf16.msra.mxu0 %v1347
        %2146 = vmatpush.bf16.msra.mxu0 %v1339
        %2147 = vmatpush.bf16.msra.mxu0 %v1331
        %2148 = vmatpush.bf16.msra.mxu0 %v1323
        %2149 = vmatmul.bf16.gmra.mxu0 %v271
        %v2150 = vpop.f32.mrf.mxu0
        %v2151 = vadd.f32 %v539, %v2150
        %v2152 = vpop.f32.mrf.mxu0
        %2153 = vdwg.mxu0
        %2154 = vmatpush.bf16.msra.mxu0 %v1443
        %2155 = vmatpush.bf16.msra.mxu0 %v1435
        %2156 = vmatpush.bf16.msra.mxu0 %v1427
        %2157 = vmatpush.bf16.msra.mxu0 %v1419
        %2158 = vmatpush.bf16.msra.mxu0 %v1411
        %2159 = vmatpush.bf16.msra.mxu0 %v1403
        %2160 = vmatpush.bf16.msra.mxu0 %v1395
        %2161 = vmatpush.bf16.msra.mxu0 %v1387
        %2162 = vmatmul.bf16.gmra.mxu0 %v272
        %v2163 = vpop.f32.mrf.mxu0
        %v2164 = vadd.f32 %v2151, %v2163
        %v2165 = vpop.f32.mrf.mxu0
        %2166 = vdwg.mxu0
        %2167 = vmatpush.bf16.msra.mxu0 %v1507
        %2168 = vmatpush.bf16.msra.mxu0 %v1499
        %2169 = vmatpush.bf16.msra.mxu0 %v1491
        %2170 = vmatpush.bf16.msra.mxu0 %v1483
        %2171 = vmatpush.bf16.msra.mxu0 %v1475
        %2172 = vmatpush.bf16.msra.mxu0 %v1467
        %2173 = vmatpush.bf16.msra.mxu0 %v1459
        %2174 = vmatpush.bf16.msra.mxu0 %v1451
        %2175 = vmatmul.bf16.gmra.mxu0 %v273
        %v2176 = vpop.f32.mrf.mxu0
        %v2177 = vadd.f32 %v2164, %v2176
        %v2178 = vpop.f32.mrf.mxu0
        %2179 = vdwg.mxu0
        %2180 = vmatpush.bf16.msra.mxu0 %v1571
        %2181 = vmatpush.bf16.msra.mxu0 %v1563
        %2182 = vmatpush.bf16.msra.mxu0 %v1555
        %2183 = vmatpush.bf16.msra.mxu0 %v1547
        %2184 = vmatpush.bf16.msra.mxu0 %v1539
        %2185 = vmatpush.bf16.msra.mxu0 %v1531
        %2186 = vmatpush.bf16.msra.mxu0 %v1523
        %2187 = vmatpush.bf16.msra.mxu0 %v1515
        %2188 = vmatmul.bf16.gmra.mxu0 %v274
        %v2189 = vpop.f32.mrf.mxu0
        %v2190 = vadd.f32 %v2177, %v2189
        %v2191 = vpop.f32.mrf.mxu0
        %2192 = vdwg.mxu0
        %2193 = vmatpush.bf16.msra.mxu0 %v1380
        %2194 = vmatpush.bf16.msra.mxu0 %v1372
        %2195 = vmatpush.bf16.msra.mxu0 %v1364
        %2196 = vmatpush.bf16.msra.mxu0 %v1356
        %2197 = vmatpush.bf16.msra.mxu0 %v1348
        %2198 = vmatpush.bf16.msra.mxu0 %v1340
        %2199 = vmatpush.bf16.msra.mxu0 %v1332
        %2200 = vmatpush.bf16.msra.mxu0 %v1324
        %2201 = vmatmul.bf16.gmra.mxu0 %v271
        %v2202 = vpop.f32.mrf.mxu0
        %v2203 = vadd.f32 %v540, %v2202
        %v2204 = vpop.f32.mrf.mxu0
        %2205 = vdwg.mxu0
        %2206 = vmatpush.bf16.msra.mxu0 %v1444
        %2207 = vmatpush.bf16.msra.mxu0 %v1436
        %2208 = vmatpush.bf16.msra.mxu0 %v1428
        %2209 = vmatpush.bf16.msra.mxu0 %v1420
        %2210 = vmatpush.bf16.msra.mxu0 %v1412
        %2211 = vmatpush.bf16.msra.mxu0 %v1404
        %2212 = vmatpush.bf16.msra.mxu0 %v1396
        %2213 = vmatpush.bf16.msra.mxu0 %v1388
        %2214 = vmatmul.bf16.gmra.mxu0 %v272
        %v2215 = vpop.f32.mrf.mxu0
        %v2216 = vadd.f32 %v2203, %v2215
        %v2217 = vpop.f32.mrf.mxu0
        %2218 = vdwg.mxu0
        %2219 = vmatpush.bf16.msra.mxu0 %v1508
        %2220 = vmatpush.bf16.msra.mxu0 %v1500
        %2221 = vmatpush.bf16.msra.mxu0 %v1492
        %2222 = vmatpush.bf16.msra.mxu0 %v1484
        %2223 = vmatpush.bf16.msra.mxu0 %v1476
        %2224 = vmatpush.bf16.msra.mxu0 %v1468
        %2225 = vmatpush.bf16.msra.mxu0 %v1460
        %2226 = vmatpush.bf16.msra.mxu0 %v1452
        %2227 = vmatmul.bf16.gmra.mxu0 %v273
        %v2228 = vpop.f32.mrf.mxu0
        %v2229 = vadd.f32 %v2216, %v2228
        %v2230 = vpop.f32.mrf.mxu0
        %2231 = vdwg.mxu0
        %2232 = vmatpush.bf16.msra.mxu0 %v1572
        %2233 = vmatpush.bf16.msra.mxu0 %v1564
        %2234 = vmatpush.bf16.msra.mxu0 %v1556
        %2235 = vmatpush.bf16.msra.mxu0 %v1548
        %2236 = vmatpush.bf16.msra.mxu0 %v1540
        %2237 = vmatpush.bf16.msra.mxu0 %v1532
        %2238 = vmatpush.bf16.msra.mxu0 %v1524
        %2239 = vmatpush.bf16.msra.mxu0 %v1516
        %2240 = vmatmul.bf16.gmra.mxu0 %v274
        %v2241 = vpop.f32.mrf.mxu0
        %v2242 = vadd.f32 %v2229, %v2241
        %v2243 = vpop.f32.mrf.mxu0
        %2244 = vdwg.mxu0
        %v2245 = vmax.f32 %v1878, 0.0
        %v2246 = vmax.f32 %v1930, 0.0
        %v2247 = vmax.f32 %v1982, 0.0
        %v2248 = vmax.f32 %v2034, 0.0
        %v2249 = vmax.f32 %v2086, 0.0
        %v2250 = vmax.f32 %v2138, 0.0
        %v2251 = vmax.f32 %v2190, 0.0
        %v2252 = vmax.f32 %v2242, 0.0
        %v2253 = vpack.c.bf16 %v2245, %v2245
        %v2254 = vpack.c.bf16 %v2246, %v2246
        %v2255 = vpack.c.bf16 %v2247, %v2247
        %v2256 = vpack.c.bf16 %v2248, %v2248
        %v2257 = vpack.c.bf16 %v2249, %v2249
        %v2258 = vpack.c.bf16 %v2250, %v2250
        %v2259 = vpack.c.bf16 %v2251, %v2251
        %v2260 = vpack.c.bf16 %v2252, %v2252
        %v2261 = vld [vmem:[%s3] sm:$0xff]
        %v2262 = vld [vmem:[%s3 + $0x8] sm:$0xff]
        %v2263 = vld [vmem:[%s3 + $0x10] sm:$0xff]
        %v2264 = vld [vmem:[%s3 + $0x18] sm:$0xff]
        %v2265 = vld [vmem:[%s3 + $0x20] sm:$0xff]
        %v2266 = vld [vmem:[%s3 + $0x28] sm:$0xff]
        %v2267 = vld [vmem:[%s3 + $0x30] sm:$0xff]
        %v2268 = vld [vmem:[%s3 + $0x38] sm:$0xff]
        %v2269 = vld [vmem:[%s3 + $0x40] sm:$0xff]
        %v2270 = vld [vmem:[%s3 + $0x48] sm:$0xff]
        %v2271 = vld [vmem:[%s3 + $0x50] sm:$0xff]
        %v2272 = vld [vmem:[%s3 + $0x58] sm:$0xff]
        %v2273 = vld [vmem:[%s3 + $0x60] sm:$0xff]
        %v2274 = vld [vmem:[%s3 + $0x68] sm:$0xff]
        %v2275 = vld [vmem:[%s3 + $0x70] sm:$0xff]
        %v2276 = vld [vmem:[%s3 + $0x78] sm:$0xff]
        %v2277 = vld [vmem:[%s3 + $0x80] sm:$0xff]
        %v2278 = vld [vmem:[%s3 + $0x88] sm:$0xff]
        %v2279 = vld [vmem:[%s3 + $0x90] sm:$0xff]
        %v2280 = vld [vmem:[%s3 + $0x98] sm:$0xff]
        %v2281 = vld [vmem:[%s3 + $0xa0] sm:$0xff]
        %v2282 = vld [vmem:[%s3 + $0xa8] sm:$0xff]
        %v2283 = vld [vmem:[%s3 + $0xb0] sm:$0xff]
        %v2284 = vld [vmem:[%s3 + $0xb8] sm:$0xff]
        %v2285 = vld [vmem:[%s3 + $0xc0] sm:$0xff]
        %v2286 = vld [vmem:[%s3 + $0xc8] sm:$0xff]
        %v2287 = vld [vmem:[%s3 + $0xd0] sm:$0xff]
        %v2288 = vld [vmem:[%s3 + $0xd8] sm:$0xff]
        %v2289 = vld [vmem:[%s3 + $0xe0] sm:$0xff]
        %v2290 = vld [vmem:[%s3 + $0xe8] sm:$0xff]
        %v2291 = vld [vmem:[%s3 + $0xf0] sm:$0xff]
        %v2292 = vld [vmem:[%s3 + $0xf8] sm:$0xff]
        %v2293 = vld [vmem:[%s3 + $0x100] sm:$0xff]
        %v2294 = vld [vmem:[%s3 + $0x108] sm:$0xff]
        %v2295 = vld [vmem:[%s3 + $0x110] sm:$0xff]
        %v2296 = vld [vmem:[%s3 + $0x118] sm:$0xff]
        %v2297 = vld [vmem:[%s3 + $0x120] sm:$0xff]
        %v2298 = vld [vmem:[%s3 + $0x128] sm:$0xff]
        %v2299 = vld [vmem:[%s3 + $0x130] sm:$0xff]
        %v2300 = vld [vmem:[%s3 + $0x138] sm:$0xff]
        %v2301 = vld [vmem:[%s3 + $0x140] sm:$0xff]
        %v2302 = vld [vmem:[%s3 + $0x148] sm:$0xff]
        %v2303 = vld [vmem:[%s3 + $0x150] sm:$0xff]
        %v2304 = vld [vmem:[%s3 + $0x158] sm:$0xff]
        %v2305 = vld [vmem:[%s3 + $0x160] sm:$0xff]
        %v2306 = vld [vmem:[%s3 + $0x168] sm:$0xff]
        %v2307 = vld [vmem:[%s3 + $0x170] sm:$0xff]
        %v2308 = vld [vmem:[%s3 + $0x178] sm:$0xff]
        %v2309 = vld [vmem:[%s3 + $0x180] sm:$0xff]
        %v2310 = vld [vmem:[%s3 + $0x188] sm:$0xff]
        %v2311 = vld [vmem:[%s3 + $0x190] sm:$0xff]
        %v2312 = vld [vmem:[%s3 + $0x198] sm:$0xff]
        %v2313 = vld [vmem:[%s3 + $0x1a0] sm:$0xff]
        %v2314 = vld [vmem:[%s3 + $0x1a8] sm:$0xff]
        %v2315 = vld [vmem:[%s3 + $0x1b0] sm:$0xff]
        %v2316 = vld [vmem:[%s3 + $0x1b8] sm:$0xff]
        %v2317 = vld [vmem:[%s3 + $0x1c0] sm:$0xff]
        %v2318 = vld [vmem:[%s3 + $0x1c8] sm:$0xff]
        %v2319 = vld [vmem:[%s3 + $0x1d0] sm:$0xff]
        %v2320 = vld [vmem:[%s3 + $0x1d8] sm:$0xff]
        %v2321 = vld [vmem:[%s3 + $0x1e0] sm:$0xff]
        %v2322 = vld [vmem:[%s3 + $0x1e8] sm:$0xff]
        %v2323 = vld [vmem:[%s3 + $0x1f0] sm:$0xff]
        %v2324 = vld [vmem:[%s3 + $0x1f8] sm:$0xff]
        %v2325 = vld [vmem:[%s3 + $0x200] sm:$0xff]
        %v2326 = vld [vmem:[%s3 + $0x208] sm:$0xff]
        %v2327 = vld [vmem:[%s3 + $0x210] sm:$0xff]
        %v2328 = vld [vmem:[%s3 + $0x218] sm:$0xff]
        %v2329 = vld [vmem:[%s3 + $0x220] sm:$0xff]
        %v2330 = vld [vmem:[%s3 + $0x228] sm:$0xff]
        %v2331 = vld [vmem:[%s3 + $0x230] sm:$0xff]
        %v2332 = vld [vmem:[%s3 + $0x238] sm:$0xff]
        %v2333 = vld [vmem:[%s3 + $0x240] sm:$0xff]
        %v2334 = vld [vmem:[%s3 + $0x248] sm:$0xff]
        %v2335 = vld [vmem:[%s3 + $0x250] sm:$0xff]
        %v2336 = vld [vmem:[%s3 + $0x258] sm:$0xff]
        %v2337 = vld [vmem:[%s3 + $0x260] sm:$0xff]
        %v2338 = vld [vmem:[%s3 + $0x268] sm:$0xff]
        %v2339 = vld [vmem:[%s3 + $0x270] sm:$0xff]
        %v2340 = vld [vmem:[%s3 + $0x278] sm:$0xff]
        %v2341 = vld [vmem:[%s3 + $0x280] sm:$0xff]
        %v2342 = vld [vmem:[%s3 + $0x288] sm:$0xff]
        %v2343 = vld [vmem:[%s3 + $0x290] sm:$0xff]
        %v2344 = vld [vmem:[%s3 + $0x298] sm:$0xff]
        %v2345 = vld [vmem:[%s3 + $0x2a0] sm:$0xff]
        %v2346 = vld [vmem:[%s3 + $0x2a8] sm:$0xff]
        %v2347 = vld [vmem:[%s3 + $0x2b0] sm:$0xff]
        %v2348 = vld [vmem:[%s3 + $0x2b8] sm:$0xff]
        %v2349 = vld [vmem:[%s3 + $0x2c0] sm:$0xff]
        %v2350 = vld [vmem:[%s3 + $0x2c8] sm:$0xff]
        %v2351 = vld [vmem:[%s3 + $0x2d0] sm:$0xff]
        %v2352 = vld [vmem:[%s3 + $0x2d8] sm:$0xff]
        %v2353 = vld [vmem:[%s3 + $0x2e0] sm:$0xff]
        %v2354 = vld [vmem:[%s3 + $0x2e8] sm:$0xff]
        %v2355 = vld [vmem:[%s3 + $0x2f0] sm:$0xff]
        %v2356 = vld [vmem:[%s3 + $0x2f8] sm:$0xff]
        %v2357 = vld [vmem:[%s3 + $0x300] sm:$0xff]
        %v2358 = vld [vmem:[%s3 + $0x308] sm:$0xff]
        %v2359 = vld [vmem:[%s3 + $0x310] sm:$0xff]
        %v2360 = vld [vmem:[%s3 + $0x318] sm:$0xff]
        %v2361 = vld [vmem:[%s3 + $0x320] sm:$0xff]
        %v2362 = vld [vmem:[%s3 + $0x328] sm:$0xff]
        %v2363 = vld [vmem:[%s3 + $0x330] sm:$0xff]
        %v2364 = vld [vmem:[%s3 + $0x338] sm:$0xff]
        %v2365 = vld [vmem:[%s3 + $0x340] sm:$0xff]
        %v2366 = vld [vmem:[%s3 + $0x348] sm:$0xff]
        %v2367 = vld [vmem:[%s3 + $0x350] sm:$0xff]
        %v2368 = vld [vmem:[%s3 + $0x358] sm:$0xff]
        %v2369 = vld [vmem:[%s3 + $0x360] sm:$0xff]
        %v2370 = vld [vmem:[%s3 + $0x368] sm:$0xff]
        %v2371 = vld [vmem:[%s3 + $0x370] sm:$0xff]
        %v2372 = vld [vmem:[%s3 + $0x378] sm:$0xff]
        %v2373 = vld [vmem:[%s3 + $0x380] sm:$0xff]
        %v2374 = vld [vmem:[%s3 + $0x388] sm:$0xff]
        %v2375 = vld [vmem:[%s3 + $0x390] sm:$0xff]
        %v2376 = vld [vmem:[%s3 + $0x398] sm:$0xff]
        %v2377 = vld [vmem:[%s3 + $0x3a0] sm:$0xff]
        %v2378 = vld [vmem:[%s3 + $0x3a8] sm:$0xff]
        %v2379 = vld [vmem:[%s3 + $0x3b0] sm:$0xff]
        %v2380 = vld [vmem:[%s3 + $0x3b8] sm:$0xff]
        %v2381 = vld [vmem:[%s3 + $0x3c0] sm:$0xff]
        %v2382 = vld [vmem:[%s3 + $0x3c8] sm:$0xff]
        %v2383 = vld [vmem:[%s3 + $0x3d0] sm:$0xff]
        %v2384 = vld [vmem:[%s3 + $0x3d8] sm:$0xff]
        %v2385 = vld [vmem:[%s3 + $0x3e0] sm:$0xff]
        %v2386 = vld [vmem:[%s3 + $0x3e8] sm:$0xff]
        %v2387 = vld [vmem:[%s3 + $0x3f0] sm:$0xff]
        %v2388 = vld [vmem:[%s3 + $0x3f8] sm:$0xff]
        %v2389 = vld [vmem:[%s3 + $0x400] sm:$0xff]
        %v2390 = vld [vmem:[%s3 + $0x408] sm:$0xff]
        %v2391 = vld [vmem:[%s3 + $0x410] sm:$0xff]
        %v2392 = vld [vmem:[%s3 + $0x418] sm:$0xff]
        %v2393 = vld [vmem:[%s3 + $0x420] sm:$0xff]
        %v2394 = vld [vmem:[%s3 + $0x428] sm:$0xff]
        %v2395 = vld [vmem:[%s3 + $0x430] sm:$0xff]
        %v2396 = vld [vmem:[%s3 + $0x438] sm:$0xff]
        %v2397 = vld [vmem:[%s3 + $0x440] sm:$0xff]
        %v2398 = vld [vmem:[%s3 + $0x448] sm:$0xff]
        %v2399 = vld [vmem:[%s3 + $0x450] sm:$0xff]
        %v2400 = vld [vmem:[%s3 + $0x458] sm:$0xff]
        %v2401 = vld [vmem:[%s3 + $0x460] sm:$0xff]
        %v2402 = vld [vmem:[%s3 + $0x468] sm:$0xff]
        %v2403 = vld [vmem:[%s3 + $0x470] sm:$0xff]
        %v2404 = vld [vmem:[%s3 + $0x478] sm:$0xff]
        %v2405 = vld [vmem:[%s3 + $0x480] sm:$0xff]
        %v2406 = vld [vmem:[%s3 + $0x488] sm:$0xff]
        %v2407 = vld [vmem:[%s3 + $0x490] sm:$0xff]
        %v2408 = vld [vmem:[%s3 + $0x498] sm:$0xff]
        %v2409 = vld [vmem:[%s3 + $0x4a0] sm:$0xff]
        %v2410 = vld [vmem:[%s3 + $0x4a8] sm:$0xff]
        %v2411 = vld [vmem:[%s3 + $0x4b0] sm:$0xff]
        %v2412 = vld [vmem:[%s3 + $0x4b8] sm:$0xff]
        %v2413 = vld [vmem:[%s3 + $0x4c0] sm:$0xff]
        %v2414 = vld [vmem:[%s3 + $0x4c8] sm:$0xff]
        %v2415 = vld [vmem:[%s3 + $0x4d0] sm:$0xff]
        %v2416 = vld [vmem:[%s3 + $0x4d8] sm:$0xff]
        %v2417 = vld [vmem:[%s3 + $0x4e0] sm:$0xff]
        %v2418 = vld [vmem:[%s3 + $0x4e8] sm:$0xff]
        %v2419 = vld [vmem:[%s3 + $0x4f0] sm:$0xff]
        %v2420 = vld [vmem:[%s3 + $0x4f8] sm:$0xff]
        %v2421 = vld [vmem:[%s3 + $0x500] sm:$0xff]
        %v2422 = vld [vmem:[%s3 + $0x508] sm:$0xff]
        %v2423 = vld [vmem:[%s3 + $0x510] sm:$0xff]
        %v2424 = vld [vmem:[%s3 + $0x518] sm:$0xff]
        %v2425 = vld [vmem:[%s3 + $0x520] sm:$0xff]
        %v2426 = vld [vmem:[%s3 + $0x528] sm:$0xff]
        %v2427 = vld [vmem:[%s3 + $0x530] sm:$0xff]
        %v2428 = vld [vmem:[%s3 + $0x538] sm:$0xff]
        %v2429 = vld [vmem:[%s3 + $0x540] sm:$0xff]
        %v2430 = vld [vmem:[%s3 + $0x548] sm:$0xff]
        %v2431 = vld [vmem:[%s3 + $0x550] sm:$0xff]
        %v2432 = vld [vmem:[%s3 + $0x558] sm:$0xff]
        %v2433 = vld [vmem:[%s3 + $0x560] sm:$0xff]
        %v2434 = vld [vmem:[%s3 + $0x568] sm:$0xff]
        %v2435 = vld [vmem:[%s3 + $0x570] sm:$0xff]
        %v2436 = vld [vmem:[%s3 + $0x578] sm:$0xff]
        %v2437 = vld [vmem:[%s3 + $0x580] sm:$0xff]
        %v2438 = vld [vmem:[%s3 + $0x588] sm:$0xff]
        %v2439 = vld [vmem:[%s3 + $0x590] sm:$0xff]
        %v2440 = vld [vmem:[%s3 + $0x598] sm:$0xff]
        %v2441 = vld [vmem:[%s3 + $0x5a0] sm:$0xff]
        %v2442 = vld [vmem:[%s3 + $0x5a8] sm:$0xff]
        %v2443 = vld [vmem:[%s3 + $0x5b0] sm:$0xff]
        %v2444 = vld [vmem:[%s3 + $0x5b8] sm:$0xff]
        %v2445 = vld [vmem:[%s3 + $0x5c0] sm:$0xff]
        %v2446 = vld [vmem:[%s3 + $0x5c8] sm:$0xff]
        %v2447 = vld [vmem:[%s3 + $0x5d0] sm:$0xff]
        %v2448 = vld [vmem:[%s3 + $0x5d8] sm:$0xff]
        %v2449 = vld [vmem:[%s3 + $0x5e0] sm:$0xff]
        %v2450 = vld [vmem:[%s3 + $0x5e8] sm:$0xff]
        %v2451 = vld [vmem:[%s3 + $0x5f0] sm:$0xff]
        %v2452 = vld [vmem:[%s3 + $0x5f8] sm:$0xff]
        %v2453 = vld [vmem:[%s3 + $0x600] sm:$0xff]
        %v2454 = vld [vmem:[%s3 + $0x608] sm:$0xff]
        %v2455 = vld [vmem:[%s3 + $0x610] sm:$0xff]
        %v2456 = vld [vmem:[%s3 + $0x618] sm:$0xff]
        %v2457 = vld [vmem:[%s3 + $0x620] sm:$0xff]
        %v2458 = vld [vmem:[%s3 + $0x628] sm:$0xff]
        %v2459 = vld [vmem:[%s3 + $0x630] sm:$0xff]
        %v2460 = vld [vmem:[%s3 + $0x638] sm:$0xff]
        %v2461 = vld [vmem:[%s3 + $0x640] sm:$0xff]
        %v2462 = vld [vmem:[%s3 + $0x648] sm:$0xff]
        %v2463 = vld [vmem:[%s3 + $0x650] sm:$0xff]
        %v2464 = vld [vmem:[%s3 + $0x658] sm:$0xff]
        %v2465 = vld [vmem:[%s3 + $0x660] sm:$0xff]
        %v2466 = vld [vmem:[%s3 + $0x668] sm:$0xff]
        %v2467 = vld [vmem:[%s3 + $0x670] sm:$0xff]
        %v2468 = vld [vmem:[%s3 + $0x678] sm:$0xff]
        %v2469 = vld [vmem:[%s3 + $0x680] sm:$0xff]
        %v2470 = vld [vmem:[%s3 + $0x688] sm:$0xff]
        %v2471 = vld [vmem:[%s3 + $0x690] sm:$0xff]
        %v2472 = vld [vmem:[%s3 + $0x698] sm:$0xff]
        %v2473 = vld [vmem:[%s3 + $0x6a0] sm:$0xff]
        %v2474 = vld [vmem:[%s3 + $0x6a8] sm:$0xff]
        %v2475 = vld [vmem:[%s3 + $0x6b0] sm:$0xff]
        %v2476 = vld [vmem:[%s3 + $0x6b8] sm:$0xff]
        %v2477 = vld [vmem:[%s3 + $0x6c0] sm:$0xff]
        %v2478 = vld [vmem:[%s3 + $0x6c8] sm:$0xff]
        %v2479 = vld [vmem:[%s3 + $0x6d0] sm:$0xff]
        %v2480 = vld [vmem:[%s3 + $0x6d8] sm:$0xff]
        %v2481 = vld [vmem:[%s3 + $0x6e0] sm:$0xff]
        %v2482 = vld [vmem:[%s3 + $0x6e8] sm:$0xff]
        %v2483 = vld [vmem:[%s3 + $0x6f0] sm:$0xff]
        %v2484 = vld [vmem:[%s3 + $0x6f8] sm:$0xff]
        %v2485 = vld [vmem:[%s3 + $0x700] sm:$0xff]
        %v2486 = vld [vmem:[%s3 + $0x708] sm:$0xff]
        %v2487 = vld [vmem:[%s3 + $0x710] sm:$0xff]
        %v2488 = vld [vmem:[%s3 + $0x718] sm:$0xff]
        %v2489 = vld [vmem:[%s3 + $0x720] sm:$0xff]
        %v2490 = vld [vmem:[%s3 + $0x728] sm:$0xff]
        %v2491 = vld [vmem:[%s3 + $0x730] sm:$0xff]
        %v2492 = vld [vmem:[%s3 + $0x738] sm:$0xff]
        %v2493 = vld [vmem:[%s3 + $0x740] sm:$0xff]
        %v2494 = vld [vmem:[%s3 + $0x748] sm:$0xff]
        %v2495 = vld [vmem:[%s3 + $0x750] sm:$0xff]
        %v2496 = vld [vmem:[%s3 + $0x758] sm:$0xff]
        %v2497 = vld [vmem:[%s3 + $0x760] sm:$0xff]
        %v2498 = vld [vmem:[%s3 + $0x768] sm:$0xff]
        %v2499 = vld [vmem:[%s3 + $0x770] sm:$0xff]
        %v2500 = vld [vmem:[%s3 + $0x778] sm:$0xff]
        %v2501 = vld [vmem:[%s3 + $0x780] sm:$0xff]
        %v2502 = vld [vmem:[%s3 + $0x788] sm:$0xff]
        %v2503 = vld [vmem:[%s3 + $0x790] sm:$0xff]
        %v2504 = vld [vmem:[%s3 + $0x798] sm:$0xff]
        %v2505 = vld [vmem:[%s3 + $0x7a0] sm:$0xff]
        %v2506 = vld [vmem:[%s3 + $0x7a8] sm:$0xff]
        %v2507 = vld [vmem:[%s3 + $0x7b0] sm:$0xff]
        %v2508 = vld [vmem:[%s3 + $0x7b8] sm:$0xff]
        %v2509 = vld [vmem:[%s3 + $0x7c0] sm:$0xff]
        %v2510 = vld [vmem:[%s3 + $0x7c8] sm:$0xff]
        %v2511 = vld [vmem:[%s3 + $0x7d0] sm:$0xff]
        %v2512 = vld [vmem:[%s3 + $0x7d8] sm:$0xff]
        %v2513 = vld [vmem:[%s3 + $0x7e0] sm:$0xff]
        %v2514 = vld [vmem:[%s3 + $0x7e8] sm:$0xff]
        %v2515 = vld [vmem:[%s3 + $0x7f0] sm:$0xff]
        %v2516 = vld [vmem:[%s3 + $0x7f8] sm:$0xff]
        %v2517 = vld [vmem:[%s4] sm:$0xf]
        %v2519 = vperm.slane %v2517, 0
        %v2520 = vperm.slane %v2517, 1
        %v2521 = vperm.slane %v2517, 2
        %v2522 = vperm.slane %v2517, 3
        %v2783 = vunpack.c.l.b16 %v2261
        %v2784 = vunpack.c.h.b16 %v2261
        %v2785 = vunpack.c.l.b16 %v2262
        %v2786 = vunpack.c.h.b16 %v2262
        %v2787 = vunpack.c.l.b16 %v2263
        %v2788 = vunpack.c.h.b16 %v2263
        %v2789 = vunpack.c.l.b16 %v2264
        %v2790 = vunpack.c.h.b16 %v2264
        %v2791 = vunpack.c.l.b16 %v2265
        %v2792 = vunpack.c.h.b16 %v2265
        %v2793 = vunpack.c.l.b16 %v2266
        %v2794 = vunpack.c.h.b16 %v2266
        %v2795 = vunpack.c.l.b16 %v2267
        %v2796 = vunpack.c.h.b16 %v2267
        %v2797 = vunpack.c.l.b16 %v2268
        %v2798 = vunpack.c.h.b16 %v2268
        %v2799 = vunpack.c.l.b16 %v2269
        %v2800 = vunpack.c.h.b16 %v2269
        %v2801 = vunpack.c.l.b16 %v2270
        %v2802 = vunpack.c.h.b16 %v2270
        %v2803 = vunpack.c.l.b16 %v2271
        %v2804 = vunpack.c.h.b16 %v2271
        %v2805 = vunpack.c.l.b16 %v2272
        %v2806 = vunpack.c.h.b16 %v2272
        %v2807 = vunpack.c.l.b16 %v2273
        %v2808 = vunpack.c.h.b16 %v2273
        %v2809 = vunpack.c.l.b16 %v2274
        %v2810 = vunpack.c.h.b16 %v2274
        %v2811 = vunpack.c.l.b16 %v2275
        %v2812 = vunpack.c.h.b16 %v2275
        %v2813 = vunpack.c.l.b16 %v2276
        %v2814 = vunpack.c.h.b16 %v2276
        %v2815 = vunpack.c.l.b16 %v2277
        %v2816 = vunpack.c.h.b16 %v2277
        %v2817 = vunpack.c.l.b16 %v2278
        %v2818 = vunpack.c.h.b16 %v2278
        %v2819 = vunpack.c.l.b16 %v2279
        %v2820 = vunpack.c.h.b16 %v2279
        %v2821 = vunpack.c.l.b16 %v2280
        %v2822 = vunpack.c.h.b16 %v2280
        %v2823 = vunpack.c.l.b16 %v2281
        %v2824 = vunpack.c.h.b16 %v2281
        %v2825 = vunpack.c.l.b16 %v2282
        %v2826 = vunpack.c.h.b16 %v2282
        %v2827 = vunpack.c.l.b16 %v2283
        %v2828 = vunpack.c.h.b16 %v2283
        %v2829 = vunpack.c.l.b16 %v2284
        %v2830 = vunpack.c.h.b16 %v2284
        %v2831 = vunpack.c.l.b16 %v2285
        %v2832 = vunpack.c.h.b16 %v2285
        %v2833 = vunpack.c.l.b16 %v2286
        %v2834 = vunpack.c.h.b16 %v2286
        %v2835 = vunpack.c.l.b16 %v2287
        %v2836 = vunpack.c.h.b16 %v2287
        %v2837 = vunpack.c.l.b16 %v2288
        %v2838 = vunpack.c.h.b16 %v2288
        %v2839 = vunpack.c.l.b16 %v2289
        %v2840 = vunpack.c.h.b16 %v2289
        %v2841 = vunpack.c.l.b16 %v2290
        %v2842 = vunpack.c.h.b16 %v2290
        %v2843 = vunpack.c.l.b16 %v2291
        %v2844 = vunpack.c.h.b16 %v2291
        %v2845 = vunpack.c.l.b16 %v2292
        %v2846 = vunpack.c.h.b16 %v2292
        %v2847 = vunpack.c.l.b16 %v2293
        %v2848 = vunpack.c.h.b16 %v2293
        %v2849 = vunpack.c.l.b16 %v2294
        %v2850 = vunpack.c.h.b16 %v2294
        %v2851 = vunpack.c.l.b16 %v2295
        %v2852 = vunpack.c.h.b16 %v2295
        %v2853 = vunpack.c.l.b16 %v2296
        %v2854 = vunpack.c.h.b16 %v2296
        %v2855 = vunpack.c.l.b16 %v2297
        %v2856 = vunpack.c.h.b16 %v2297
        %v2857 = vunpack.c.l.b16 %v2298
        %v2858 = vunpack.c.h.b16 %v2298
        %v2859 = vunpack.c.l.b16 %v2299
        %v2860 = vunpack.c.h.b16 %v2299
        %v2861 = vunpack.c.l.b16 %v2300
        %v2862 = vunpack.c.h.b16 %v2300
        %v2863 = vunpack.c.l.b16 %v2301
        %v2864 = vunpack.c.h.b16 %v2301
        %v2865 = vunpack.c.l.b16 %v2302
        %v2866 = vunpack.c.h.b16 %v2302
        %v2867 = vunpack.c.l.b16 %v2303
        %v2868 = vunpack.c.h.b16 %v2303
        %v2869 = vunpack.c.l.b16 %v2304
        %v2870 = vunpack.c.h.b16 %v2304
        %v2871 = vunpack.c.l.b16 %v2305
        %v2872 = vunpack.c.h.b16 %v2305
        %v2873 = vunpack.c.l.b16 %v2306
        %v2874 = vunpack.c.h.b16 %v2306
        %v2875 = vunpack.c.l.b16 %v2307
        %v2876 = vunpack.c.h.b16 %v2307
        %v2877 = vunpack.c.l.b16 %v2308
        %v2878 = vunpack.c.h.b16 %v2308
        %v2879 = vunpack.c.l.b16 %v2309
        %v2880 = vunpack.c.h.b16 %v2309
        %v2881 = vunpack.c.l.b16 %v2310
        %v2882 = vunpack.c.h.b16 %v2310
        %v2883 = vunpack.c.l.b16 %v2311
        %v2884 = vunpack.c.h.b16 %v2311
        %v2885 = vunpack.c.l.b16 %v2312
        %v2886 = vunpack.c.h.b16 %v2312
        %v2887 = vunpack.c.l.b16 %v2313
        %v2888 = vunpack.c.h.b16 %v2313
        %v2889 = vunpack.c.l.b16 %v2314
        %v2890 = vunpack.c.h.b16 %v2314
        %v2891 = vunpack.c.l.b16 %v2315
        %v2892 = vunpack.c.h.b16 %v2315
        %v2893 = vunpack.c.l.b16 %v2316
        %v2894 = vunpack.c.h.b16 %v2316
        %v2895 = vunpack.c.l.b16 %v2317
        %v2896 = vunpack.c.h.b16 %v2317
        %v2897 = vunpack.c.l.b16 %v2318
        %v2898 = vunpack.c.h.b16 %v2318
        %v2899 = vunpack.c.l.b16 %v2319
        %v2900 = vunpack.c.h.b16 %v2319
        %v2901 = vunpack.c.l.b16 %v2320
        %v2902 = vunpack.c.h.b16 %v2320
        %v2903 = vunpack.c.l.b16 %v2321
        %v2904 = vunpack.c.h.b16 %v2321
        %v2905 = vunpack.c.l.b16 %v2322
        %v2906 = vunpack.c.h.b16 %v2322
        %v2907 = vunpack.c.l.b16 %v2323
        %v2908 = vunpack.c.h.b16 %v2323
        %v2909 = vunpack.c.l.b16 %v2324
        %v2910 = vunpack.c.h.b16 %v2324
        %v2911 = vunpack.c.l.b16 %v2325
        %v2912 = vunpack.c.h.b16 %v2325
        %v2913 = vunpack.c.l.b16 %v2326
        %v2914 = vunpack.c.h.b16 %v2326
        %v2915 = vunpack.c.l.b16 %v2327
        %v2916 = vunpack.c.h.b16 %v2327
        %v2917 = vunpack.c.l.b16 %v2328
        %v2918 = vunpack.c.h.b16 %v2328
        %v2919 = vunpack.c.l.b16 %v2329
        %v2920 = vunpack.c.h.b16 %v2329
        %v2921 = vunpack.c.l.b16 %v2330
        %v2922 = vunpack.c.h.b16 %v2330
        %v2923 = vunpack.c.l.b16 %v2331
        %v2924 = vunpack.c.h.b16 %v2331
        %v2925 = vunpack.c.l.b16 %v2332
        %v2926 = vunpack.c.h.b16 %v2332
        %v2927 = vunpack.c.l.b16 %v2333
        %v2928 = vunpack.c.h.b16 %v2333
        %v2929 = vunpack.c.l.b16 %v2334
        %v2930 = vunpack.c.h.b16 %v2334
        %v2931 = vunpack.c.l.b16 %v2335
        %v2932 = vunpack.c.h.b16 %v2335
        %v2933 = vunpack.c.l.b16 %v2336
        %v2934 = vunpack.c.h.b16 %v2336
        %v2935 = vunpack.c.l.b16 %v2337
        %v2936 = vunpack.c.h.b16 %v2337
        %v2937 = vunpack.c.l.b16 %v2338
        %v2938 = vunpack.c.h.b16 %v2338
        %v2939 = vunpack.c.l.b16 %v2339
        %v2940 = vunpack.c.h.b16 %v2339
        %v2941 = vunpack.c.l.b16 %v2340
        %v2942 = vunpack.c.h.b16 %v2340
        %v2943 = vunpack.c.l.b16 %v2341
        %v2944 = vunpack.c.h.b16 %v2341
        %v2945 = vunpack.c.l.b16 %v2342
        %v2946 = vunpack.c.h.b16 %v2342
        %v2947 = vunpack.c.l.b16 %v2343
        %v2948 = vunpack.c.h.b16 %v2343
        %v2949 = vunpack.c.l.b16 %v2344
        %v2950 = vunpack.c.h.b16 %v2344
        %v2951 = vunpack.c.l.b16 %v2345
        %v2952 = vunpack.c.h.b16 %v2345
        %v2953 = vunpack.c.l.b16 %v2346
        %v2954 = vunpack.c.h.b16 %v2346
        %v2955 = vunpack.c.l.b16 %v2347
        %v2956 = vunpack.c.h.b16 %v2347
        %v2957 = vunpack.c.l.b16 %v2348
        %v2958 = vunpack.c.h.b16 %v2348
        %v2959 = vunpack.c.l.b16 %v2349
        %v2960 = vunpack.c.h.b16 %v2349
        %v2961 = vunpack.c.l.b16 %v2350
        %v2962 = vunpack.c.h.b16 %v2350
        %v2963 = vunpack.c.l.b16 %v2351
        %v2964 = vunpack.c.h.b16 %v2351
        %v2965 = vunpack.c.l.b16 %v2352
        %v2966 = vunpack.c.h.b16 %v2352
        %v2967 = vunpack.c.l.b16 %v2353
        %v2968 = vunpack.c.h.b16 %v2353
        %v2969 = vunpack.c.l.b16 %v2354
        %v2970 = vunpack.c.h.b16 %v2354
        %v2971 = vunpack.c.l.b16 %v2355
        %v2972 = vunpack.c.h.b16 %v2355
        %v2973 = vunpack.c.l.b16 %v2356
        %v2974 = vunpack.c.h.b16 %v2356
        %v2975 = vunpack.c.l.b16 %v2357
        %v2976 = vunpack.c.h.b16 %v2357
        %v2977 = vunpack.c.l.b16 %v2358
        %v2978 = vunpack.c.h.b16 %v2358
        %v2979 = vunpack.c.l.b16 %v2359
        %v2980 = vunpack.c.h.b16 %v2359
        %v2981 = vunpack.c.l.b16 %v2360
        %v2982 = vunpack.c.h.b16 %v2360
        %v2983 = vunpack.c.l.b16 %v2361
        %v2984 = vunpack.c.h.b16 %v2361
        %v2985 = vunpack.c.l.b16 %v2362
        %v2986 = vunpack.c.h.b16 %v2362
        %v2987 = vunpack.c.l.b16 %v2363
        %v2988 = vunpack.c.h.b16 %v2363
        %v2989 = vunpack.c.l.b16 %v2364
        %v2990 = vunpack.c.h.b16 %v2364
        %v2991 = vunpack.c.l.b16 %v2365
        %v2992 = vunpack.c.h.b16 %v2365
        %v2993 = vunpack.c.l.b16 %v2366
        %v2994 = vunpack.c.h.b16 %v2366
        %v2995 = vunpack.c.l.b16 %v2367
        %v2996 = vunpack.c.h.b16 %v2367
        %v2997 = vunpack.c.l.b16 %v2368
        %v2998 = vunpack.c.h.b16 %v2368
        %v2999 = vunpack.c.l.b16 %v2369
        %v3000 = vunpack.c.h.b16 %v2369
        %v3001 = vunpack.c.l.b16 %v2370
        %v3002 = vunpack.c.h.b16 %v2370
        %v3003 = vunpack.c.l.b16 %v2371
        %v3004 = vunpack.c.h.b16 %v2371
        %v3005 = vunpack.c.l.b16 %v2372
        %v3006 = vunpack.c.h.b16 %v2372
        %v3007 = vunpack.c.l.b16 %v2373
        %v3008 = vunpack.c.h.b16 %v2373
        %v3009 = vunpack.c.l.b16 %v2374
        %v3010 = vunpack.c.h.b16 %v2374
        %v3011 = vunpack.c.l.b16 %v2375
        %v3012 = vunpack.c.h.b16 %v2375
        %v3013 = vunpack.c.l.b16 %v2376
        %v3014 = vunpack.c.h.b16 %v2376
        %v3015 = vunpack.c.l.b16 %v2377
        %v3016 = vunpack.c.h.b16 %v2377
        %v3017 = vunpack.c.l.b16 %v2378
        %v3018 = vunpack.c.h.b16 %v2378
        %v3019 = vunpack.c.l.b16 %v2379
        %v3020 = vunpack.c.h.b16 %v2379
        %v3021 = vunpack.c.l.b16 %v2380
        %v3022 = vunpack.c.h.b16 %v2380
        %v3023 = vunpack.c.l.b16 %v2381
        %v3024 = vunpack.c.h.b16 %v2381
        %v3025 = vunpack.c.l.b16 %v2382
        %v3026 = vunpack.c.h.b16 %v2382
        %v3027 = vunpack.c.l.b16 %v2383
        %v3028 = vunpack.c.h.b16 %v2383
        %v3029 = vunpack.c.l.b16 %v2384
        %v3030 = vunpack.c.h.b16 %v2384
        %v3031 = vunpack.c.l.b16 %v2385
        %v3032 = vunpack.c.h.b16 %v2385
        %v3033 = vunpack.c.l.b16 %v2386
        %v3034 = vunpack.c.h.b16 %v2386
        %v3035 = vunpack.c.l.b16 %v2387
        %v3036 = vunpack.c.h.b16 %v2387
        %v3037 = vunpack.c.l.b16 %v2388
        %v3038 = vunpack.c.h.b16 %v2388
        %v3039 = vunpack.c.l.b16 %v2389
        %v3040 = vunpack.c.h.b16 %v2389
        %v3041 = vunpack.c.l.b16 %v2390
        %v3042 = vunpack.c.h.b16 %v2390
        %v3043 = vunpack.c.l.b16 %v2391
        %v3044 = vunpack.c.h.b16 %v2391
        %v3045 = vunpack.c.l.b16 %v2392
        %v3046 = vunpack.c.h.b16 %v2392
        %v3047 = vunpack.c.l.b16 %v2393
        %v3048 = vunpack.c.h.b16 %v2393
        %v3049 = vunpack.c.l.b16 %v2394
        %v3050 = vunpack.c.h.b16 %v2394
        %v3051 = vunpack.c.l.b16 %v2395
        %v3052 = vunpack.c.h.b16 %v2395
        %v3053 = vunpack.c.l.b16 %v2396
        %v3054 = vunpack.c.h.b16 %v2396
        %v3055 = vunpack.c.l.b16 %v2397
        %v3056 = vunpack.c.h.b16 %v2397
        %v3057 = vunpack.c.l.b16 %v2398
        %v3058 = vunpack.c.h.b16 %v2398
        %v3059 = vunpack.c.l.b16 %v2399
        %v3060 = vunpack.c.h.b16 %v2399
        %v3061 = vunpack.c.l.b16 %v2400
        %v3062 = vunpack.c.h.b16 %v2400
        %v3063 = vunpack.c.l.b16 %v2401
        %v3064 = vunpack.c.h.b16 %v2401
        %v3065 = vunpack.c.l.b16 %v2402
        %v3066 = vunpack.c.h.b16 %v2402
        %v3067 = vunpack.c.l.b16 %v2403
        %v3068 = vunpack.c.h.b16 %v2403
        %v3069 = vunpack.c.l.b16 %v2404
        %v3070 = vunpack.c.h.b16 %v2404
        %v3071 = vunpack.c.l.b16 %v2405
        %v3072 = vunpack.c.h.b16 %v2405
        %v3073 = vunpack.c.l.b16 %v2406
        %v3074 = vunpack.c.h.b16 %v2406
        %v3075 = vunpack.c.l.b16 %v2407
        %v3076 = vunpack.c.h.b16 %v2407
        %v3077 = vunpack.c.l.b16 %v2408
        %v3078 = vunpack.c.h.b16 %v2408
        %v3079 = vunpack.c.l.b16 %v2409
        %v3080 = vunpack.c.h.b16 %v2409
        %v3081 = vunpack.c.l.b16 %v2410
        %v3082 = vunpack.c.h.b16 %v2410
        %v3083 = vunpack.c.l.b16 %v2411
        %v3084 = vunpack.c.h.b16 %v2411
        %v3085 = vunpack.c.l.b16 %v2412
        %v3086 = vunpack.c.h.b16 %v2412
        %v3087 = vunpack.c.l.b16 %v2413
        %v3088 = vunpack.c.h.b16 %v2413
        %v3089 = vunpack.c.l.b16 %v2414
        %v3090 = vunpack.c.h.b16 %v2414
        %v3091 = vunpack.c.l.b16 %v2415
        %v3092 = vunpack.c.h.b16 %v2415
        %v3093 = vunpack.c.l.b16 %v2416
        %v3094 = vunpack.c.h.b16 %v2416
        %v3095 = vunpack.c.l.b16 %v2417
        %v3096 = vunpack.c.h.b16 %v2417
        %v3097 = vunpack.c.l.b16 %v2418
        %v3098 = vunpack.c.h.b16 %v2418
        %v3099 = vunpack.c.l.b16 %v2419
        %v3100 = vunpack.c.h.b16 %v2419
        %v3101 = vunpack.c.l.b16 %v2420
        %v3102 = vunpack.c.h.b16 %v2420
        %v3103 = vunpack.c.l.b16 %v2421
        %v3104 = vunpack.c.h.b16 %v2421
        %v3105 = vunpack.c.l.b16 %v2422
        %v3106 = vunpack.c.h.b16 %v2422
        %v3107 = vunpack.c.l.b16 %v2423
        %v3108 = vunpack.c.h.b16 %v2423
        %v3109 = vunpack.c.l.b16 %v2424
        %v3110 = vunpack.c.h.b16 %v2424
        %v3111 = vunpack.c.l.b16 %v2425
        %v3112 = vunpack.c.h.b16 %v2425
        %v3113 = vunpack.c.l.b16 %v2426
        %v3114 = vunpack.c.h.b16 %v2426
        %v3115 = vunpack.c.l.b16 %v2427
        %v3116 = vunpack.c.h.b16 %v2427
        %v3117 = vunpack.c.l.b16 %v2428
        %v3118 = vunpack.c.h.b16 %v2428
        %v3119 = vunpack.c.l.b16 %v2429
        %v3120 = vunpack.c.h.b16 %v2429
        %v3121 = vunpack.c.l.b16 %v2430
        %v3122 = vunpack.c.h.b16 %v2430
        %v3123 = vunpack.c.l.b16 %v2431
        %v3124 = vunpack.c.h.b16 %v2431
        %v3125 = vunpack.c.l.b16 %v2432
        %v3126 = vunpack.c.h.b16 %v2432
        %v3127 = vunpack.c.l.b16 %v2433
        %v3128 = vunpack.c.h.b16 %v2433
        %v3129 = vunpack.c.l.b16 %v2434
        %v3130 = vunpack.c.h.b16 %v2434
        %v3131 = vunpack.c.l.b16 %v2435
        %v3132 = vunpack.c.h.b16 %v2435
        %v3133 = vunpack.c.l.b16 %v2436
        %v3134 = vunpack.c.h.b16 %v2436
        %v3135 = vunpack.c.l.b16 %v2437
        %v3136 = vunpack.c.h.b16 %v2437
        %v3137 = vunpack.c.l.b16 %v2438
        %v3138 = vunpack.c.h.b16 %v2438
        %v3139 = vunpack.c.l.b16 %v2439
        %v3140 = vunpack.c.h.b16 %v2439
        %v3141 = vunpack.c.l.b16 %v2440
        %v3142 = vunpack.c.h.b16 %v2440
        %v3143 = vunpack.c.l.b16 %v2441
        %v3144 = vunpack.c.h.b16 %v2441
        %v3145 = vunpack.c.l.b16 %v2442
        %v3146 = vunpack.c.h.b16 %v2442
        %v3147 = vunpack.c.l.b16 %v2443
        %v3148 = vunpack.c.h.b16 %v2443
        %v3149 = vunpack.c.l.b16 %v2444
        %v3150 = vunpack.c.h.b16 %v2444
        %v3151 = vunpack.c.l.b16 %v2445
        %v3152 = vunpack.c.h.b16 %v2445
        %v3153 = vunpack.c.l.b16 %v2446
        %v3154 = vunpack.c.h.b16 %v2446
        %v3155 = vunpack.c.l.b16 %v2447
        %v3156 = vunpack.c.h.b16 %v2447
        %v3157 = vunpack.c.l.b16 %v2448
        %v3158 = vunpack.c.h.b16 %v2448
        %v3159 = vunpack.c.l.b16 %v2449
        %v3160 = vunpack.c.h.b16 %v2449
        %v3161 = vunpack.c.l.b16 %v2450
        %v3162 = vunpack.c.h.b16 %v2450
        %v3163 = vunpack.c.l.b16 %v2451
        %v3164 = vunpack.c.h.b16 %v2451
        %v3165 = vunpack.c.l.b16 %v2452
        %v3166 = vunpack.c.h.b16 %v2452
        %v3167 = vunpack.c.l.b16 %v2453
        %v3168 = vunpack.c.h.b16 %v2453
        %v3169 = vunpack.c.l.b16 %v2454
        %v3170 = vunpack.c.h.b16 %v2454
        %v3171 = vunpack.c.l.b16 %v2455
        %v3172 = vunpack.c.h.b16 %v2455
        %v3173 = vunpack.c.l.b16 %v2456
        %v3174 = vunpack.c.h.b16 %v2456
        %v3175 = vunpack.c.l.b16 %v2457
        %v3176 = vunpack.c.h.b16 %v2457
        %v3177 = vunpack.c.l.b16 %v2458
        %v3178 = vunpack.c.h.b16 %v2458
        %v3179 = vunpack.c.l.b16 %v2459
        %v3180 = vunpack.c.h.b16 %v2459
        %v3181 = vunpack.c.l.b16 %v2460
        %v3182 = vunpack.c.h.b16 %v2460
        %v3183 = vunpack.c.l.b16 %v2461
        %v3184 = vunpack.c.h.b16 %v2461
        %v3185 = vunpack.c.l.b16 %v2462
        %v3186 = vunpack.c.h.b16 %v2462
        %v3187 = vunpack.c.l.b16 %v2463
        %v3188 = vunpack.c.h.b16 %v2463
        %v3189 = vunpack.c.l.b16 %v2464
        %v3190 = vunpack.c.h.b16 %v2464
        %v3191 = vunpack.c.l.b16 %v2465
        %v3192 = vunpack.c.h.b16 %v2465
        %v3193 = vunpack.c.l.b16 %v2466
        %v3194 = vunpack.c.h.b16 %v2466
        %v3195 = vunpack.c.l.b16 %v2467
        %v3196 = vunpack.c.h.b16 %v2467
        %v3197 = vunpack.c.l.b16 %v2468
        %v3198 = vunpack.c.h.b16 %v2468
        %v3199 = vunpack.c.l.b16 %v2469
        %v3200 = vunpack.c.h.b16 %v2469
        %v3201 = vunpack.c.l.b16 %v2470
        %v3202 = vunpack.c.h.b16 %v2470
        %v3203 = vunpack.c.l.b16 %v2471
        %v3204 = vunpack.c.h.b16 %v2471
        %v3205 = vunpack.c.l.b16 %v2472
        %v3206 = vunpack.c.h.b16 %v2472
        %v3207 = vunpack.c.l.b16 %v2473
        %v3208 = vunpack.c.h.b16 %v2473
        %v3209 = vunpack.c.l.b16 %v2474
        %v3210 = vunpack.c.h.b16 %v2474
        %v3211 = vunpack.c.l.b16 %v2475
        %v3212 = vunpack.c.h.b16 %v2475
        %v3213 = vunpack.c.l.b16 %v2476
        %v3214 = vunpack.c.h.b16 %v2476
        %v3215 = vunpack.c.l.b16 %v2477
        %v3216 = vunpack.c.h.b16 %v2477
        %v3217 = vunpack.c.l.b16 %v2478
        %v3218 = vunpack.c.h.b16 %v2478
        %v3219 = vunpack.c.l.b16 %v2479
        %v3220 = vunpack.c.h.b16 %v2479
        %v3221 = vunpack.c.l.b16 %v2480
        %v3222 = vunpack.c.h.b16 %v2480
        %v3223 = vunpack.c.l.b16 %v2481
        %v3224 = vunpack.c.h.b16 %v2481
        %v3225 = vunpack.c.l.b16 %v2482
        %v3226 = vunpack.c.h.b16 %v2482
        %v3227 = vunpack.c.l.b16 %v2483
        %v3228 = vunpack.c.h.b16 %v2483
        %v3229 = vunpack.c.l.b16 %v2484
        %v3230 = vunpack.c.h.b16 %v2484
        %v3231 = vunpack.c.l.b16 %v2485
        %v3232 = vunpack.c.h.b16 %v2485
        %v3233 = vunpack.c.l.b16 %v2486
        %v3234 = vunpack.c.h.b16 %v2486
        %v3235 = vunpack.c.l.b16 %v2487
        %v3236 = vunpack.c.h.b16 %v2487
        %v3237 = vunpack.c.l.b16 %v2488
        %v3238 = vunpack.c.h.b16 %v2488
        %v3239 = vunpack.c.l.b16 %v2489
        %v3240 = vunpack.c.h.b16 %v2489
        %v3241 = vunpack.c.l.b16 %v2490
        %v3242 = vunpack.c.h.b16 %v2490
        %v3243 = vunpack.c.l.b16 %v2491
        %v3244 = vunpack.c.h.b16 %v2491
        %v3245 = vunpack.c.l.b16 %v2492
        %v3246 = vunpack.c.h.b16 %v2492
        %v3247 = vunpack.c.l.b16 %v2493
        %v3248 = vunpack.c.h.b16 %v2493
        %v3249 = vunpack.c.l.b16 %v2494
        %v3250 = vunpack.c.h.b16 %v2494
        %v3251 = vunpack.c.l.b16 %v2495
        %v3252 = vunpack.c.h.b16 %v2495
        %v3253 = vunpack.c.l.b16 %v2496
        %v3254 = vunpack.c.h.b16 %v2496
        %v3255 = vunpack.c.l.b16 %v2497
        %v3256 = vunpack.c.h.b16 %v2497
        %v3257 = vunpack.c.l.b16 %v2498
        %v3258 = vunpack.c.h.b16 %v2498
        %v3259 = vunpack.c.l.b16 %v2499
        %v3260 = vunpack.c.h.b16 %v2499
        %v3261 = vunpack.c.l.b16 %v2500
        %v3262 = vunpack.c.h.b16 %v2500
        %v3263 = vunpack.c.l.b16 %v2501
        %v3264 = vunpack.c.h.b16 %v2501
        %v3265 = vunpack.c.l.b16 %v2502
        %v3266 = vunpack.c.h.b16 %v2502
        %v3267 = vunpack.c.l.b16 %v2503
        %v3268 = vunpack.c.h.b16 %v2503
        %v3269 = vunpack.c.l.b16 %v2504
        %v3270 = vunpack.c.h.b16 %v2504
        %v3271 = vunpack.c.l.b16 %v2505
        %v3272 = vunpack.c.h.b16 %v2505
        %v3273 = vunpack.c.l.b16 %v2506
        %v3274 = vunpack.c.h.b16 %v2506
        %v3275 = vunpack.c.l.b16 %v2507
        %v3276 = vunpack.c.h.b16 %v2507
        %v3277 = vunpack.c.l.b16 %v2508
        %v3278 = vunpack.c.h.b16 %v2508
        %v3279 = vunpack.c.l.b16 %v2509
        %v3280 = vunpack.c.h.b16 %v2509
        %v3281 = vunpack.c.l.b16 %v2510
        %v3282 = vunpack.c.h.b16 %v2510
        %v3283 = vunpack.c.l.b16 %v2511
        %v3284 = vunpack.c.h.b16 %v2511
        %v3285 = vunpack.c.l.b16 %v2512
        %v3286 = vunpack.c.h.b16 %v2512
        %v3287 = vunpack.c.l.b16 %v2513
        %v3288 = vunpack.c.h.b16 %v2513
        %v3289 = vunpack.c.l.b16 %v2514
        %v3290 = vunpack.c.h.b16 %v2514
        %v3291 = vunpack.c.l.b16 %v2515
        %v3292 = vunpack.c.h.b16 %v2515
        %v3293 = vunpack.c.l.b16 %v2516
        %v3294 = vunpack.c.h.b16 %v2516
        %v3295 = vpack.c.b16 %v2787, %v2783
        %v3296 = vpack.c.b16 %v2788, %v2784
        %v3297 = vpack.c.b16 %v2789, %v2785
        %v3298 = vpack.c.b16 %v2790, %v2786
        %v3299 = vpack.c.b16 %v2795, %v2791
        %v3300 = vpack.c.b16 %v2796, %v2792
        %v3301 = vpack.c.b16 %v2797, %v2793
        %v3302 = vpack.c.b16 %v2798, %v2794
        %v3303 = vpack.c.b16 %v2803, %v2799
        %v3304 = vpack.c.b16 %v2804, %v2800
        %v3305 = vpack.c.b16 %v2805, %v2801
        %v3306 = vpack.c.b16 %v2806, %v2802
        %v3307 = vpack.c.b16 %v2811, %v2807
        %v3308 = vpack.c.b16 %v2812, %v2808
        %v3309 = vpack.c.b16 %v2813, %v2809
        %v3310 = vpack.c.b16 %v2814, %v2810
        %v3311 = vpack.c.b16 %v2819, %v2815
        %v3312 = vpack.c.b16 %v2820, %v2816
        %v3313 = vpack.c.b16 %v2821, %v2817
        %v3314 = vpack.c.b16 %v2822, %v2818
        %v3315 = vpack.c.b16 %v2827, %v2823
        %v3316 = vpack.c.b16 %v2828, %v2824
        %v3317 = vpack.c.b16 %v2829, %v2825
        %v3318 = vpack.c.b16 %v2830, %v2826
        %v3319 = vpack.c.b16 %v2835, %v2831
        %v3320 = vpack.c.b16 %v2836, %v2832
        %v3321 = vpack.c.b16 %v2837, %v2833
        %v3322 = vpack.c.b16 %v2838, %v2834
        %v3323 = vpack.c.b16 %v2843, %v2839
        %v3324 = vpack.c.b16 %v2844, %v2840
        %v3325 = vpack.c.b16 %v2845, %v2841
        %v3326 = vpack.c.b16 %v2846, %v2842
        %v3327 = vpack.c.b16 %v2851, %v2847
        %v3328 = vpack.c.b16 %v2852, %v2848
        %v3329 = vpack.c.b16 %v2853, %v2849
        %v3330 = vpack.c.b16 %v2854, %v2850
        %v3331 = vpack.c.b16 %v2859, %v2855
        %v3332 = vpack.c.b16 %v2860, %v2856
        %v3333 = vpack.c.b16 %v2861, %v2857
        %v3334 = vpack.c.b16 %v2862, %v2858
        %v3335 = vpack.c.b16 %v2867, %v2863
        %v3336 = vpack.c.b16 %v2868, %v2864
        %v3337 = vpack.c.b16 %v2869, %v2865
        %v3338 = vpack.c.b16 %v2870, %v2866
        %v3339 = vpack.c.b16 %v2875, %v2871
        %v3340 = vpack.c.b16 %v2876, %v2872
        %v3341 = vpack.c.b16 %v2877, %v2873
        %v3342 = vpack.c.b16 %v2878, %v2874
        %v3343 = vpack.c.b16 %v2883, %v2879
        %v3344 = vpack.c.b16 %v2884, %v2880
        %v3345 = vpack.c.b16 %v2885, %v2881
        %v3346 = vpack.c.b16 %v2886, %v2882
        %v3347 = vpack.c.b16 %v2891, %v2887
        %v3348 = vpack.c.b16 %v2892, %v2888
        %v3349 = vpack.c.b16 %v2893, %v2889
        %v3350 = vpack.c.b16 %v2894, %v2890
        %v3351 = vpack.c.b16 %v2899, %v2895
        %v3352 = vpack.c.b16 %v2900, %v2896
        %v3353 = vpack.c.b16 %v2901, %v2897
        %v3354 = vpack.c.b16 %v2902, %v2898
        %v3355 = vpack.c.b16 %v2907, %v2903
        %v3356 = vpack.c.b16 %v2908, %v2904
        %v3357 = vpack.c.b16 %v2909, %v2905
        %v3358 = vpack.c.b16 %v2910, %v2906
        %v3359 = vpack.c.b16 %v2915, %v2911
        %v3360 = vpack.c.b16 %v2916, %v2912
        %v3361 = vpack.c.b16 %v2917, %v2913
        %v3362 = vpack.c.b16 %v2918, %v2914
        %v3363 = vpack.c.b16 %v2923, %v2919
        %v3364 = vpack.c.b16 %v2924, %v2920
        %v3365 = vpack.c.b16 %v2925, %v2921
        %v3366 = vpack.c.b16 %v2926, %v2922
        %v3367 = vpack.c.b16 %v2931, %v2927
        %v3368 = vpack.c.b16 %v2932, %v2928
        %v3369 = vpack.c.b16 %v2933, %v2929
        %v3370 = vpack.c.b16 %v2934, %v2930
        %v3371 = vpack.c.b16 %v2939, %v2935
        %v3372 = vpack.c.b16 %v2940, %v2936
        %v3373 = vpack.c.b16 %v2941, %v2937
        %v3374 = vpack.c.b16 %v2942, %v2938
        %v3375 = vpack.c.b16 %v2947, %v2943
        %v3376 = vpack.c.b16 %v2948, %v2944
        %v3377 = vpack.c.b16 %v2949, %v2945
        %v3378 = vpack.c.b16 %v2950, %v2946
        %v3379 = vpack.c.b16 %v2955, %v2951
        %v3380 = vpack.c.b16 %v2956, %v2952
        %v3381 = vpack.c.b16 %v2957, %v2953
        %v3382 = vpack.c.b16 %v2958, %v2954
        %v3383 = vpack.c.b16 %v2963, %v2959
        %v3384 = vpack.c.b16 %v2964, %v2960
        %v3385 = vpack.c.b16 %v2965, %v2961
        %v3386 = vpack.c.b16 %v2966, %v2962
        %v3387 = vpack.c.b16 %v2971, %v2967
        %v3388 = vpack.c.b16 %v2972, %v2968
        %v3389 = vpack.c.b16 %v2973, %v2969
        %v3390 = vpack.c.b16 %v2974, %v2970
        %v3391 = vpack.c.b16 %v2979, %v2975
        %v3392 = vpack.c.b16 %v2980, %v2976
        %v3393 = vpack.c.b16 %v2981, %v2977
        %v3394 = vpack.c.b16 %v2982, %v2978
        %v3395 = vpack.c.b16 %v2987, %v2983
        %v3396 = vpack.c.b16 %v2988, %v2984
        %v3397 = vpack.c.b16 %v2989, %v2985
        %v3398 = vpack.c.b16 %v2990, %v2986
        %v3399 = vpack.c.b16 %v2995, %v2991
        %v3400 = vpack.c.b16 %v2996, %v2992
        %v3401 = vpack.c.b16 %v2997, %v2993
        %v3402 = vpack.c.b16 %v2998, %v2994
        %v3403 = vpack.c.b16 %v3003, %v2999
        %v3404 = vpack.c.b16 %v3004, %v3000
        %v3405 = vpack.c.b16 %v3005, %v3001
        %v3406 = vpack.c.b16 %v3006, %v3002
        %v3407 = vpack.c.b16 %v3011, %v3007
        %v3408 = vpack.c.b16 %v3012, %v3008
        %v3409 = vpack.c.b16 %v3013, %v3009
        %v3410 = vpack.c.b16 %v3014, %v3010
        %v3411 = vpack.c.b16 %v3019, %v3015
        %v3412 = vpack.c.b16 %v3020, %v3016
        %v3413 = vpack.c.b16 %v3021, %v3017
        %v3414 = vpack.c.b16 %v3022, %v3018
        %v3415 = vpack.c.b16 %v3027, %v3023
        %v3416 = vpack.c.b16 %v3028, %v3024
        %v3417 = vpack.c.b16 %v3029, %v3025
        %v3418 = vpack.c.b16 %v3030, %v3026
        %v3419 = vpack.c.b16 %v3035, %v3031
        %v3420 = vpack.c.b16 %v3036, %v3032
        %v3421 = vpack.c.b16 %v3037, %v3033
        %v3422 = vpack.c.b16 %v3038, %v3034
        %v3423 = vpack.c.b16 %v3043, %v3039
        %v3424 = vpack.c.b16 %v3044, %v3040
        %v3425 = vpack.c.b16 %v3045, %v3041
        %v3426 = vpack.c.b16 %v3046, %v3042
        %v3427 = vpack.c.b16 %v3051, %v3047
        %v3428 = vpack.c.b16 %v3052, %v3048
        %v3429 = vpack.c.b16 %v3053, %v3049
        %v3430 = vpack.c.b16 %v3054, %v3050
        %v3431 = vpack.c.b16 %v3059, %v3055
        %v3432 = vpack.c.b16 %v3060, %v3056
        %v3433 = vpack.c.b16 %v3061, %v3057
        %v3434 = vpack.c.b16 %v3062, %v3058
        %v3435 = vpack.c.b16 %v3067, %v3063
        %v3436 = vpack.c.b16 %v3068, %v3064
        %v3437 = vpack.c.b16 %v3069, %v3065
        %v3438 = vpack.c.b16 %v3070, %v3066
        %v3439 = vpack.c.b16 %v3075, %v3071
        %v3440 = vpack.c.b16 %v3076, %v3072
        %v3441 = vpack.c.b16 %v3077, %v3073
        %v3442 = vpack.c.b16 %v3078, %v3074
        %v3443 = vpack.c.b16 %v3083, %v3079
        %v3444 = vpack.c.b16 %v3084, %v3080
        %v3445 = vpack.c.b16 %v3085, %v3081
        %v3446 = vpack.c.b16 %v3086, %v3082
        %v3447 = vpack.c.b16 %v3091, %v3087
        %v3448 = vpack.c.b16 %v3092, %v3088
        %v3449 = vpack.c.b16 %v3093, %v3089
        %v3450 = vpack.c.b16 %v3094, %v3090
        %v3451 = vpack.c.b16 %v3099, %v3095
        %v3452 = vpack.c.b16 %v3100, %v3096
        %v3453 = vpack.c.b16 %v3101, %v3097
        %v3454 = vpack.c.b16 %v3102, %v3098
        %v3455 = vpack.c.b16 %v3107, %v3103
        %v3456 = vpack.c.b16 %v3108, %v3104
        %v3457 = vpack.c.b16 %v3109, %v3105
        %v3458 = vpack.c.b16 %v3110, %v3106
        %v3459 = vpack.c.b16 %v3115, %v3111
        %v3460 = vpack.c.b16 %v3116, %v3112
        %v3461 = vpack.c.b16 %v3117, %v3113
        %v3462 = vpack.c.b16 %v3118, %v3114
        %v3463 = vpack.c.b16 %v3123, %v3119
        %v3464 = vpack.c.b16 %v3124, %v3120
        %v3465 = vpack.c.b16 %v3125, %v3121
        %v3466 = vpack.c.b16 %v3126, %v3122
        %v3467 = vpack.c.b16 %v3131, %v3127
        %v3468 = vpack.c.b16 %v3132, %v3128
        %v3469 = vpack.c.b16 %v3133, %v3129
        %v3470 = vpack.c.b16 %v3134, %v3130
        %v3471 = vpack.c.b16 %v3139, %v3135
        %v3472 = vpack.c.b16 %v3140, %v3136
        %v3473 = vpack.c.b16 %v3141, %v3137
        %v3474 = vpack.c.b16 %v3142, %v3138
        %v3475 = vpack.c.b16 %v3147, %v3143
        %v3476 = vpack.c.b16 %v3148, %v3144
        %v3477 = vpack.c.b16 %v3149, %v3145
        %v3478 = vpack.c.b16 %v3150, %v3146
        %v3479 = vpack.c.b16 %v3155, %v3151
        %v3480 = vpack.c.b16 %v3156, %v3152
        %v3481 = vpack.c.b16 %v3157, %v3153
        %v3482 = vpack.c.b16 %v3158, %v3154
        %v3483 = vpack.c.b16 %v3163, %v3159
        %v3484 = vpack.c.b16 %v3164, %v3160
        %v3485 = vpack.c.b16 %v3165, %v3161
        %v3486 = vpack.c.b16 %v3166, %v3162
        %v3487 = vpack.c.b16 %v3171, %v3167
        %v3488 = vpack.c.b16 %v3172, %v3168
        %v3489 = vpack.c.b16 %v3173, %v3169
        %v3490 = vpack.c.b16 %v3174, %v3170
        %v3491 = vpack.c.b16 %v3179, %v3175
        %v3492 = vpack.c.b16 %v3180, %v3176
        %v3493 = vpack.c.b16 %v3181, %v3177
        %v3494 = vpack.c.b16 %v3182, %v3178
        %v3495 = vpack.c.b16 %v3187, %v3183
        %v3496 = vpack.c.b16 %v3188, %v3184
        %v3497 = vpack.c.b16 %v3189, %v3185
        %v3498 = vpack.c.b16 %v3190, %v3186
        %v3499 = vpack.c.b16 %v3195, %v3191
        %v3500 = vpack.c.b16 %v3196, %v3192
        %v3501 = vpack.c.b16 %v3197, %v3193
        %v3502 = vpack.c.b16 %v3198, %v3194
        %v3503 = vpack.c.b16 %v3203, %v3199
        %v3504 = vpack.c.b16 %v3204, %v3200
        %v3505 = vpack.c.b16 %v3205, %v3201
        %v3506 = vpack.c.b16 %v3206, %v3202
        %v3507 = vpack.c.b16 %v3211, %v3207
        %v3508 = vpack.c.b16 %v3212, %v3208
        %v3509 = vpack.c.b16 %v3213, %v3209
        %v3510 = vpack.c.b16 %v3214, %v3210
        %v3511 = vpack.c.b16 %v3219, %v3215
        %v3512 = vpack.c.b16 %v3220, %v3216
        %v3513 = vpack.c.b16 %v3221, %v3217
        %v3514 = vpack.c.b16 %v3222, %v3218
        %v3515 = vpack.c.b16 %v3227, %v3223
        %v3516 = vpack.c.b16 %v3228, %v3224
        %v3517 = vpack.c.b16 %v3229, %v3225
        %v3518 = vpack.c.b16 %v3230, %v3226
        %v3519 = vpack.c.b16 %v3235, %v3231
        %v3520 = vpack.c.b16 %v3236, %v3232
        %v3521 = vpack.c.b16 %v3237, %v3233
        %v3522 = vpack.c.b16 %v3238, %v3234
        %v3523 = vpack.c.b16 %v3243, %v3239
        %v3524 = vpack.c.b16 %v3244, %v3240
        %v3525 = vpack.c.b16 %v3245, %v3241
        %v3526 = vpack.c.b16 %v3246, %v3242
        %v3527 = vpack.c.b16 %v3251, %v3247
        %v3528 = vpack.c.b16 %v3252, %v3248
        %v3529 = vpack.c.b16 %v3253, %v3249
        %v3530 = vpack.c.b16 %v3254, %v3250
        %v3531 = vpack.c.b16 %v3259, %v3255
        %v3532 = vpack.c.b16 %v3260, %v3256
        %v3533 = vpack.c.b16 %v3261, %v3257
        %v3534 = vpack.c.b16 %v3262, %v3258
        %v3535 = vpack.c.b16 %v3267, %v3263
        %v3536 = vpack.c.b16 %v3268, %v3264
        %v3537 = vpack.c.b16 %v3269, %v3265
        %v3538 = vpack.c.b16 %v3270, %v3266
        %v3539 = vpack.c.b16 %v3275, %v3271
        %v3540 = vpack.c.b16 %v3276, %v3272
        %v3541 = vpack.c.b16 %v3277, %v3273
        %v3542 = vpack.c.b16 %v3278, %v3274
        %v3543 = vpack.c.b16 %v3283, %v3279
        %v3544 = vpack.c.b16 %v3284, %v3280
        %v3545 = vpack.c.b16 %v3285, %v3281
        %v3546 = vpack.c.b16 %v3286, %v3282
        %v3547 = vpack.c.b16 %v3291, %v3287
        %v3548 = vpack.c.b16 %v3292, %v3288
        %v3549 = vpack.c.b16 %v3293, %v3289
        %v3550 = vpack.c.b16 %v3294, %v3290
        %3807 = vmatpush.bf16.msra.mxu0 %v3323
        %3808 = vmatpush.bf16.msra.mxu0 %v3319
        %3809 = vmatpush.bf16.msra.mxu0 %v3315
        %3810 = vmatpush.bf16.msra.mxu0 %v3311
        %3811 = vmatpush.bf16.msra.mxu0 %v3307
        %3812 = vmatpush.bf16.msra.mxu0 %v3303
        %3813 = vmatpush.bf16.msra.mxu0 %v3299
        %3814 = vmatpush.bf16.msra.mxu0 %v3295
        %3815 = vmatmul.bf16.gmra.mxu0 %v2253
        %v3816 = vpop.f32.mrf.mxu0
        %v3817 = vadd.f32 %v2519, %v3816
        %v3818 = vpop.f32.mrf.mxu0
        %3819 = vdwg.mxu0
        %3820 = vmatpush.bf16.msra.mxu0 %v3355
        %3821 = vmatpush.bf16.msra.mxu0 %v3351
        %3822 = vmatpush.bf16.msra.mxu0 %v3347
        %3823 = vmatpush.bf16.msra.mxu0 %v3343
        %3824 = vmatpush.bf16.msra.mxu0 %v3339
        %3825 = vmatpush.bf16.msra.mxu0 %v3335
        %3826 = vmatpush.bf16.msra.mxu0 %v3331
        %3827 = vmatpush.bf16.msra.mxu0 %v3327
        %3828 = vmatmul.bf16.gmra.mxu0 %v2254
        %v3829 = vpop.f32.mrf.mxu0
        %v3830 = vadd.f32 %v3817, %v3829
        %v3831 = vpop.f32.mrf.mxu0
        %3832 = vdwg.mxu0
        %3833 = vmatpush.bf16.msra.mxu0 %v3387
        %3834 = vmatpush.bf16.msra.mxu0 %v3383
        %3835 = vmatpush.bf16.msra.mxu0 %v3379
        %3836 = vmatpush.bf16.msra.mxu0 %v3375
        %3837 = vmatpush.bf16.msra.mxu0 %v3371
        %3838 = vmatpush.bf16.msra.mxu0 %v3367
        %3839 = vmatpush.bf16.msra.mxu0 %v3363
        %3840 = vmatpush.bf16.msra.mxu0 %v3359
        %3841 = vmatmul.bf16.gmra.mxu0 %v2255
        %v3842 = vpop.f32.mrf.mxu0
        %v3843 = vadd.f32 %v3830, %v3842
        %v3844 = vpop.f32.mrf.mxu0
        %3845 = vdwg.mxu0
        %3846 = vmatpush.bf16.msra.mxu0 %v3419
        %3847 = vmatpush.bf16.msra.mxu0 %v3415
        %3848 = vmatpush.bf16.msra.mxu0 %v3411
        %3849 = vmatpush.bf16.msra.mxu0 %v3407
        %3850 = vmatpush.bf16.msra.mxu0 %v3403
        %3851 = vmatpush.bf16.msra.mxu0 %v3399
        %3852 = vmatpush.bf16.msra.mxu0 %v3395
        %3853 = vmatpush.bf16.msra.mxu0 %v3391
        %3854 = vmatmul.bf16.gmra.mxu0 %v2256
        %v3855 = vpop.f32.mrf.mxu0
        %v3856 = vadd.f32 %v3843, %v3855
        %v3857 = vpop.f32.mrf.mxu0
        %3858 = vdwg.mxu0
        %3859 = vmatpush.bf16.msra.mxu0 %v3451
        %3860 = vmatpush.bf16.msra.mxu0 %v3447
        %3861 = vmatpush.bf16.msra.mxu0 %v3443
        %3862 = vmatpush.bf16.msra.mxu0 %v3439
        %3863 = vmatpush.bf16.msra.mxu0 %v3435
        %3864 = vmatpush.bf16.msra.mxu0 %v3431
        %3865 = vmatpush.bf16.msra.mxu0 %v3427
        %3866 = vmatpush.bf16.msra.mxu0 %v3423
        %3867 = vmatmul.bf16.gmra.mxu0 %v2257
        %v3868 = vpop.f32.mrf.mxu0
        %v3869 = vadd.f32 %v3856, %v3868
        %v3870 = vpop.f32.mrf.mxu0
        %3871 = vdwg.mxu0
        %3872 = vmatpush.bf16.msra.mxu0 %v3483
        %3873 = vmatpush.bf16.msra.mxu0 %v3479
        %3874 = vmatpush.bf16.msra.mxu0 %v3475
        %3875 = vmatpush.bf16.msra.mxu0 %v3471
        %3876 = vmatpush.bf16.msra.mxu0 %v3467
        %3877 = vmatpush.bf16.msra.mxu0 %v3463
        %3878 = vmatpush.bf16.msra.mxu0 %v3459
        %3879 = vmatpush.bf16.msra.mxu0 %v3455
        %3880 = vmatmul.bf16.gmra.mxu0 %v2258
        %v3881 = vpop.f32.mrf.mxu0
        %v3882 = vadd.f32 %v3869, %v3881
        %v3883 = vpop.f32.mrf.mxu0
        %3884 = vdwg.mxu0
        %3885 = vmatpush.bf16.msra.mxu0 %v3515
        %3886 = vmatpush.bf16.msra.mxu0 %v3511
        %3887 = vmatpush.bf16.msra.mxu0 %v3507
        %3888 = vmatpush.bf16.msra.mxu0 %v3503
        %3889 = vmatpush.bf16.msra.mxu0 %v3499
        %3890 = vmatpush.bf16.msra.mxu0 %v3495
        %3891 = vmatpush.bf16.msra.mxu0 %v3491
        %3892 = vmatpush.bf16.msra.mxu0 %v3487
        %3893 = vmatmul.bf16.gmra.mxu0 %v2259
        %v3894 = vpop.f32.mrf.mxu0
        %v3895 = vadd.f32 %v3882, %v3894
        %v3896 = vpop.f32.mrf.mxu0
        %3897 = vdwg.mxu0
        %3898 = vmatpush.bf16.msra.mxu0 %v3547
        %3899 = vmatpush.bf16.msra.mxu0 %v3543
        %3900 = vmatpush.bf16.msra.mxu0 %v3539
        %3901 = vmatpush.bf16.msra.mxu0 %v3535
        %3902 = vmatpush.bf16.msra.mxu0 %v3531
        %3903 = vmatpush.bf16.msra.mxu0 %v3527
        %3904 = vmatpush.bf16.msra.mxu0 %v3523
        %3905 = vmatpush.bf16.msra.mxu0 %v3519
        %3906 = vmatmul.bf16.gmra.mxu0 %v2260
        %v3907 = vpop.f32.mrf.mxu0
        %v3908 = vadd.f32 %v3895, %v3907
        %v3909 = vpop.f32.mrf.mxu0
        %3910 = vdwg.mxu0
        %3911 = vmatpush.bf16.msra.mxu0 %v3324
        %3912 = vmatpush.bf16.msra.mxu0 %v3320
        %3913 = vmatpush.bf16.msra.mxu0 %v3316
        %3914 = vmatpush.bf16.msra.mxu0 %v3312
        %3915 = vmatpush.bf16.msra.mxu0 %v3308
        %3916 = vmatpush.bf16.msra.mxu0 %v3304
        %3917 = vmatpush.bf16.msra.mxu0 %v3300
        %3918 = vmatpush.bf16.msra.mxu0 %v3296
        %3919 = vmatmul.bf16.gmra.mxu0 %v2253
        %v3920 = vpop.f32.mrf.mxu0
        %v3921 = vadd.f32 %v2520, %v3920
        %v3922 = vpop.f32.mrf.mxu0
        %3923 = vdwg.mxu0
        %3924 = vmatpush.bf16.msra.mxu0 %v3356
        %3925 = vmatpush.bf16.msra.mxu0 %v3352
        %3926 = vmatpush.bf16.msra.mxu0 %v3348
        %3927 = vmatpush.bf16.msra.mxu0 %v3344
        %3928 = vmatpush.bf16.msra.mxu0 %v3340
        %3929 = vmatpush.bf16.msra.mxu0 %v3336
        %3930 = vmatpush.bf16.msra.mxu0 %v3332
        %3931 = vmatpush.bf16.msra.mxu0 %v3328
        %3932 = vmatmul.bf16.gmra.mxu0 %v2254
        %v3933 = vpop.f32.mrf.mxu0
        %v3934 = vadd.f32 %v3921, %v3933
        %v3935 = vpop.f32.mrf.mxu0
        %3936 = vdwg.mxu0
        %3937 = vmatpush.bf16.msra.mxu0 %v3388
        %3938 = vmatpush.bf16.msra.mxu0 %v3384
        %3939 = vmatpush.bf16.msra.mxu0 %v3380
        %3940 = vmatpush.bf16.msra.mxu0 %v3376
        %3941 = vmatpush.bf16.msra.mxu0 %v3372
        %3942 = vmatpush.bf16.msra.mxu0 %v3368
        %3943 = vmatpush.bf16.msra.mxu0 %v3364
        %3944 = vmatpush.bf16.msra.mxu0 %v3360
        %3945 = vmatmul.bf16.gmra.mxu0 %v2255
        %v3946 = vpop.f32.mrf.mxu0
        %v3947 = vadd.f32 %v3934, %v3946
        %v3948 = vpop.f32.mrf.mxu0
        %3949 = vdwg.mxu0
        %3950 = vmatpush.bf16.msra.mxu0 %v3420
        %3951 = vmatpush.bf16.msra.mxu0 %v3416
        %3952 = vmatpush.bf16.msra.mxu0 %v3412
        %3953 = vmatpush.bf16.msra.mxu0 %v3408
        %3954 = vmatpush.bf16.msra.mxu0 %v3404
        %3955 = vmatpush.bf16.msra.mxu0 %v3400
        %3956 = vmatpush.bf16.msra.mxu0 %v3396
        %3957 = vmatpush.bf16.msra.mxu0 %v3392
        %3958 = vmatmul.bf16.gmra.mxu0 %v2256
        %v3959 = vpop.f32.mrf.mxu0
        %v3960 = vadd.f32 %v3947, %v3959
        %v3961 = vpop.f32.mrf.mxu0
        %3962 = vdwg.mxu0
        %3963 = vmatpush.bf16.msra.mxu0 %v3452
        %3964 = vmatpush.bf16.msra.mxu0 %v3448
        %3965 = vmatpush.bf16.msra.mxu0 %v3444
        %3966 = vmatpush.bf16.msra.mxu0 %v3440
        %3967 = vmatpush.bf16.msra.mxu0 %v3436
        %3968 = vmatpush.bf16.msra.mxu0 %v3432
        %3969 = vmatpush.bf16.msra.mxu0 %v3428
        %3970 = vmatpush.bf16.msra.mxu0 %v3424
        %3971 = vmatmul.bf16.gmra.mxu0 %v2257
        %v3972 = vpop.f32.mrf.mxu0
        %v3973 = vadd.f32 %v3960, %v3972
        %v3974 = vpop.f32.mrf.mxu0
        %3975 = vdwg.mxu0
        %3976 = vmatpush.bf16.msra.mxu0 %v3484
        %3977 = vmatpush.bf16.msra.mxu0 %v3480
        %3978 = vmatpush.bf16.msra.mxu0 %v3476
        %3979 = vmatpush.bf16.msra.mxu0 %v3472
        %3980 = vmatpush.bf16.msra.mxu0 %v3468
        %3981 = vmatpush.bf16.msra.mxu0 %v3464
        %3982 = vmatpush.bf16.msra.mxu0 %v3460
        %3983 = vmatpush.bf16.msra.mxu0 %v3456
        %3984 = vmatmul.bf16.gmra.mxu0 %v2258
        %v3985 = vpop.f32.mrf.mxu0
        %v3986 = vadd.f32 %v3973, %v3985
        %v3987 = vpop.f32.mrf.mxu0
        %3988 = vdwg.mxu0
        %3989 = vmatpush.bf16.msra.mxu0 %v3516
        %3990 = vmatpush.bf16.msra.mxu0 %v3512
        %3991 = vmatpush.bf16.msra.mxu0 %v3508
        %3992 = vmatpush.bf16.msra.mxu0 %v3504
        %3993 = vmatpush.bf16.msra.mxu0 %v3500
        %3994 = vmatpush.bf16.msra.mxu0 %v3496
        %3995 = vmatpush.bf16.msra.mxu0 %v3492
        %3996 = vmatpush.bf16.msra.mxu0 %v3488
        %3997 = vmatmul.bf16.gmra.mxu0 %v2259
        %v3998 = vpop.f32.mrf.mxu0
        %v3999 = vadd.f32 %v3986, %v3998
        %v4000 = vpop.f32.mrf.mxu0
        %4001 = vdwg.mxu0
        %4002 = vmatpush.bf16.msra.mxu0 %v3548
        %4003 = vmatpush.bf16.msra.mxu0 %v3544
        %4004 = vmatpush.bf16.msra.mxu0 %v3540
        %4005 = vmatpush.bf16.msra.mxu0 %v3536
        %4006 = vmatpush.bf16.msra.mxu0 %v3532
        %4007 = vmatpush.bf16.msra.mxu0 %v3528
        %4008 = vmatpush.bf16.msra.mxu0 %v3524
        %4009 = vmatpush.bf16.msra.mxu0 %v3520
        %4010 = vmatmul.bf16.gmra.mxu0 %v2260
        %v4011 = vpop.f32.mrf.mxu0
        %v4012 = vadd.f32 %v3999, %v4011
        %v4013 = vpop.f32.mrf.mxu0
        %4014 = vdwg.mxu0
        %4015 = vmatpush.bf16.msra.mxu0 %v3325
        %4016 = vmatpush.bf16.msra.mxu0 %v3321
        %4017 = vmatpush.bf16.msra.mxu0 %v3317
        %4018 = vmatpush.bf16.msra.mxu0 %v3313
        %4019 = vmatpush.bf16.msra.mxu0 %v3309
        %4020 = vmatpush.bf16.msra.mxu0 %v3305
        %4021 = vmatpush.bf16.msra.mxu0 %v3301
        %4022 = vmatpush.bf16.msra.mxu0 %v3297
        %4023 = vmatmul.bf16.gmra.mxu0 %v2253
        %v4024 = vpop.f32.mrf.mxu0
        %v4025 = vadd.f32 %v2521, %v4024
        %v4026 = vpop.f32.mrf.mxu0
        %4027 = vdwg.mxu0
        %4028 = vmatpush.bf16.msra.mxu0 %v3357
        %4029 = vmatpush.bf16.msra.mxu0 %v3353
        %4030 = vmatpush.bf16.msra.mxu0 %v3349
        %4031 = vmatpush.bf16.msra.mxu0 %v3345
        %4032 = vmatpush.bf16.msra.mxu0 %v3341
        %4033 = vmatpush.bf16.msra.mxu0 %v3337
        %4034 = vmatpush.bf16.msra.mxu0 %v3333
        %4035 = vmatpush.bf16.msra.mxu0 %v3329
        %4036 = vmatmul.bf16.gmra.mxu0 %v2254
        %v4037 = vpop.f32.mrf.mxu0
        %v4038 = vadd.f32 %v4025, %v4037
        %v4039 = vpop.f32.mrf.mxu0
        %4040 = vdwg.mxu0
        %4041 = vmatpush.bf16.msra.mxu0 %v3389
        %4042 = vmatpush.bf16.msra.mxu0 %v3385
        %4043 = vmatpush.bf16.msra.mxu0 %v3381
        %4044 = vmatpush.bf16.msra.mxu0 %v3377
        %4045 = vmatpush.bf16.msra.mxu0 %v3373
        %4046 = vmatpush.bf16.msra.mxu0 %v3369
        %4047 = vmatpush.bf16.msra.mxu0 %v3365
        %4048 = vmatpush.bf16.msra.mxu0 %v3361
        %4049 = vmatmul.bf16.gmra.mxu0 %v2255
        %v4050 = vpop.f32.mrf.mxu0
        %v4051 = vadd.f32 %v4038, %v4050
        %v4052 = vpop.f32.mrf.mxu0
        %4053 = vdwg.mxu0
        %4054 = vmatpush.bf16.msra.mxu0 %v3421
        %4055 = vmatpush.bf16.msra.mxu0 %v3417
        %4056 = vmatpush.bf16.msra.mxu0 %v3413
        %4057 = vmatpush.bf16.msra.mxu0 %v3409
        %4058 = vmatpush.bf16.msra.mxu0 %v3405
        %4059 = vmatpush.bf16.msra.mxu0 %v3401
        %4060 = vmatpush.bf16.msra.mxu0 %v3397
        %4061 = vmatpush.bf16.msra.mxu0 %v3393
        %4062 = vmatmul.bf16.gmra.mxu0 %v2256
        %v4063 = vpop.f32.mrf.mxu0
        %v4064 = vadd.f32 %v4051, %v4063
        %v4065 = vpop.f32.mrf.mxu0
        %4066 = vdwg.mxu0
        %4067 = vmatpush.bf16.msra.mxu0 %v3453
        %4068 = vmatpush.bf16.msra.mxu0 %v3449
        %4069 = vmatpush.bf16.msra.mxu0 %v3445
        %4070 = vmatpush.bf16.msra.mxu0 %v3441
        %4071 = vmatpush.bf16.msra.mxu0 %v3437
        %4072 = vmatpush.bf16.msra.mxu0 %v3433
        %4073 = vmatpush.bf16.msra.mxu0 %v3429
        %4074 = vmatpush.bf16.msra.mxu0 %v3425
        %4075 = vmatmul.bf16.gmra.mxu0 %v2257
        %v4076 = vpop.f32.mrf.mxu0
        %v4077 = vadd.f32 %v4064, %v4076
        %v4078 = vpop.f32.mrf.mxu0
        %4079 = vdwg.mxu0
        %4080 = vmatpush.bf16.msra.mxu0 %v3485
        %4081 = vmatpush.bf16.msra.mxu0 %v3481
        %4082 = vmatpush.bf16.msra.mxu0 %v3477
        %4083 = vmatpush.bf16.msra.mxu0 %v3473
        %4084 = vmatpush.bf16.msra.mxu0 %v3469
        %4085 = vmatpush.bf16.msra.mxu0 %v3465
        %4086 = vmatpush.bf16.msra.mxu0 %v3461
        %4087 = vmatpush.bf16.msra.mxu0 %v3457
        %4088 = vmatmul.bf16.gmra.mxu0 %v2258
        %v4089 = vpop.f32.mrf.mxu0
        %v4090 = vadd.f32 %v4077, %v4089
        %v4091 = vpop.f32.mrf.mxu0
        %4092 = vdwg.mxu0
        %4093 = vmatpush.bf16.msra.mxu0 %v3517
        %4094 = vmatpush.bf16.msra.mxu0 %v3513
        %4095 = vmatpush.bf16.msra.mxu0 %v3509
        %4096 = vmatpush.bf16.msra.mxu0 %v3505
        %4097 = vmatpush.bf16.msra.mxu0 %v3501
        %4098 = vmatpush.bf16.msra.mxu0 %v3497
        %4099 = vmatpush.bf16.msra.mxu0 %v3493
        %4100 = vmatpush.bf16.msra.mxu0 %v3489
        %4101 = vmatmul.bf16.gmra.mxu0 %v2259
        %v4102 = vpop.f32.mrf.mxu0
        %v4103 = vadd.f32 %v4090, %v4102
        %v4104 = vpop.f32.mrf.mxu0
        %4105 = vdwg.mxu0
        %4106 = vmatpush.bf16.msra.mxu0 %v3549
        %4107 = vmatpush.bf16.msra.mxu0 %v3545
        %4108 = vmatpush.bf16.msra.mxu0 %v3541
        %4109 = vmatpush.bf16.msra.mxu0 %v3537
        %4110 = vmatpush.bf16.msra.mxu0 %v3533
        %4111 = vmatpush.bf16.msra.mxu0 %v3529
        %4112 = vmatpush.bf16.msra.mxu0 %v3525
        %4113 = vmatpush.bf16.msra.mxu0 %v3521
        %4114 = vmatmul.bf16.gmra.mxu0 %v2260
        %v4115 = vpop.f32.mrf.mxu0
        %v4116 = vadd.f32 %v4103, %v4115
        %v4117 = vpop.f32.mrf.mxu0
        %4118 = vdwg.mxu0
        %4119 = vmatpush.bf16.msra.mxu0 %v3326
        %4120 = vmatpush.bf16.msra.mxu0 %v3322
        %4121 = vmatpush.bf16.msra.mxu0 %v3318
        %4122 = vmatpush.bf16.msra.mxu0 %v3314
        %4123 = vmatpush.bf16.msra.mxu0 %v3310
        %4124 = vmatpush.bf16.msra.mxu0 %v3306
        %4125 = vmatpush.bf16.msra.mxu0 %v3302
        %4126 = vmatpush.bf16.msra.mxu0 %v3298
        %4127 = vmatmul.bf16.gmra.mxu0 %v2253
        %v4128 = vpop.f32.mrf.mxu0
        %v4129 = vadd.f32 %v2522, %v4128
        %v4130 = vpop.f32.mrf.mxu0
        %4131 = vdwg.mxu0
        %4132 = vmatpush.bf16.msra.mxu0 %v3358
        %4133 = vmatpush.bf16.msra.mxu0 %v3354
        %4134 = vmatpush.bf16.msra.mxu0 %v3350
        %4135 = vmatpush.bf16.msra.mxu0 %v3346
        %4136 = vmatpush.bf16.msra.mxu0 %v3342
        %4137 = vmatpush.bf16.msra.mxu0 %v3338
        %4138 = vmatpush.bf16.msra.mxu0 %v3334
        %4139 = vmatpush.bf16.msra.mxu0 %v3330
        %4140 = vmatmul.bf16.gmra.mxu0 %v2254
        %v4141 = vpop.f32.mrf.mxu0
        %v4142 = vadd.f32 %v4129, %v4141
        %v4143 = vpop.f32.mrf.mxu0
        %4144 = vdwg.mxu0
        %4145 = vmatpush.bf16.msra.mxu0 %v3390
        %4146 = vmatpush.bf16.msra.mxu0 %v3386
        %4147 = vmatpush.bf16.msra.mxu0 %v3382
        %4148 = vmatpush.bf16.msra.mxu0 %v3378
        %4149 = vmatpush.bf16.msra.mxu0 %v3374
        %4150 = vmatpush.bf16.msra.mxu0 %v3370
        %4151 = vmatpush.bf16.msra.mxu0 %v3366
        %4152 = vmatpush.bf16.msra.mxu0 %v3362
        %4153 = vmatmul.bf16.gmra.mxu0 %v2255
        %v4154 = vpop.f32.mrf.mxu0
        %v4155 = vadd.f32 %v4142, %v4154
        %v4156 = vpop.f32.mrf.mxu0
        %4157 = vdwg.mxu0
        %4158 = vmatpush.bf16.msra.mxu0 %v3422
        %4159 = vmatpush.bf16.msra.mxu0 %v3418
        %4160 = vmatpush.bf16.msra.mxu0 %v3414
        %4161 = vmatpush.bf16.msra.mxu0 %v3410
        %4162 = vmatpush.bf16.msra.mxu0 %v3406
        %4163 = vmatpush.bf16.msra.mxu0 %v3402
        %4164 = vmatpush.bf16.msra.mxu0 %v3398
        %4165 = vmatpush.bf16.msra.mxu0 %v3394
        %4166 = vmatmul.bf16.gmra.mxu0 %v2256
        %v4167 = vpop.f32.mrf.mxu0
        %v4168 = vadd.f32 %v4155, %v4167
        %v4169 = vpop.f32.mrf.mxu0
        %4170 = vdwg.mxu0
        %4171 = vmatpush.bf16.msra.mxu0 %v3454
        %4172 = vmatpush.bf16.msra.mxu0 %v3450
        %4173 = vmatpush.bf16.msra.mxu0 %v3446
        %4174 = vmatpush.bf16.msra.mxu0 %v3442
        %4175 = vmatpush.bf16.msra.mxu0 %v3438
        %4176 = vmatpush.bf16.msra.mxu0 %v3434
        %4177 = vmatpush.bf16.msra.mxu0 %v3430
        %4178 = vmatpush.bf16.msra.mxu0 %v3426
        %4179 = vmatmul.bf16.gmra.mxu0 %v2257
        %v4180 = vpop.f32.mrf.mxu0
        %v4181 = vadd.f32 %v4168, %v4180
        %v4182 = vpop.f32.mrf.mxu0
        %4183 = vdwg.mxu0
        %4184 = vmatpush.bf16.msra.mxu0 %v3486
        %4185 = vmatpush.bf16.msra.mxu0 %v3482
        %4186 = vmatpush.bf16.msra.mxu0 %v3478
        %4187 = vmatpush.bf16.msra.mxu0 %v3474
        %4188 = vmatpush.bf16.msra.mxu0 %v3470
        %4189 = vmatpush.bf16.msra.mxu0 %v3466
        %4190 = vmatpush.bf16.msra.mxu0 %v3462
        %4191 = vmatpush.bf16.msra.mxu0 %v3458
        %4192 = vmatmul.bf16.gmra.mxu0 %v2258
        %v4193 = vpop.f32.mrf.mxu0
        %v4194 = vadd.f32 %v4181, %v4193
        %v4195 = vpop.f32.mrf.mxu0
        %4196 = vdwg.mxu0
        %4197 = vmatpush.bf16.msra.mxu0 %v3518
        %4198 = vmatpush.bf16.msra.mxu0 %v3514
        %4199 = vmatpush.bf16.msra.mxu0 %v3510
        %4200 = vmatpush.bf16.msra.mxu0 %v3506
        %4201 = vmatpush.bf16.msra.mxu0 %v3502
        %4202 = vmatpush.bf16.msra.mxu0 %v3498
        %4203 = vmatpush.bf16.msra.mxu0 %v3494
        %4204 = vmatpush.bf16.msra.mxu0 %v3490
        %4205 = vmatmul.bf16.gmra.mxu0 %v2259
        %v4206 = vpop.f32.mrf.mxu0
        %v4207 = vadd.f32 %v4194, %v4206
        %v4208 = vpop.f32.mrf.mxu0
        %4209 = vdwg.mxu0
        %4210 = vmatpush.bf16.msra.mxu0 %v3550
        %4211 = vmatpush.bf16.msra.mxu0 %v3546
        %4212 = vmatpush.bf16.msra.mxu0 %v3542
        %4213 = vmatpush.bf16.msra.mxu0 %v3538
        %4214 = vmatpush.bf16.msra.mxu0 %v3534
        %4215 = vmatpush.bf16.msra.mxu0 %v3530
        %4216 = vmatpush.bf16.msra.mxu0 %v3526
        %4217 = vmatpush.bf16.msra.mxu0 %v3522
        %4218 = vmatmul.bf16.gmra.mxu0 %v2260
        %v4219 = vpop.f32.mrf.mxu0
        %v4220 = vadd.f32 %v4207, %v4219
        %v4221 = vpop.f32.mrf.mxu0
        %4222 = vdwg.mxu0
        %4223 = vst [vmem:[%s217] sm:$0xff] %v3908
        %4224 = vst [vmem:[%s217 + $0x8] sm:$0xff] %v4012
        %4225 = vst [vmem:[%s217 + $0x10] sm:$0xff] %v4116
        %4226 = vst [vmem:[%s217 + $0x18] sm:$0xff] %v4220
        %s4227 = sand.u32 %s137, 1
        %s4228 = scalar_lea.sflag [#allocation3], %s4227
        %s4229 = sand.u32 %s137, 1
        %s4230 = smul.addr %s4229, 32
        %s4231 = scalar_lea.vmem [#allocation2], %s4230
        // Predicated region
        $region41: #{feed_forward.1} parent=39 // pred_check
          %p4232 = pneg %p147
        $region42: #{feed_forward.1} parent=39 // pred_check_branch
          %4234 = sbr.rel (%p4232) target = $region44
        $region43: #{feed_forward.1} parent=39 // pred_region
          %4236 = vsyncadd %s4228, 0
          %s4237 = smul.addr %s19, 4
          %s4238 = smul.addr %s4237, 8
          %s4239 = scalar_lea.hbm %s5, %s4238
          %s4241 = sshll.u32 %s4231, 4
          %s4242 = int_to_ptr.vmem [resolvable:$true] %s4241
          %s4243 = sshll.u32 %s4239, 4
          %s4244 = int_to_ptr.hbm [resolvable:$true] %s4243
          %4246 = dma.vmem_to_hbm [thread:$0]  %s4242, 512, %s4244, %s4228
        $region44: #{feed_forward.1} parent=39 // pred_fallthru
          _
      $region40: #{feed_forward.1} parent=5 // pred_fallthru
        _
      %p4247 = scmp.le.s32.totalorder 2, %s14
      // Predicated region
      $region45: #{feed_forward.1} parent=5 // pred_check
        %p4248 = pneg %p4247
      $region46: #{feed_forward.1} parent=5 // pred_check_branch
        %4250 = sbr.rel (%p4248) target = $region48
      $region47: #{feed_forward.1} parent=5 // pred_region
        %s4251 = ssub.s32 %s14, 2
        // Predicated region
        $region49: #{feed_forward.1} parent=47 // pred_check
          %p4252 = pneg %p153
        $region50: #{feed_forward.1} parent=47 // pred_check_branch
          %4254 = sbr.rel (%p4252) target = $region52
        $region51: #{feed_forward.1} parent=47 // pred_region
          %s4255 = sand.u32 %s138, 1
          %s4256 = scalar_lea.sflag [#allocation3], %s4255
          %s4257 = sand.u32 %s138, 1
          %s4258 = smul.addr %s4257, 32
          %s4259 = scalar_lea.vmem [#allocation2], %s4258
          %4261 = dma.done %s4256, 512
        $region52: #{feed_forward.1} parent=47 // pred_fallthru
          _
      $region48: #{feed_forward.1} parent=5 // pred_fallthru
        _
    $region6: #{feed_forward.1} parent=1 // loop_footer
      %s18 = sadd.s32 1, %s14
    $region7: #{feed_forward.1} parent=1 // loop_footer_branch
      %13 = sbr.rel target = $region3
    $region8: #{feed_forward.1} parent=1 // loop_exit
      _
    %4262 = vsyncpa [#allocation3], 1
    %s4263 = scalar_lea.sflag [#allocation3], 1
    %4264 = vsyncpa %s4263, 1

</llo_original>
